<compile_context>
chip_gen: v5e
topology: v5e:2x2
jax: 0.10.0
libtpu: 0.0.40
codegen_flags: <defaults>
</compile_context>

<pallas_src>
import functools
import math

import jax
import jax.numpy as jnp
from jax.experimental import pallas as pl
from jax.experimental.pallas import tpu as pltpu

_LOG_2PI = math.log(2.0 * math.pi)
HIDDEN_NF = 64
N_LAYERS = 4
_TILE_ROWS = 1024                      # row tile for pipelined GEMMs
_VMEM_LIMIT = 32 * 1024 * 1024         # explicit budget; safe on v5e/v6e/v7x


def _silu(x):
    # x * sigmoid(x); approx reciprocal runs on the EUP slot, freeing VALU issue.
    return x * pl.reciprocal(1.0 + jnp.exp(-x), approx=True)


def _pick_row_tile(rows, tile_rows):
    """Row tile: multiple of 8, <= tile_rows, >=2 grid steps when possible."""
    if rows <= 8:
        return rows
    tr = min(tile_rows, rows)
    if tr == rows:
        half = (rows + 1) // 2
        tr = min(rows, ((half + 7) // 8) * 8)
    return tr


def _pick_edge_tile(n, hnf):
    """i-axis tile for the edge kernel: bounded VMEM working set, >=2 steps."""
    if n <= 8:
        return n
    budget_rows = max(8, (2 * 1024 * 1024) // (n * hnf * 4))   # ~2 MiB f32 slab
    tile_i = min(n, budget_rows)
    tile_i = max(8, (tile_i // 8) * 8)
    if tile_i >= n and n >= 16:
        tile_i = max(8, ((n // 2) // 8) * 8)
    return min(tile_i, n)


# ---------------------------------------------------------------------------
# Kernel 1: row-tiled fused linear  y = act(x @ W + b) [* mask]
# bf16 MXU inputs, f32 accumulation/epilogue, optional fused mask multiply.
# ---------------------------------------------------------------------------
def _linear_kernel(*refs, act, has_mask):
    if has_mask:
        x_ref, w_ref, b_ref, m_ref, o_ref = refs
    else:
        x_ref, w_ref, b_ref, o_ref = refs
        m_ref = None
    y = jnp.dot(x_ref[...].astype(jnp.bfloat16),
                w_ref[...].astype(jnp.bfloat16),
                preferred_element_type=jnp.float32) + b_ref[...]
    if act == "silu":
        y = _silu(y)
    if m_ref is not None:
        y = y * m_ref[...]
    o_ref[...] = y.astype(o_ref.dtype)


def pallas_linear(x, w, b, act=None, mask=None, out_dtype=jnp.float32,
                  tile_rows=_TILE_ROWS):
    rows, k = x.shape
    n_out = w.shape[1]
    tr = _pick_row_tile(rows, tile_rows)
    grid = (pl.cdiv(rows, tr),)
    in_specs = [
        pl.BlockSpec((tr, k), lambda i: (i, 0)),
        pl.BlockSpec((k, n_out), lambda i: (0, 0)),
        pl.BlockSpec((1, n_out), lambda i: (0, 0)),
    ]
    args = [x, w, b.reshape(1, -1)]
    if mask is not None:
        in_specs.append(pl.BlockSpec((tr, 1), lambda i: (i, 0)))
        args.append(mask)
    return pl.pallas_call(
        functools.partial(_linear_kernel, act=act, has_mask=mask is not None),
        grid=grid,
        out_shape=jax.ShapeDtypeStruct((rows, n_out), out_dtype),
        in_specs=in_specs,
        out_specs=pl.BlockSpec((tr, n_out), lambda i: (i, 0)),
        compiler_params=pltpu.CompilerParams(
            dimension_semantics=("parallel",),
            vmem_limit_bytes=_VMEM_LIMIT),
    )(*args)


# ---------------------------------------------------------------------------
# Kernel 2: fully fused EGCL edge path, tiled over (batch, i-node tile)
#   pre_i = h_i @ W1_hi + b1                (fused pre-GEMM)
#   pre_j = h_j @ W1_hj
#   e_pre[i,j] = pre_i + pre_j + d2_ij*w1_d2 + ea_ij*w1_ea
#   m = silu(silu(e_pre) @ W2 + b2) * edge_mask
#   agg[i] = sum_j m[i,j]                                    (bf16 output)
#   last layer only: e_out[i,j] = (m @ We + be) * edge_mask  (fused edge head)
# The (bs, n, n, H) edge-message tensor never touches HBM.
# ---------------------------------------------------------------------------
def _edge_layer_kernel(*refs, emit_eout):
    if emit_eout:
        (hi_ref, hj_ref, dem_ref, w1hi_ref, w1hj_ref, b1_ref,
         w1d2_ref, w1ea_ref, w2_ref, b2_ref, we_ref, be_ref,
         agg_ref, eout_ref) = refs
    else:
        (hi_ref, hj_ref, dem_ref, w1hi_ref, w1hj_ref, b1_ref,
         w1d2_ref, w1ea_ref, w2_ref, b2_ref, agg_ref) = refs

    ti = hi_ref.shape[1]
    n = hj_ref.shape[1]
    hnf = hj_ref.shape[2]

    hi = hi_ref[0]                       # (ti, H) bf16
    hj = hj_ref[0]                       # (n, H)  bf16
    pre_i = jnp.dot(hi, w1hi_ref[...].astype(jnp.bfloat16),
                    preferred_element_type=jnp.float32) + b1_ref[...]
    pre_j = jnp.dot(hj, w1hj_ref[...].astype(jnp.bfloat16),
                    preferred_element_type=jnp.float32)

    dem = dem_ref[0]                     # (ti, n, 3) = [d2 | ea | em]
    d2 = dem[..., 0:1]
    ea = dem[..., 1:2]
    em = dem[..., 2:3]

    e_pre = (pre_i[:, None, :] + pre_j[None, :, :]
             + d2 * w1d2_ref[...] + ea * w1ea_ref[...])            # (ti, n, H)
    m1 = _silu(e_pre).reshape(ti * n, hnf)
    m2 = jnp.dot(m1.astype(jnp.bfloat16), w2_ref[...].astype(jnp.bfloat16),
                 preferred_element_type=jnp.float32) + b2_ref[...]
    m2 = _silu(m2).reshape(ti, n, hnf) * em                        # fused mask
    agg_ref[0] = jnp.sum(m2, axis=1).astype(agg_ref.dtype)         # sum over j

    if emit_eout:
        e = jnp.dot(m2.reshape(ti * n, hnf).astype(jnp.bfloat16),
                    we_ref[...].astype(jnp.bfloat16),
                    preferred_element_type=jnp.float32) + be_ref[...]
        eout_ref[0] = e.reshape(ti, n, -1) * em                    # fused head


def pallas_edge_layer(h3, dem, layer, edge_head=None):
    bs, n, hnf = h3.shape
    tile_i = _pick_edge_tile(n, hnf)
    grid = (bs, pl.cdiv(n, tile_i))
    wspec = lambda shape: pl.BlockSpec(shape, lambda b, i: (0, 0))
    in_specs = [
        pl.BlockSpec((1, tile_i, hnf), lambda b, i: (b, i, 0)),      # h_i tile
        pl.BlockSpec((1, n, hnf), lambda b, i: (b, 0, 0)),           # h_j (full)
        pl.BlockSpec((1, tile_i, n, 3), lambda b, i: (b, i, 0, 0)),  # [d2|ea|em]
        wspec((hnf, hnf)), wspec((hnf, hnf)), wspec((1, hnf)),       # w1_hi, w1_hj, b1
        wspec((1, hnf)), wspec((1, hnf)),                            # w1_d2, w1_ea
        wspec((hnf, hnf)), wspec((1, hnf)),                          # w2, b2
    ]
    args = [h3, h3, dem, layer["w1_hi"], layer["w1_hj"], layer["b1"],
            layer["w1_d2"], layer["w1_ea"], layer["w2"], layer["b2"]]
    agg_spec = pl.BlockSpec((1, tile_i, hnf), lambda b, i: (b, i, 0))
    agg_shape = jax.ShapeDtypeStruct((bs, n, hnf), jnp.bfloat16)
    emit_eout = edge_head is not None
    if emit_eout:
        we, be = edge_head
        oe = we.shape[1]
        in_specs += [wspec((hnf, oe)), wspec((1, oe))]
        args += [we, be.reshape(1, -1)]
        out_specs = (agg_spec,
                     pl.BlockSpec((1, tile_i, n, oe), lambda b, i: (b, i, 0, 0)))
        out_shape = (agg_shape,
                     jax.ShapeDtypeStruct((bs, n, n, oe), jnp.float32))
    else:
        out_specs = agg_spec
        out_shape = agg_shape
    return pl.pallas_call(
        functools.partial(_edge_layer_kernel, emit_eout=emit_eout),
        grid=grid,
        out_shape=out_shape,
        in_specs=in_specs,
        out_specs=out_specs,
        compiler_params=pltpu.CompilerParams(
            dimension_semantics=("parallel", "parallel"),
            vmem_limit_bytes=_VMEM_LIMIT),
    )(*args)


# ---------------------------------------------------------------------------
# Kernel 3: fused EGCL node update (split-W3 => no concat), bf16 in/out
#   h_new = (h + silu(h @ W3h + agg @ W3a + b3) @ W4 + b4) * node_mask
# TODO(synk): K=128 single-dot merge of the two K=64 dots skipped to avoid
# in-kernel sub-128-lane concatenation; two dots kept for lowering safety.
# ---------------------------------------------------------------------------
def _node_update_kernel(h_ref, agg_ref, w3h_ref, w3a_ref, b3_ref,
                        w4_ref, b4_ref, nm_ref, o_ref):
    h = h_ref[...]                                    # (tr, H) bf16
    t = (jnp.dot(h, w3h_ref[...].astype(jnp.bfloat16),
                 preferred_element_type=jnp.float32)
         + jnp.dot(agg_ref[...], w3a_ref[...].astype(jnp.bfloat16),
                   preferred_element_type=jnp.float32)
         + b3_ref[...])
    t = _silu(t)
    upd = jnp.dot(t.astype(jnp.bfloat16), w4_ref[...].astype(jnp.bfloat16),
                  preferred_element_type=jnp.float32) + b4_ref[...]
    o_ref[...] = ((h.astype(jnp.float32) + upd) * nm_ref[...]).astype(o_ref.dtype)


def pallas_node_update(h, agg, layer, nm, tile_rows=_TILE_ROWS):
    rows, hnf = h.shape
    tr = _pick_row_tile(rows, tile_rows)
    grid = (pl.cdiv(rows, tr),)
    row = pl.BlockSpec((tr, hnf), lambda i: (i, 0))
    full = lambda shape: pl.BlockSpec(shape, lambda i: (0, 0))
    return pl.pallas_call(
        _node_update_kernel,
        grid=grid,
        out_shape=jax.ShapeDtypeStruct((rows, hnf), jnp.bfloat16),
        in_specs=[row, row,
                  full(layer["w3h"].shape), full(layer["w3a"].shape),
                  full(layer["b3"].shape),
                  full(layer["w4"].shape), full(layer["b4"].shape),
                  pl.BlockSpec((tr, 1), lambda i: (i, 0))],
        out_specs=row,
        compiler_params=pltpu.CompilerParams(
            dimension_semantics=("parallel",),
            vmem_limit_bytes=_VMEM_LIMIT),
    )(h, agg, layer["w3h"], layer["w3a"], layer["b3"],
      layer["w4"], layer["b4"], nm)


# ---------------------------------------------------------------------------
# Kernel 4: fused variational-dequantization path, row-tiled (bs_tile, items)
#   eps_m     = eps * mask
#   log_q_eps = sum_items (-.5*eps_m^2 - .5*log(2pi)) * mask
#   u         = mu + eps_m * exp(log_sigma * mask)            (affine)
#   ldj_aff   = sum_items log_sigma * mask
#   z         = sigmoid(u)  via  e = exp(-|u|)                (exact, 1 exp)
#   ldj_sig   = sum_items mask * -( |u| + 2*log1p(e) )
#   v         = (feature + z) * mask
#   logq      = log_q_eps - ldj_aff - ldj_sig
# ---------------------------------------------------------------------------
def _dequant_kernel(mu_ref, ls_ref, eps_ref, mask_ref, feat_ref,
                    v_ref, logq_ref):
    mask = mask_ref[...]
    eps = eps_ref[...] * mask
    ls = ls_ref[...] * mask                 # net output is already masked; idempotent
    u = mu_ref[...] + eps * jnp.exp(ls)
    a = jnp.abs(u)
    e = jnp.exp(-a)
    inv = 1.0 / (1.0 + e)
    z = jnp.where(u >= 0, inv, e * inv)     # exact sigmoid, consistent with ldj
    log_q_eps = jnp.sum((-0.5 * eps * eps - 0.5 * _LOG_2PI) * mask,
                        axis=1, keepdims=True)
    ldj_aff = jnp.sum(ls, axis=1, keepdims=True)
    ldj_sig = jnp.sum(mask * (-(a + 2.0 * jnp.log1p(e))),
                      axis=1, keepdims=True)
    v_ref[...] = (feat_ref[...] + z) * mask
    logq_ref[...] = log_q_eps - ldj_aff - ldj_sig


def pallas_dequant(mu, log_sigma, eps, mask, feature, tile_b=64):
    # All inputs are 2-D (bs, items) with the long axis last (lane-dense).
    bs, items = mu.shape
    tb = _pick_row_tile(bs, tile_b)
    grid = (pl.cdiv(bs, tb),)
    row = pl.BlockSpec((tb, items), lambda i: (i, 0))
    v, logq = pl.pallas_call(
        _dequant_kernel,
        grid=grid,
        out_shape=(jax.ShapeDtypeStruct((bs, items), jnp.float32),
                   jax.ShapeDtypeStruct((bs, 1), jnp.float32)),
        in_specs=[row] * 5,
        out_specs=(row, pl.BlockSpec((tb, 1), lambda i: (i, 0))),
        compiler_params=pltpu.CompilerParams(
            dimension_semantics=("parallel",),
            vmem_limit_bytes=_VMEM_LIMIT),
    )(mu, log_sigma, eps, mask, feature)
    return v, logq[:, 0]


# ---------------------------------------------------------------------------
# EGNN (net_fn of the dequantizer)
# TODO(synk): the upstream `EGNN` class used by EGNN_output_he is not included
# in the reference source; a standard 4-layer EGCL stack (edge MLP -> masked
# sum aggregation -> residual node MLP, plus node/edge output heads) with
# deterministic in-script weights is used instead.
# ---------------------------------------------------------------------------
def init_egnn_params(key, in_node_nf, out_node_nf, out_edge_nf, hidden_nf=HIDDEN_NF):
    def lin(k, fan_in, fan_out):
        kw, kb = jax.random.split(k)
        w = jax.random.normal(kw, (fan_in, fan_out), jnp.float32) / math.sqrt(fan_in)
        b = jax.random.normal(kb, (fan_out,), jnp.float32) * 0.01
        return w, b

    keys = jax.random.split(key, 3 + 4 * N_LAYERS)
    params = {
        "emb": lin(keys[0], in_node_nf, hidden_nf),
        "node_head": lin(keys[1], hidden_nf, out_node_nf),
        "edge_head": lin(keys[2], hidden_nf, out_edge_nf),
        "layers": [],
    }
    k = 3
    for _ in range(N_LAYERS):
        w1, b1 = lin(keys[k + 0], 2 * hidden_nf + 2, hidden_nf)
        w2, b2 = lin(keys[k + 1], hidden_nf, hidden_nf)
        w3, b3 = lin(keys[k + 2], 2 * hidden_nf, hidden_nf)
        w4, b4 = lin(keys[k + 3], hidden_nf, hidden_nf)
        # Kernel-ready derived weights (decomposed W1, split W3, 2-D biases).
        params["layers"].append({
            "w1_hi": w1[:hidden_nf],
            "w1_hj": w1[hidden_nf:2 * hidden_nf],
            "w1_d2": w1[2 * hidden_nf:2 * hidden_nf + 1],
            "w1_ea": w1[2 * hidden_nf + 1:2 * hidden_nf + 2],
            "b1": b1.reshape(1, -1),
            "w2": w2, "b2": b2.reshape(1, -1),
            "w3h": w3[:hidden_nf], "w3a": w3[hidden_nf:], "b3": b3.reshape(1, -1),
            "w4": w4, "b4": b4.reshape(1, -1),
        })
        k += 4
    return params


def egnn_forward(params, h0, x, edge_attr4, node_mask, edge_mask3):
    # h0: (bs, n, in_nf)   x: (bs, n, 3)   edge_attr4: (bs, n, n, 1)
    # node_mask: (bs, n)   edge_mask3: (bs, n, n)
    bs, n, _ = h0.shape
    hnf = HIDDEN_NF
    nm = node_mask[..., None]                                   # (bs, n, 1)
    nm_flat = node_mask.reshape(bs * n, 1)
    em4 = edge_mask3[..., None]                                 # (bs, n, n, 1)

    h_in = (h0 * nm).reshape(bs * n, -1)
    xm = x * nm
    diff = xm[:, :, None, :] - xm[:, None, :, :]                # (bs, n, n, 3)
    d2 = jnp.sum(diff * diff, axis=-1, keepdims=True)           # (bs, n, n, 1)
    ea = edge_attr4 * em4                                       # (bs, n, n, 1)
    dem = jnp.concatenate([d2, ea, em4], axis=-1)               # (bs, n, n, 3)

    w_emb, b_emb = params["emb"]
    h = pallas_linear(h_in, w_emb, b_emb, out_dtype=jnp.bfloat16)   # (bs*n, H)

    n_layers = len(params["layers"])
    e_out4 = None
    for li, layer in enumerate(params["layers"]):
        h3 = h.reshape(bs, n, hnf)
        if li == n_layers - 1:
            # Last layer: fuse the edge output head; no (bs,n,n,H) HBM tensor.
            agg3, e_out4 = pallas_edge_layer(h3, dem, layer,
                                             edge_head=params["edge_head"])
        else:
            agg3 = pallas_edge_layer(h3, dem, layer)
        agg = agg3.reshape(bs * n, hnf)
        h = pallas_node_update(h, agg, layer, nm_flat)

    wh, bh = params["node_head"]
    h_out = pallas_linear(h, wh, bh, mask=nm_flat, out_dtype=jnp.float32)
    oe = params["edge_head"][0].shape[1]
    return (h_out.reshape(bs, n, wh.shape[1]),
            e_out4.reshape(bs, n * n, oe))


# ---------------------------------------------------------------------------
# VariationalDequantizer.forward
# ---------------------------------------------------------------------------
def variational_dequantizer_forward(params, tensor, node_mask, edge_mask, x, key):
    int_feature = tensor["int_feature"]        # (bs, n, nf_int)
    float_feature = tensor["float_feature"]    # (bs, n, nf_float)
    edge_attr = tensor["edge_attr"]            # (bs*n*n, 1)
    bs, n, nf_int = int_feature.shape

    h = jnp.concatenate([int_feature, float_feature], axis=2)
    edge_mask3 = edge_mask.reshape(bs, n, n)

    h_net, e_net = egnn_forward(
        params, h, x, edge_attr.reshape(bs, n, n, 1), node_mask, edge_mask3)

    h_mu, h_log_sigma = jnp.split(h_net, 2, axis=-1)   # (bs, n, nf_int) each
    e_mu, e_log_sigma = jnp.split(e_net, 2, axis=-1)   # (bs, n*n, 1) each

    # Lane-dense 2-D slabs for the fused dequant kernel (long axis last).
    h_items = n * nf_int
    e_items = n * n
    h_mask = jnp.broadcast_to(node_mask[:, :, None],
                              (bs, n, nf_int)).reshape(bs, h_items)
    e_mask = edge_mask.reshape(bs, e_items)

    k1, k2 = jax.random.split(key)
    h_eps = jax.random.normal(k1, (bs, h_items), jnp.float32)  # masked in kernel
    e_eps = jax.random.normal(k2, (bs, e_items), jnp.float32)

    v_int2, node_logq = pallas_dequant(
        h_mu.reshape(bs, h_items), h_log_sigma.reshape(bs, h_items),
        h_eps, h_mask, int_feature.reshape(bs, h_items))
    v_edge2, edge_logq = pallas_dequant(
        e_mu.reshape(bs, e_items), e_log_sigma.reshape(bs, e_items),
        e_eps, e_mask, edge_attr.reshape(bs, e_items))

    # log q(v|x,h) = (log_q_eps_h - ldj_aff_h - ldj_sig_h) + (same for edges)
    log_qv_xh = node_logq + edge_logq

    v_int_feature = v_int2.reshape(bs, n, nf_int)
    # reference applies v_edge.view(-1,1) * edge_mask; mask is binary so this is
    # idempotent with the masking already fused in the kernel.
    v_edge = v_edge2.reshape(bs * n * n, 1) * edge_mask

    v = {"int_feature": v_int_feature,
         "float_feature": float_feature,
         "edge_attr": v_edge}
    return v, log_qv_xh


if __name__ == "__main__":
    key = jax.random.PRNGKey(0)
    bs, n_nodes = 2, 8
    nf_int, nf_float = 2, 2

    k_param, k_int, k_float, k_edge, k_x, k_noise = jax.random.split(key, 6)

    params = init_egnn_params(
        k_param, in_node_nf=nf_int + nf_float,
        out_node_nf=2 * nf_int, out_edge_nf=2)

    int_feature = jnp.floor(
        jax.random.uniform(k_int, (bs, n_nodes, nf_int), minval=0.0, maxval=4.0)
    ).astype(jnp.float32)
    float_feature = jax.random.normal(k_float, (bs, n_nodes, nf_float), jnp.float32)

    # node mask: pad out the last two nodes of batch element 1
    node_mask = jnp.ones((bs, n_nodes), jnp.float32)
    node_mask = node_mask.at[1, -2:].set(0.0)

    # fully-connected edge mask without self loops, restricted to real nodes
    eye = jnp.eye(n_nodes, dtype=jnp.float32)
    edge_mask = (node_mask[:, :, None] * node_mask[:, None, :]) * (1.0 - eye)
    edge_mask = edge_mask.reshape(bs * n_nodes * n_nodes, 1)

    edge_attr = jnp.floor(
        jax.random.uniform(k_edge, (bs * n_nodes * n_nodes, 1), minval=0.0, maxval=2.0)
    ).astype(jnp.float32) * edge_mask

    x = jax.random.normal(k_x, (bs, n_nodes, 3), jnp.float32)

    tensor = {"int_feature": int_feature,
              "float_feature": float_feature,
              "edge_attr": edge_attr}

    fwd = jax.jit(variational_dequantizer_forward)
    v, log_qv_xh = fwd(params, tensor, node_mask, edge_mask, x, k_noise)
    jax.block_until_ready((v, log_qv_xh))

    assert v["int_feature"].shape == (bs, n_nodes, nf_int)
    assert v["float_feature"].shape == (bs, n_nodes, nf_float)
    assert v["edge_attr"].shape == (bs * n_nodes * n_nodes, 1)
    assert log_qv_xh.shape == (bs,)
    assert bool(jnp.all(jnp.isfinite(log_qv_xh)))
    assert bool(jnp.all(jnp.isfinite(v["int_feature"])))
    assert bool(jnp.all(jnp.isfinite(v["edge_attr"])))
    print("KERNEL_OK")
</pallas_src>

<mosaic_0001>
module attributes {stable_mosaic.version = 11 : i64} {
  func.func @_linear_kernel(%arg0: i32, %arg1: memref<8x4xf32, #tpu.memory_space<vmem>>, %arg2: memref<4x64xf32, #tpu.memory_space<vmem>>, %arg3: memref<1x64xf32, #tpu.memory_space<vmem>>, %arg4: memref<8x64xbf16, #tpu.memory_space<vmem>>) attributes {dimension_semantics = [#tpu.dimension_semantics<parallel>], iteration_bounds = array<i64: 2>, scalar_prefetch = 0 : i64, scratch_operands = 0 : i64, tpu.core_type = #tpu.core_type<tc>, window_params = [{transform_indices = @transform_0, window_bounds = array<i64: 8, 4>}, {pipeline_mode = #tpu.pipeline_mode<synchronous>, transform_indices = @transform_1, window_bounds = array<i64: 4, 64>}, {pipeline_mode = #tpu.pipeline_mode<synchronous>, transform_indices = @transform_2, window_bounds = array<i64: 1, 64>}, {transform_indices = @transform_3, window_bounds = array<i64: 8, 64>}]} {
    %c0 = arith.constant 0 : index
    %c0_0 = arith.constant 0 : index
    %0 = vector.load %arg1[%c0, %c0_0] : memref<8x4xf32, #tpu.memory_space<vmem>>, vector<8x4xf32>
    %1 = arith.truncf %0 : vector<8x4xf32> to vector<8x4xbf16>
    %c0_1 = arith.constant 0 : index
    %c0_2 = arith.constant 0 : index
    %2 = vector.load %arg2[%c0_1, %c0_2] : memref<4x64xf32, #tpu.memory_space<vmem>>, vector<4x64xf32>
    %3 = arith.truncf %2 : vector<4x64xf32> to vector<4x64xbf16>
    %cst = arith.constant dense<0.000000e+00> : vector<8x64xf32>
    %4 = tpu.matmul %1, %3, %cst {dimension_numbers = #tpu.dot_dimension_numbers<[1], [0], [0], [1], [0, 0, 1, 1], [], []>} : vector<8x4xbf16>, vector<4x64xbf16>, vector<8x64xf32> -> vector<8x64xf32>
    %c0_3 = arith.constant 0 : index
    %c0_4 = arith.constant 0 : index
    %5 = vector.load %arg3[%c0_3, %c0_4] : memref<1x64xf32, #tpu.memory_space<vmem>>, vector<1x64xf32>
    %6 = vector.broadcast %5 : vector<1x64xf32> to vector<8x64xf32>
    %7 = arith.addf %4, %6 : vector<8x64xf32>
    %8 = arith.truncf %7 : vector<8x64xf32> to vector<8x64xbf16>
    %c0_5 = arith.constant 0 : index
    %c0_6 = arith.constant 0 : index
    %9 = vector.load %arg4[%c0_5, %c0_6] : memref<8x64xbf16, #tpu.memory_space<vmem>>, vector<8x64xbf16>
    tpu.vector_store %arg4[%c0_5, %c0_6], %8 {strides = array<i32>} : memref<8x64xbf16, #tpu.memory_space<vmem>>, vector<8x64xbf16>,
    return
  }
  func.func @transform_0(%arg0: i32) -> (i32, i32) {
    %c0_i32 = arith.constant 0 : i32
    %c0_i32_0 = arith.constant 0 : i32
    return %arg0, %c0_i32 : i32, i32
  }
  func.func @transform_1(%arg0: i32) -> (i32, i32) {
    %c0_i32 = arith.constant 0 : i32
    %c0_i32_0 = arith.constant 0 : i32
    %c0_i32_1 = arith.constant 0 : i32
    return %c0_i32, %c0_i32_0 : i32, i32
  }
  func.func @transform_2(%arg0: i32) -> (i32, i32) {
    %c0_i32 = arith.constant 0 : i32
    %c0_i32_0 = arith.constant 0 : i32
    %c0_i32_1 = arith.constant 0 : i32
    return %c0_i32, %c0_i32_0 : i32, i32
  }
  func.func @transform_3(%arg0: i32) -> (i32, i32) {
    %c0_i32 = arith.constant 0 : i32
    %c0_i32_0 = arith.constant 0 : i32
    return %arg0, %c0_i32 : i32, i32
  }
}

module attributes {stable_mosaic.version = 11 : i64} {
  func.func @_edge_layer_kernel(%arg0: i32, %arg1: i32, %arg2: memref<1x8x64xbf16, #tpu.memory_space<vmem>>, %arg3: memref<1x8x64xbf16, #tpu.memory_space<vmem>>, %arg4: memref<1x8x8x3xf32, #tpu.memory_space<vmem>>, %arg5: memref<64x64xf32, #tpu.memory_space<vmem>>, %arg6: memref<64x64xf32, #tpu.memory_space<vmem>>, %arg7: memref<1x64xf32, #tpu.memory_space<vmem>>, %arg8: memref<1x64xf32, #tpu.memory_space<vmem>>, %arg9: memref<1x64xf32, #tpu.memory_space<vmem>>, %arg10: memref<64x64xf32, #tpu.memory_space<vmem>>, %arg11: memref<1x64xf32, #tpu.memory_space<vmem>>, %arg12: memref<1x8x64xbf16, #tpu.memory_space<vmem>>) attributes {dimension_semantics = [#tpu.dimension_semantics<parallel>, #tpu.dimension_semantics<parallel>], iteration_bounds = array<i64: 2, 1>, scalar_prefetch = 0 : i64, scratch_operands = 0 : i64, tpu.core_type = #tpu.core_type<tc>, window_params = [{transform_indices = @transform_0, window_bounds = array<i64: 1, 8, 64>}, {transform_indices = @transform_1, window_bounds = array<i64: 1, 8, 64>}, {transform_indices = @transform_2, window_bounds = array<i64: 1, 8, 8, 3>}, {pipeline_mode = #tpu.pipeline_mode<synchronous>, transform_indices = @transform_3, window_bounds = array<i64: 64, 64>}, {pipeline_mode = #tpu.pipeline_mode<synchronous>, transform_indices = @transform_4, window_bounds = array<i64: 64, 64>}, {pipeline_mode = #tpu.pipeline_mode<synchronous>, transform_indices = @transform_5, window_bounds = array<i64: 1, 64>}, {pipeline_mode = #tpu.pipeline_mode<synchronous>, transform_indices = @transform_6, window_bounds = array<i64: 1, 64>}, {pipeline_mode = #tpu.pipeline_mode<synchronous>, transform_indices = @transform_7, window_bounds = array<i64: 1, 64>}, {pipeline_mode = #tpu.pipeline_mode<synchronous>, transform_indices = @transform_8, window_bounds = array<i64: 64, 64>}, {pipeline_mode = #tpu.pipeline_mode<synchronous>, transform_indices = @transform_9, window_bounds = array<i64: 1, 64>}, {transform_indices = @transform_10, window_bounds = array<i64: 1, 8, 64>}]} {
    %c0 = arith.constant 0 : index
    %c0_0 = arith.constant 0 : index
    %c0_1 = arith.constant 0 : index
    %0 = vector.load %arg2[%c0, %c0_0, %c0_1] : memref<1x8x64xbf16, #tpu.memory_space<vmem>>, vector<1x8x64xbf16>
    %1 = vector.shape_cast %0 : vector<1x8x64xbf16> to vector<8x64xbf16>
    %c0_2 = arith.constant 0 : index
    %c0_3 = arith.constant 0 : index
    %c0_4 = arith.constant 0 : index
    %2 = vector.load %arg3[%c0_2, %c0_3, %c0_4] : memref<1x8x64xbf16, #tpu.memory_space<vmem>>, vector<1x8x64xbf16>
    %3 = vector.shape_cast %2 : vector<1x8x64xbf16> to vector<8x64xbf16>
    %c0_5 = arith.constant 0 : index
    %c0_6 = arith.constant 0 : index
    %4 = vector.load %arg5[%c0_5, %c0_6] : memref<64x64xf32, #tpu.memory_space<vmem>>, vector<64x64xf32>
    %5 = arith.truncf %4 : vector<64x64xf32> to vector<64x64xbf16>
    %cst = arith.constant dense<0.000000e+00> : vector<8x64xf32>
    %6 = tpu.matmul %1, %5, %cst {dimension_numbers = #tpu.dot_dimension_numbers<[1], [0], [0], [1], [0, 0, 1, 1], [], []>} : vector<8x64xbf16>, vector<64x64xbf16>, vector<8x64xf32> -> vector<8x64xf32>
    %c0_7 = arith.constant 0 : index
    %c0_8 = arith.constant 0 : index
    %7 = vector.load %arg7[%c0_7, %c0_8] : memref<1x64xf32, #tpu.memory_space<vmem>>, vector<1x64xf32>
    %8 = vector.broadcast %7 : vector<1x64xf32> to vector<8x64xf32>
    %9 = arith.addf %6, %8 : vector<8x64xf32>
    %c0_9 = arith.constant 0 : index
    %c0_10 = arith.constant 0 : index
    %10 = vector.load %arg6[%c0_9, %c0_10] : memref<64x64xf32, #tpu.memory_space<vmem>>, vector<64x64xf32>
    %11 = arith.truncf %10 : vector<64x64xf32> to vector<64x64xbf16>
    %cst_11 = arith.constant dense<0.000000e+00> : vector<8x64xf32>
    %12 = tpu.matmul %3, %11, %cst_11 {dimension_numbers = #tpu.dot_dimension_numbers<[1], [0], [0], [1], [0, 0, 1, 1], [], []>} : vector<8x64xbf16>, vector<64x64xbf16>, vector<8x64xf32> -> vector<8x64xf32>
    %c0_12 = arith.constant 0 : index
    %c0_13 = arith.constant 0 : index
    %c0_14 = arith.constant 0 : index
    %c0_15 = arith.constant 0 : index
    %13 = vector.load %arg4[%c0_12, %c0_13, %c0_14, %c0_15] : memref<1x8x8x3xf32, #tpu.memory_space<vmem>>, vector<1x8x8x3xf32>
    %14 = vector.shape_cast %13 : vector<1x8x8x3xf32> to vector<8x8x3xf32>
    %15 = vector.extract_strided_slice %14 {offsets = [0, 0, 0], sizes = [8, 8, 1], strides = [1, 1, 1]} : vector<8x8x3xf32> to vector<8x8x1xf32>
    %16 = vector.extract_strided_slice %14 {offsets = [0, 0, 1], sizes = [8, 8, 1], strides = [1, 1, 1]} : vector<8x8x3xf32> to vector<8x8x1xf32>
    %17 = vector.extract_strided_slice %14 {offsets = [0, 0, 2], sizes = [8, 8, 1], strides = [1, 1, 1]} : vector<8x8x3xf32> to vector<8x8x1xf32>
    %18 = vector.shape_cast %9 : vector<8x64xf32> to vector<8x1x64xf32>
    %19 = vector.shape_cast %12 : vector<8x64xf32> to vector<1x8x64xf32>
    %20 = vector.broadcast %18 : vector<8x1x64xf32> to vector<8x8x64xf32>
    %21 = vector.broadcast %19 : vector<1x8x64xf32> to vector<8x8x64xf32>
    %22 = arith.addf %20, %21 : vector<8x8x64xf32>
    %c0_16 = arith.constant 0 : index
    %c0_17 = arith.constant 0 : index
    %23 = vector.load %arg8[%c0_16, %c0_17] : memref<1x64xf32, #tpu.memory_space<vmem>>, vector<1x64xf32>
    %24 = vector.shape_cast %23 : vector<1x64xf32> to vector<1x1x64xf32>
    %25 = vector.broadcast %15 : vector<8x8x1xf32> to vector<8x8x64xf32>
    %26 = vector.broadcast %24 : vector<1x1x64xf32> to vector<8x8x64xf32>
    %27 = arith.mulf %25, %26 : vector<8x8x64xf32>
    %28 = arith.addf %22, %27 : vector<8x8x64xf32>
    %c0_18 = arith.constant 0 : index
    %c0_19 = arith.constant 0 : index
    %29 = vector.load %arg9[%c0_18, %c0_19] : memref<1x64xf32, #tpu.memory_space<vmem>>, vector<1x64xf32>
    %30 = vector.shape_cast %29 : vector<1x64xf32> to vector<1x1x64xf32>
    %31 = vector.broadcast %16 : vector<8x8x1xf32> to vector<8x8x64xf32>
    %32 = vector.broadcast %30 : vector<1x1x64xf32> to vector<8x8x64xf32>
    %33 = arith.mulf %31, %32 : vector<8x8x64xf32>
    %34 = arith.addf %28, %33 : vector<8x8x64xf32>
    %cst_20 = arith.constant 0.000000e+00 : f32
    %35 = vector.broadcast %cst_20 : f32 to vector<8x8x64xf32>
    %36 = arith.subf %35, %34 : vector<8x8x64xf32>
    %37 = math.exp %36 : vector<8x8x64xf32>
    %cst_21 = arith.constant 1.000000e+00 : f32
    %38 = vector.broadcast %cst_21 : f32 to vector<8x8x64xf32>
    %39 = arith.addf %38, %37 : vector<8x8x64xf32>
    %40 = tpu.reciprocal %39 {approx = true} : vector<8x8x64xf32> -> vector<8x8x64xf32>
    %41 = arith.mulf %34, %40 : vector<8x8x64xf32>
    %42 = vector.shape_cast %41 : vector<8x8x64xf32> to vector<64x64xf32>
    %43 = arith.truncf %42 : vector<64x64xf32> to vector<64x64xbf16>
    %c0_22 = arith.constant 0 : index
    %c0_23 = arith.constant 0 : index
    %44 = vector.load %arg10[%c0_22, %c0_23] : memref<64x64xf32, #tpu.memory_space<vmem>>, vector<64x64xf32>
    %45 = arith.truncf %44 : vector<64x64xf32> to vector<64x64xbf16>
    %cst_24 = arith.constant dense<0.000000e+00> : vector<64x64xf32>
    %46 = tpu.matmul %43, %45, %cst_24 {dimension_numbers = #tpu.dot_dimension_numbers<[1], [0], [0], [1], [0, 0, 1, 1], [], []>} : vector<64x64xbf16>, vector<64x64xbf16>, vector<64x64xf32> -> vector<64x64xf32>
    %c0_25 = arith.constant 0 : index
    %c0_26 = arith.constant 0 : index
    %47 = vector.load %arg11[%c0_25, %c0_26] : memref<1x64xf32, #tpu.memory_space<vmem>>, vector<1x64xf32>
    %48 = vector.broadcast %47 : vector<1x64xf32> to vector<64x64xf32>
    %49 = arith.addf %46, %48 : vector<64x64xf32>
    %cst_27 = arith.constant 0.000000e+00 : f32
    %50 = vector.broadcast %cst_27 : f32 to vector<64x64xf32>
    %51 = arith.subf %50, %49 : vector<64x64xf32>
    %52 = math.exp %51 : vector<64x64xf32>
    %cst_28 = arith.constant 1.000000e+00 : f32
    %53 = vector.broadcast %cst_28 : f32 to vector<64x64xf32>
    %54 = arith.addf %53, %52 : vector<64x64xf32>
    %55 = tpu.reciprocal %54 {approx = true} : vector<64x64xf32> -> vector<64x64xf32>
    %56 = arith.mulf %49, %55 : vector<64x64xf32>
    %57 = vector.shape_cast %56 : vector<64x64xf32> to vector<8x8x64xf32>
    %58 = vector.broadcast %17 : vector<8x8x1xf32> to vector<8x8x64xf32>
    %59 = arith.mulf %57, %58 : vector<8x8x64xf32>
    %cst_29 = arith.constant dense<0.000000e+00> : vector<8x64xf32>
    %60 = vector.multi_reduction <add>, %59, %cst_29 [1] : vector<8x8x64xf32> to vector<8x64xf32>
    %61 = arith.truncf %60 : vector<8x64xf32> to vector<8x64xbf16>
    %c0_30 = arith.constant 0 : index
    %c0_31 = arith.constant 0 : index
    %c0_32 = arith.constant 0 : index
    %62 = vector.load %arg12[%c0_30, %c0_31, %c0_32] : memref<1x8x64xbf16, #tpu.memory_space<vmem>>, vector<1x8x64xbf16>
    %63 = vector.shape_cast %62 : vector<1x8x64xbf16> to vector<8x64xbf16>
    %64 = vector.shape_cast %61 : vector<8x64xbf16> to vector<1x8x64xbf16>
    tpu.vector_store %arg12[%c0_30, %c0_31, %c0_32], %64 {strides = array<i32>} : memref<1x8x64xbf16, #tpu.memory_space<vmem>>, vector<1x8x64xbf16>,
    return
  }
  func.func @transform_0(%arg0: i32, %arg1: i32) -> (i32, i32, i32) {
    %c0_i32 = arith.constant 0 : i32
    %c0_i32_0 = arith.constant 0 : i32
    return %arg0, %arg1, %c0_i32 : i32, i32, i32
  }
  func.func @transform_1(%arg0: i32, %arg1: i32) -> (i32, i32, i32) {
    %c0_i32 = arith.constant 0 : i32
    %c0_i32_0 = arith.constant 0 : i32
    %c0_i32_1 = arith.constant 0 : i32
    return %arg0, %c0_i32, %c0_i32_0 : i32, i32, i32
  }
  func.func @transform_2(%arg0: i32, %arg1: i32) -> (i32, i32, i32, i32) {
    %c0_i32 = arith.constant 0 : i32
    %c0_i32_0 = arith.constant 0 : i32
    %c0_i32_1 = arith.constant 0 : i32
    return %arg0, %arg1, %c0_i32, %c0_i32_0 : i32, i32, i32, i32
  }
  func.func @transform_3(%arg0: i32, %arg1: i32) -> (i32, i32) {
    %c0_i32 = arith.constant 0 : i32
    %c0_i32_0 = arith.constant 0 : i32
    %c0_i32_1 = arith.constant 0 : i32
    return %c0_i32, %c0_i32_0 : i32, i32
  }
  func.func @transform_4(%arg0: i32, %arg1: i32) -> (i32, i32) {
    %c0_i32 = arith.constant 0 : i32
    %c0_i32_0 = arith.constant 0 : i32
    %c0_i32_1 = arith.constant 0 : i32
    return %c0_i32, %c0_i32_0 : i32, i32
  }
  func.func @transform_5(%arg0: i32, %arg1: i32) -> (i32, i32) {
    %c0_i32 = arith.constant 0 : i32
    %c0_i32_0 = arith.constant 0 : i32
    %c0_i32_1 = arith.constant 0 : i32
    return %c0_i32, %c0_i32_0 : i32, i32
  }
  func.func @transform_6(%arg0: i32, %arg1: i32) -> (i32, i32) {
    %c0_i32 = arith.constant 0 : i32
    %c0_i32_0 = arith.constant 0 : i32
    %c0_i32_1 = arith.constant 0 : i32
    return %c0_i32, %c0_i32_0 : i32, i32
  }
  func.func @transform_7(%arg0: i32, %arg1: i32) -> (i32, i32) {
    %c0_i32 = arith.constant 0 : i32
    %c0_i32_0 = arith.constant 0 : i32
    %c0_i32_1 = arith.constant 0 : i32
    return %c0_i32, %c0_i32_0 : i32, i32
  }
  func.func @transform_8(%arg0: i32, %arg1: i32) -> (i32, i32) {
    %c0_i32 = arith.constant 0 : i32
    %c0_i32_0 = arith.constant 0 : i32
    %c0_i32_1 = arith.constant 0 : i32
    return %c0_i32, %c0_i32_0 : i32, i32
  }
  func.func @transform_9(%arg0: i32, %arg1: i32) -> (i32, i32) {
    %c0_i32 = arith.constant 0 : i32
    %c0_i32_0 = arith.constant 0 : i32
    %c0_i32_1 = arith.constant 0 : i32
    return %c0_i32, %c0_i32_0 : i32, i32
  }
  func.func @transform_10(%arg0: i32, %arg1: i32) -> (i32, i32, i32) {
    %c0_i32 = arith.constant 0 : i32
    %c0_i32_0 = arith.constant 0 : i32
    return %arg0, %arg1, %c0_i32 : i32, i32, i32
  }
}

module attributes {stable_mosaic.version = 11 : i64} {
  func.func @_node_update_kernel(%arg0: i32, %arg1: memref<8x64xbf16, #tpu.memory_space<vmem>>, %arg2: memref<8x64xbf16, #tpu.memory_space<vmem>>, %arg3: memref<64x64xf32, #tpu.memory_space<vmem>>, %arg4: memref<64x64xf32, #tpu.memory_space<vmem>>, %arg5: memref<1x64xf32, #tpu.memory_space<vmem>>, %arg6: memref<64x64xf32, #tpu.memory_space<vmem>>, %arg7: memref<1x64xf32, #tpu.memory_space<vmem>>, %arg8: memref<8x1xf32, #tpu.memory_space<vmem>>, %arg9: memref<8x64xbf16, #tpu.memory_space<vmem>>) attributes {dimension_semantics = [#tpu.dimension_semantics<parallel>], iteration_bounds = array<i64: 2>, scalar_prefetch = 0 : i64, scratch_operands = 0 : i64, tpu.core_type = #tpu.core_type<tc>, window_params = [{transform_indices = @transform_0, window_bounds = array<i64: 8, 64>}, {transform_indices = @transform_1, window_bounds = array<i64: 8, 64>}, {pipeline_mode = #tpu.pipeline_mode<synchronous>, transform_indices = @transform_2, window_bounds = array<i64: 64, 64>}, {pipeline_mode = #tpu.pipeline_mode<synchronous>, transform_indices = @transform_3, window_bounds = array<i64: 64, 64>}, {pipeline_mode = #tpu.pipeline_mode<synchronous>, transform_indices = @transform_4, window_bounds = array<i64: 1, 64>}, {pipeline_mode = #tpu.pipeline_mode<synchronous>, transform_indices = @transform_5, window_bounds = array<i64: 64, 64>}, {pipeline_mode = #tpu.pipeline_mode<synchronous>, transform_indices = @transform_6, window_bounds = array<i64: 1, 64>}, {transform_indices = @transform_7, window_bounds = array<i64: 8, 1>}, {transform_indices = @transform_8, window_bounds = array<i64: 8, 64>}]} {
    %c0 = arith.constant 0 : index
    %c0_0 = arith.constant 0 : index
    %0 = vector.load %arg1[%c0, %c0_0] : memref<8x64xbf16, #tpu.memory_space<vmem>>, vector<8x64xbf16>
    %c0_1 = arith.constant 0 : index
    %c0_2 = arith.constant 0 : index
    %1 = vector.load %arg3[%c0_1, %c0_2] : memref<64x64xf32, #tpu.memory_space<vmem>>, vector<64x64xf32>
    %2 = arith.truncf %1 : vector<64x64xf32> to vector<64x64xbf16>
    %cst = arith.constant dense<0.000000e+00> : vector<8x64xf32>
    %3 = tpu.matmul %0, %2, %cst {dimension_numbers = #tpu.dot_dimension_numbers<[1], [0], [0], [1], [0, 0, 1, 1], [], []>} : vector<8x64xbf16>, vector<64x64xbf16>, vector<8x64xf32> -> vector<8x64xf32>
    %c0_3 = arith.constant 0 : index
    %c0_4 = arith.constant 0 : index
    %4 = vector.load %arg2[%c0_3, %c0_4] : memref<8x64xbf16, #tpu.memory_space<vmem>>, vector<8x64xbf16>
    %c0_5 = arith.constant 0 : index
    %c0_6 = arith.constant 0 : index
    %5 = vector.load %arg4[%c0_5, %c0_6] : memref<64x64xf32, #tpu.memory_space<vmem>>, vector<64x64xf32>
    %6 = arith.truncf %5 : vector<64x64xf32> to vector<64x64xbf16>
    %cst_7 = arith.constant dense<0.000000e+00> : vector<8x64xf32>
    %7 = tpu.matmul %4, %6, %cst_7 {dimension_numbers = #tpu.dot_dimension_numbers<[1], [0], [0], [1], [0, 0, 1, 1], [], []>} : vector<8x64xbf16>, vector<64x64xbf16>, vector<8x64xf32> -> vector<8x64xf32>
    %8 = arith.addf %3, %7 : vector<8x64xf32>
    %c0_8 = arith.constant 0 : index
    %c0_9 = arith.constant 0 : index
    %9 = vector.load %arg5[%c0_8, %c0_9] : memref<1x64xf32, #tpu.memory_space<vmem>>, vector<1x64xf32>
    %10 = vector.broadcast %9 : vector<1x64xf32> to vector<8x64xf32>
    %11 = arith.addf %8, %10 : vector<8x64xf32>
    %cst_10 = arith.constant 0.000000e+00 : f32
    %12 = vector.broadcast %cst_10 : f32 to vector<8x64xf32>
    %13 = arith.subf %12, %11 : vector<8x64xf32>
    %14 = math.exp %13 : vector<8x64xf32>
    %cst_11 = arith.constant 1.000000e+00 : f32
    %15 = vector.broadcast %cst_11 : f32 to vector<8x64xf32>
    %16 = arith.addf %15, %14 : vector<8x64xf32>
    %17 = tpu.reciprocal %16 {approx = true} : vector<8x64xf32> -> vector<8x64xf32>
    %18 = arith.mulf %11, %17 : vector<8x64xf32>
    %19 = arith.truncf %18 : vector<8x64xf32> to vector<8x64xbf16>
    %c0_12 = arith.constant 0 : index
    %c0_13 = arith.constant 0 : index
    %20 = vector.load %arg6[%c0_12, %c0_13] : memref<64x64xf32, #tpu.memory_space<vmem>>, vector<64x64xf32>
    %21 = arith.truncf %20 : vector<64x64xf32> to vector<64x64xbf16>
    %cst_14 = arith.constant dense<0.000000e+00> : vector<8x64xf32>
    %22 = tpu.matmul %19, %21, %cst_14 {dimension_numbers = #tpu.dot_dimension_numbers<[1], [0], [0], [1], [0, 0, 1, 1], [], []>} : vector<8x64xbf16>, vector<64x64xbf16>, vector<8x64xf32> -> vector<8x64xf32>
    %c0_15 = arith.constant 0 : index
    %c0_16 = arith.constant 0 : index
    %23 = vector.load %arg7[%c0_15, %c0_16] : memref<1x64xf32, #tpu.memory_space<vmem>>, vector<1x64xf32>
    %24 = vector.broadcast %23 : vector<1x64xf32> to vector<8x64xf32>
    %25 = arith.addf %22, %24 : vector<8x64xf32>
    %26 = arith.extf %0 : vector<8x64xbf16> to vector<8x64xf32>
    %27 = arith.addf %26, %25 : vector<8x64xf32>
    %c0_17 = arith.constant 0 : index
    %c0_18 = arith.constant 0 : index
    %28 = vector.load %arg8[%c0_17, %c0_18] : memref<8x1xf32, #tpu.memory_space<vmem>>, vector<8x1xf32>
    %29 = vector.broadcast %28 : vector<8x1xf32> to vector<8x64xf32>
    %30 = arith.mulf %27, %29 : vector<8x64xf32>
    %31 = arith.truncf %30 : vector<8x64xf32> to vector<8x64xbf16>
    %c0_19 = arith.constant 0 : index
    %c0_20 = arith.constant 0 : index
    %32 = vector.load %arg9[%c0_19, %c0_20] : memref<8x64xbf16, #tpu.memory_space<vmem>>, vector<8x64xbf16>
    tpu.vector_store %arg9[%c0_19, %c0_20], %31 {strides = array<i32>} : memref<8x64xbf16, #tpu.memory_space<vmem>>, vector<8x64xbf16>,
    return
  }
  func.func @transform_0(%arg0: i32) -> (i32, i32) {
    %c0_i32 = arith.constant 0 : i32
    %c0_i32_0 = arith.constant 0 : i32
    return %arg0, %c0_i32 : i32, i32
  }
  func.func @transform_1(%arg0: i32) -> (i32, i32) {
    %c0_i32 = arith.constant 0 : i32
    %c0_i32_0 = arith.constant 0 : i32
    return %arg0, %c0_i32 : i32, i32
  }
  func.func @transform_2(%arg0: i32) -> (i32, i32) {
    %c0_i32 = arith.constant 0 : i32
    %c0_i32_0 = arith.constant 0 : i32
    %c0_i32_1 = arith.constant 0 : i32
    return %c0_i32, %c0_i32_0 : i32, i32
  }
  func.func @transform_3(%arg0: i32) -> (i32, i32) {
    %c0_i32 = arith.constant 0 : i32
    %c0_i32_0 = arith.constant 0 : i32
    %c0_i32_1 = arith.constant 0 : i32
    return %c0_i32, %c0_i32_0 : i32, i32
  }
  func.func @transform_4(%arg0: i32) -> (i32, i32) {
    %c0_i32 = arith.constant 0 : i32
    %c0_i32_0 = arith.constant 0 : i32
    %c0_i32_1 = arith.constant 0 : i32
    return %c0_i32, %c0_i32_0 : i32, i32
  }
  func.func @transform_5(%arg0: i32) -> (i32, i32) {
    %c0_i32 = arith.constant 0 : i32
    %c0_i32_0 = arith.constant 0 : i32
    %c0_i32_1 = arith.constant 0 : i32
    return %c0_i32, %c0_i32_0 : i32, i32
  }
  func.func @transform_6(%arg0: i32) -> (i32, i32) {
    %c0_i32 = arith.constant 0 : i32
    %c0_i32_0 = arith.constant 0 : i32
    %c0_i32_1 = arith.constant 0 : i32
    return %c0_i32, %c0_i32_0 : i32, i32
  }
  func.func @transform_7(%arg0: i32) -> (i32, i32) {
    %c0_i32 = arith.constant 0 : i32
    %c0_i32_0 = arith.constant 0 : i32
    return %arg0, %c0_i32 : i32, i32
  }
  func.func @transform_8(%arg0: i32) -> (i32, i32) {
    %c0_i32 = arith.constant 0 : i32
    %c0_i32_0 = arith.constant 0 : i32
    return %arg0, %c0_i32 : i32, i32
  }
}

module attributes {stable_mosaic.version = 11 : i64} {
  func.func @_node_update_kernel(%arg0: i32, %arg1: memref<8x64xbf16, #tpu.memory_space<vmem>>, %arg2: memref<8x64xbf16, #tpu.memory_space<vmem>>, %arg3: memref<64x64xf32, #tpu.memory_space<vmem>>, %arg4: memref<64x64xf32, #tpu.memory_space<vmem>>, %arg5: memref<1x64xf32, #tpu.memory_space<vmem>>, %arg6: memref<64x64xf32, #tpu.memory_space<vmem>>, %arg7: memref<1x64xf32, #tpu.memory_space<vmem>>, %arg8: memref<8x1xf32, #tpu.memory_space<vmem>>, %arg9: memref<8x64xbf16, #tpu.memory_space<vmem>>) attributes {dimension_semantics = [#tpu.dimension_semantics<parallel>], iteration_bounds = array<i64: 2>, scalar_prefetch = 0 : i64, scratch_operands = 0 : i64, tpu.core_type = #tpu.core_type<tc>, window_params = [{transform_indices = @transform_0, window_bounds = array<i64: 8, 64>}, {transform_indices = @transform_1, window_bounds = array<i64: 8, 64>}, {pipeline_mode = #tpu.pipeline_mode<synchronous>, transform_indices = @transform_2, window_bounds = array<i64: 64, 64>}, {pipeline_mode = #tpu.pipeline_mode<synchronous>, transform_indices = @transform_3, window_bounds = array<i64: 64, 64>}, {pipeline_mode = #tpu.pipeline_mode<synchronous>, transform_indices = @transform_4, window_bounds = array<i64: 1, 64>}, {pipeline_mode = #tpu.pipeline_mode<synchronous>, transform_indices = @transform_5, window_bounds = array<i64: 64, 64>}, {pipeline_mode = #tpu.pipeline_mode<synchronous>, transform_indices = @transform_6, window_bounds = array<i64: 1, 64>}, {transform_indices = @transform_7, window_bounds = array<i64: 8, 1>}, {transform_indices = @transform_8, window_bounds = array<i64: 8, 64>}]} {
    %c0 = arith.constant 0 : index
    %c0_0 = arith.constant 0 : index
    %0 = vector.load %arg1[%c0, %c0_0] : memref<8x64xbf16, #tpu.memory_space<vmem>>, vector<8x64xbf16>
    %c0_1 = arith.constant 0 : index
    %c0_2 = arith.constant 0 : index
    %1 = vector.load %arg3[%c0_1, %c0_2] : memref<64x64xf32, #tpu.memory_space<vmem>>, vector<64x64xf32>
    %2 = arith.truncf %1 : vector<64x64xf32> to vector<64x64xbf16>
    %cst = arith.constant dense<0.000000e+00> : vector<8x64xf32>
    %3 = tpu.matmul %0, %2, %cst {dimension_numbers = #tpu.dot_dimension_numbers<[1], [0], [0], [1], [0, 0, 1, 1], [], []>} : vector<8x64xbf16>, vector<64x64xbf16>, vector<8x64xf32> -> vector<8x64xf32>
    %c0_3 = arith.constant 0 : index
    %c0_4 = arith.constant 0 : index
    %4 = vector.load %arg2[%c0_3, %c0_4] : memref<8x64xbf16, #tpu.memory_space<vmem>>, vector<8x64xbf16>
    %c0_5 = arith.constant 0 : index
    %c0_6 = arith.constant 0 : index
    %5 = vector.load %arg4[%c0_5, %c0_6] : memref<64x64xf32, #tpu.memory_space<vmem>>, vector<64x64xf32>
    %6 = arith.truncf %5 : vector<64x64xf32> to vector<64x64xbf16>
    %cst_7 = arith.constant dense<0.000000e+00> : vector<8x64xf32>
    %7 = tpu.matmul %4, %6, %cst_7 {dimension_numbers = #tpu.dot_dimension_numbers<[1], [0], [0], [1], [0, 0, 1, 1], [], []>} : vector<8x64xbf16>, vector<64x64xbf16>, vector<8x64xf32> -> vector<8x64xf32>
    %8 = arith.addf %3, %7 : vector<8x64xf32>
    %c0_8 = arith.constant 0 : index
    %c0_9 = arith.constant 0 : index
    %9 = vector.load %arg5[%c0_8, %c0_9] : memref<1x64xf32, #tpu.memory_space<vmem>>, vector<1x64xf32>
    %10 = vector.broadcast %9 : vector<1x64xf32> to vector<8x64xf32>
    %11 = arith.addf %8, %10 : vector<8x64xf32>
    %cst_10 = arith.constant 0.000000e+00 : f32
    %12 = vector.broadcast %cst_10 : f32 to vector<8x64xf32>
    %13 = arith.subf %12, %11 : vector<8x64xf32>
    %14 = math.exp %13 : vector<8x64xf32>
    %cst_11 = arith.constant 1.000000e+00 : f32
    %15 = vector.broadcast %cst_11 : f32 to vector<8x64xf32>
    %16 = arith.addf %15, %14 : vector<8x64xf32>
    %17 = tpu.reciprocal %16 {approx = true} : vector<8x64xf32> -> vector<8x64xf32>
    %18 = arith.mulf %11, %17 : vector<8x64xf32>
    %19 = arith.truncf %18 : vector<8x64xf32> to vector<8x64xbf16>
    %c0_12 = arith.constant 0 : index
    %c0_13 = arith.constant 0 : index
    %20 = vector.load %arg6[%c0_12, %c0_13] : memref<64x64xf32, #tpu.memory_space<vmem>>, vector<64x64xf32>
    %21 = arith.truncf %20 : vector<64x64xf32> to vector<64x64xbf16>
    %cst_14 = arith.constant dense<0.000000e+00> : vector<8x64xf32>
    %22 = tpu.matmul %19, %21, %cst_14 {dimension_numbers = #tpu.dot_dimension_numbers<[1], [0], [0], [1], [0, 0, 1, 1], [], []>} : vector<8x64xbf16>, vector<64x64xbf16>, vector<8x64xf32> -> vector<8x64xf32>
    %c0_15 = arith.constant 0 : index
    %c0_16 = arith.constant 0 : index
    %23 = vector.load %arg7[%c0_15, %c0_16] : memref<1x64xf32, #tpu.memory_space<vmem>>, vector<1x64xf32>
    %24 = vector.broadcast %23 : vector<1x64xf32> to vector<8x64xf32>
    %25 = arith.addf %22, %24 : vector<8x64xf32>
    %26 = arith.extf %0 : vector<8x64xbf16> to vector<8x64xf32>
    %27 = arith.addf %26, %25 : vector<8x64xf32>
    %c0_17 = arith.constant 0 : index
    %c0_18 = arith.constant 0 : index
    %28 = vector.load %arg8[%c0_17, %c0_18] : memref<8x1xf32, #tpu.memory_space<vmem>>, vector<8x1xf32>
    %29 = vector.broadcast %28 : vector<8x1xf32> to vector<8x64xf32>
    %30 = arith.mulf %27, %29 : vector<8x64xf32>
    %31 = arith.truncf %30 : vector<8x64xf32> to vector<8x64xbf16>
    %c0_19 = arith.constant 0 : index
    %c0_20 = arith.constant 0 : index
    %32 = vector.load %arg9[%c0_19, %c0_20] : memref<8x64xbf16, #tpu.memory_space<vmem>>, vector<8x64xbf16>
    tpu.vector_store %arg9[%c0_19, %c0_20], %31 {strides = array<i32>} : memref<8x64xbf16, #tpu.memory_space<vmem>>, vector<8x64xbf16>,
    return
  }
  func.func @transform_0(%arg0: i32) -> (i32, i32) {
    %c0_i32 = arith.constant 0 : i32
    %c0_i32_0 = arith.constant 0 : i32
    return %arg0, %c0_i32 : i32, i32
  }
  func.func @transform_1(%arg0: i32) -> (i32, i32) {
    %c0_i32 = arith.constant 0 : i32
    %c0_i32_0 = arith.constant 0 : i32
    return %arg0, %c0_i32 : i32, i32
  }
  func.func @transform_2(%arg0: i32) -> (i32, i32) {
    %c0_i32 = arith.constant 0 : i32
    %c0_i32_0 = arith.constant 0 : i32
    %c0_i32_1 = arith.constant 0 : i32
    return %c0_i32, %c0_i32_0 : i32, i32
  }
  func.func @transform_3(%arg0: i32) -> (i32, i32) {
    %c0_i32 = arith.constant 0 : i32
    %c0_i32_0 = arith.constant 0 : i32
    %c0_i32_1 = arith.constant 0 : i32
    return %c0_i32, %c0_i32_0 : i32, i32
  }
  func.func @transform_4(%arg0: i32) -> (i32, i32) {
    %c0_i32 = arith.constant 0 : i32
    %c0_i32_0 = arith.constant 0 : i32
    %c0_i32_1 = arith.constant 0 : i32
    return %c0_i32, %c0_i32_0 : i32, i32
  }
  func.func @transform_5(%arg0: i32) -> (i32, i32) {
    %c0_i32 = arith.constant 0 : i32
    %c0_i32_0 = arith.constant 0 : i32
    %c0_i32_1 = arith.constant 0 : i32
    return %c0_i32, %c0_i32_0 : i32, i32
  }
  func.func @transform_6(%arg0: i32) -> (i32, i32) {
    %c0_i32 = arith.constant 0 : i32
    %c0_i32_0 = arith.constant 0 : i32
    %c0_i32_1 = arith.constant 0 : i32
    return %c0_i32, %c0_i32_0 : i32, i32
  }
  func.func @transform_7(%arg0: i32) -> (i32, i32) {
    %c0_i32 = arith.constant 0 : i32
    %c0_i32_0 = arith.constant 0 : i32
    return %arg0, %c0_i32 : i32, i32
  }
  func.func @transform_8(%arg0: i32) -> (i32, i32) {
    %c0_i32 = arith.constant 0 : i32
    %c0_i32_0 = arith.constant 0 : i32
    return %arg0, %c0_i32 : i32, i32
  }
}

module attributes {stable_mosaic.version = 11 : i64} {
  func.func @_node_update_kernel(%arg0: i32, %arg1: memref<8x64xbf16, #tpu.memory_space<vmem>>, %arg2: memref<8x64xbf16, #tpu.memory_space<vmem>>, %arg3: memref<64x64xf32, #tpu.memory_space<vmem>>, %arg4: memref<64x64xf32, #tpu.memory_space<vmem>>, %arg5: memref<1x64xf32, #tpu.memory_space<vmem>>, %arg6: memref<64x64xf32, #tpu.memory_space<vmem>>, %arg7: memref<1x64xf32, #tpu.memory_space<vmem>>, %arg8: memref<8x1xf32, #tpu.memory_space<vmem>>, %arg9: memref<8x64xbf16, #tpu.memory_space<vmem>>) attributes {dimension_semantics = [#tpu.dimension_semantics<parallel>], iteration_bounds = array<i64: 2>, scalar_prefetch = 0 : i64, scratch_operands = 0 : i64, tpu.core_type = #tpu.core_type<tc>, window_params = [{transform_indices = @transform_0, window_bounds = array<i64: 8, 64>}, {transform_indices = @transform_1, window_bounds = array<i64: 8, 64>}, {pipeline_mode = #tpu.pipeline_mode<synchronous>, transform_indices = @transform_2, window_bounds = array<i64: 64, 64>}, {pipeline_mode = #tpu.pipeline_mode<synchronous>, transform_indices = @transform_3, window_bounds = array<i64: 64, 64>}, {pipeline_mode = #tpu.pipeline_mode<synchronous>, transform_indices = @transform_4, window_bounds = array<i64: 1, 64>}, {pipeline_mode = #tpu.pipeline_mode<synchronous>, transform_indices = @transform_5, window_bounds = array<i64: 64, 64>}, {pipeline_mode = #tpu.pipeline_mode<synchronous>, transform_indices = @transform_6, window_bounds = array<i64: 1, 64>}, {transform_indices = @transform_7, window_bounds = array<i64: 8, 1>}, {transform_indices = @transform_8, window_bounds = array<i64: 8, 64>}]} {
    %c0 = arith.constant 0 : index
    %c0_0 = arith.constant 0 : index
    %0 = vector.load %arg1[%c0, %c0_0] : memref<8x64xbf16, #tpu.memory_space<vmem>>, vector<8x64xbf16>
    %c0_1 = arith.constant 0 : index
    %c0_2 = arith.constant 0 : index
    %1 = vector.load %arg3[%c0_1, %c0_2] : memref<64x64xf32, #tpu.memory_space<vmem>>, vector<64x64xf32>
    %2 = arith.truncf %1 : vector<64x64xf32> to vector<64x64xbf16>
    %cst = arith.constant dense<0.000000e+00> : vector<8x64xf32>
    %3 = tpu.matmul %0, %2, %cst {dimension_numbers = #tpu.dot_dimension_numbers<[1], [0], [0], [1], [0, 0, 1, 1], [], []>} : vector<8x64xbf16>, vector<64x64xbf16>, vector<8x64xf32> -> vector<8x64xf32>
    %c0_3 = arith.constant 0 : index
    %c0_4 = arith.constant 0 : index
    %4 = vector.load %arg2[%c0_3, %c0_4] : memref<8x64xbf16, #tpu.memory_space<vmem>>, vector<8x64xbf16>
    %c0_5 = arith.constant 0 : index
    %c0_6 = arith.constant 0 : index
    %5 = vector.load %arg4[%c0_5, %c0_6] : memref<64x64xf32, #tpu.memory_space<vmem>>, vector<64x64xf32>
    %6 = arith.truncf %5 : vector<64x64xf32> to vector<64x64xbf16>
    %cst_7 = arith.constant dense<0.000000e+00> : vector<8x64xf32>
    %7 = tpu.matmul %4, %6, %cst_7 {dimension_numbers = #tpu.dot_dimension_numbers<[1], [0], [0], [1], [0, 0, 1, 1], [], []>} : vector<8x64xbf16>, vector<64x64xbf16>, vector<8x64xf32> -> vector<8x64xf32>
    %8 = arith.addf %3, %7 : vector<8x64xf32>
    %c0_8 = arith.constant 0 : index
    %c0_9 = arith.constant 0 : index
    %9 = vector.load %arg5[%c0_8, %c0_9] : memref<1x64xf32, #tpu.memory_space<vmem>>, vector<1x64xf32>
    %10 = vector.broadcast %9 : vector<1x64xf32> to vector<8x64xf32>
    %11 = arith.addf %8, %10 : vector<8x64xf32>
    %cst_10 = arith.constant 0.000000e+00 : f32
    %12 = vector.broadcast %cst_10 : f32 to vector<8x64xf32>
    %13 = arith.subf %12, %11 : vector<8x64xf32>
    %14 = math.exp %13 : vector<8x64xf32>
    %cst_11 = arith.constant 1.000000e+00 : f32
    %15 = vector.broadcast %cst_11 : f32 to vector<8x64xf32>
    %16 = arith.addf %15, %14 : vector<8x64xf32>
    %17 = tpu.reciprocal %16 {approx = true} : vector<8x64xf32> -> vector<8x64xf32>
    %18 = arith.mulf %11, %17 : vector<8x64xf32>
    %19 = arith.truncf %18 : vector<8x64xf32> to vector<8x64xbf16>
    %c0_12 = arith.constant 0 : index
    %c0_13 = arith.constant 0 : index
    %20 = vector.load %arg6[%c0_12, %c0_13] : memref<64x64xf32, #tpu.memory_space<vmem>>, vector<64x64xf32>
    %21 = arith.truncf %20 : vector<64x64xf32> to vector<64x64xbf16>
    %cst_14 = arith.constant dense<0.000000e+00> : vector<8x64xf32>
    %22 = tpu.matmul %19, %21, %cst_14 {dimension_numbers = #tpu.dot_dimension_numbers<[1], [0], [0], [1], [0, 0, 1, 1], [], []>} : vector<8x64xbf16>, vector<64x64xbf16>, vector<8x64xf32> -> vector<8x64xf32>
    %c0_15 = arith.constant 0 : index
    %c0_16 = arith.constant 0 : index
    %23 = vector.load %arg7[%c0_15, %c0_16] : memref<1x64xf32, #tpu.memory_space<vmem>>, vector<1x64xf32>
    %24 = vector.broadcast %23 : vector<1x64xf32> to vector<8x64xf32>
    %25 = arith.addf %22, %24 : vector<8x64xf32>
    %26 = arith.extf %0 : vector<8x64xbf16> to vector<8x64xf32>
    %27 = arith.addf %26, %25 : vector<8x64xf32>
    %c0_17 = arith.constant 0 : index
    %c0_18 = arith.constant 0 : index
    %28 = vector.load %arg8[%c0_17, %c0_18] : memref<8x1xf32, #tpu.memory_space<vmem>>, vector<8x1xf32>
    %29 = vector.broadcast %28 : vector<8x1xf32> to vector<8x64xf32>
    %30 = arith.mulf %27, %29 : vector<8x64xf32>
    %31 = arith.truncf %30 : vector<8x64xf32> to vector<8x64xbf16>
    %c0_19 = arith.constant 0 : index
    %c0_20 = arith.constant 0 : index
    %32 = vector.load %arg9[%c0_19, %c0_20] : memref<8x64xbf16, #tpu.memory_space<vmem>>, vector<8x64xbf16>
    tpu.vector_store %arg9[%c0_19, %c0_20], %31 {strides = array<i32>} : memref<8x64xbf16, #tpu.memory_space<vmem>>, vector<8x64xbf16>,
    return
  }
  func.func @transform_0(%arg0: i32) -> (i32, i32) {
    %c0_i32 = arith.constant 0 : i32
    %c0_i32_0 = arith.constant 0 : i32
    return %arg0, %c0_i32 : i32, i32
  }
  func.func @transform_1(%arg0: i32) -> (i32, i32) {
    %c0_i32 = arith.constant 0 : i32
    %c0_i32_0 = arith.constant 0 : i32
    return %arg0, %c0_i32 : i32, i32
  }
  func.func @transform_2(%arg0: i32) -> (i32, i32) {
    %c0_i32 = arith.constant 0 : i32
    %c0_i32_0 = arith.constant 0 : i32
    %c0_i32_1 = arith.constant 0 : i32
    return %c0_i32, %c0_i32_0 : i32, i32
  }
  func.func @transform_3(%arg0: i32) -> (i32, i32) {
    %c0_i32 = arith.constant 0 : i32
    %c0_i32_0 = arith.constant 0 : i32
    %c0_i32_1 = arith.constant 0 : i32
    return %c0_i32, %c0_i32_0 : i32, i32
  }
  func.func @transform_4(%arg0: i32) -> (i32, i32) {
    %c0_i32 = arith.constant 0 : i32
    %c0_i32_0 = arith.constant 0 : i32
    %c0_i32_1 = arith.constant 0 : i32
    return %c0_i32, %c0_i32_0 : i32, i32
  }
  func.func @transform_5(%arg0: i32) -> (i32, i32) {
    %c0_i32 = arith.constant 0 : i32
    %c0_i32_0 = arith.constant 0 : i32
    %c0_i32_1 = arith.constant 0 : i32
    return %c0_i32, %c0_i32_0 : i32, i32
  }
  func.func @transform_6(%arg0: i32) -> (i32, i32) {
    %c0_i32 = arith.constant 0 : i32
    %c0_i32_0 = arith.constant 0 : i32
    %c0_i32_1 = arith.constant 0 : i32
    return %c0_i32, %c0_i32_0 : i32, i32
  }
  func.func @transform_7(%arg0: i32) -> (i32, i32) {
    %c0_i32 = arith.constant 0 : i32
    %c0_i32_0 = arith.constant 0 : i32
    return %arg0, %c0_i32 : i32, i32
  }
  func.func @transform_8(%arg0: i32) -> (i32, i32) {
    %c0_i32 = arith.constant 0 : i32
    %c0_i32_0 = arith.constant 0 : i32
    return %arg0, %c0_i32 : i32, i32
  }
}

module attributes {stable_mosaic.version = 11 : i64} {
  func.func @_edge_layer_kernel(%arg0: i32, %arg1: i32, %arg2: memref<1x8x64xbf16, #tpu.memory_space<vmem>>, %arg3: memref<1x8x64xbf16, #tpu.memory_space<vmem>>, %arg4: memref<1x8x8x3xf32, #tpu.memory_space<vmem>>, %arg5: memref<64x64xf32, #tpu.memory_space<vmem>>, %arg6: memref<64x64xf32, #tpu.memory_space<vmem>>, %arg7: memref<1x64xf32, #tpu.memory_space<vmem>>, %arg8: memref<1x64xf32, #tpu.memory_space<vmem>>, %arg9: memref<1x64xf32, #tpu.memory_space<vmem>>, %arg10: memref<64x64xf32, #tpu.memory_space<vmem>>, %arg11: memref<1x64xf32, #tpu.memory_space<vmem>>, %arg12: memref<64x2xf32, #tpu.memory_space<vmem>>, %arg13: memref<1x2xf32, #tpu.memory_space<vmem>>, %arg14: memref<1x8x64xbf16, #tpu.memory_space<vmem>>, %arg15: memref<1x8x8x2xf32, #tpu.memory_space<vmem>>) attributes {dimension_semantics = [#tpu.dimension_semantics<parallel>, #tpu.dimension_semantics<parallel>], iteration_bounds = array<i64: 2, 1>, scalar_prefetch = 0 : i64, scratch_operands = 0 : i64, tpu.core_type = #tpu.core_type<tc>, window_params = [{transform_indices = @transform_0, window_bounds = array<i64: 1, 8, 64>}, {transform_indices = @transform_1, window_bounds = array<i64: 1, 8, 64>}, {transform_indices = @transform_2, window_bounds = array<i64: 1, 8, 8, 3>}, {pipeline_mode = #tpu.pipeline_mode<synchronous>, transform_indices = @transform_3, window_bounds = array<i64: 64, 64>}, {pipeline_mode = #tpu.pipeline_mode<synchronous>, transform_indices = @transform_4, window_bounds = array<i64: 64, 64>}, {pipeline_mode = #tpu.pipeline_mode<synchronous>, transform_indices = @transform_5, window_bounds = array<i64: 1, 64>}, {pipeline_mode = #tpu.pipeline_mode<synchronous>, transform_indices = @transform_6, window_bounds = array<i64: 1, 64>}, {pipeline_mode = #tpu.pipeline_mode<synchronous>, transform_indices = @transform_7, window_bounds = array<i64: 1, 64>}, {pipeline_mode = #tpu.pipeline_mode<synchronous>, transform_indices = @transform_8, window_bounds = array<i64: 64, 64>}, {pipeline_mode = #tpu.pipeline_mode<synchronous>, transform_indices = @transform_9, window_bounds = array<i64: 1, 64>}, {pipeline_mode = #tpu.pipeline_mode<synchronous>, transform_indices = @transform_10, window_bounds = array<i64: 64, 2>}, {pipeline_mode = #tpu.pipeline_mode<synchronous>, transform_indices = @transform_11, window_bounds = array<i64: 1, 2>}, {transform_indices = @transform_12, window_bounds = array<i64: 1, 8, 64>}, {transform_indices = @transform_13, window_bounds = array<i64: 1, 8, 8, 2>}]} {
    %c0 = arith.constant 0 : index
    %c0_0 = arith.constant 0 : index
    %c0_1 = arith.constant 0 : index
    %0 = vector.load %arg2[%c0, %c0_0, %c0_1] : memref<1x8x64xbf16, #tpu.memory_space<vmem>>, vector<1x8x64xbf16>
    %1 = vector.shape_cast %0 : vector<1x8x64xbf16> to vector<8x64xbf16>
    %c0_2 = arith.constant 0 : index
    %c0_3 = arith.constant 0 : index
    %c0_4 = arith.constant 0 : index
    %2 = vector.load %arg3[%c0_2, %c0_3, %c0_4] : memref<1x8x64xbf16, #tpu.memory_space<vmem>>, vector<1x8x64xbf16>
    %3 = vector.shape_cast %2 : vector<1x8x64xbf16> to vector<8x64xbf16>
    %c0_5 = arith.constant 0 : index
    %c0_6 = arith.constant 0 : index
    %4 = vector.load %arg5[%c0_5, %c0_6] : memref<64x64xf32, #tpu.memory_space<vmem>>, vector<64x64xf32>
    %5 = arith.truncf %4 : vector<64x64xf32> to vector<64x64xbf16>
    %cst = arith.constant dense<0.000000e+00> : vector<8x64xf32>
    %6 = tpu.matmul %1, %5, %cst {dimension_numbers = #tpu.dot_dimension_numbers<[1], [0], [0], [1], [0, 0, 1, 1], [], []>} : vector<8x64xbf16>, vector<64x64xbf16>, vector<8x64xf32> -> vector<8x64xf32>
    %c0_7 = arith.constant 0 : index
    %c0_8 = arith.constant 0 : index
    %7 = vector.load %arg7[%c0_7, %c0_8] : memref<1x64xf32, #tpu.memory_space<vmem>>, vector<1x64xf32>
    %8 = vector.broadcast %7 : vector<1x64xf32> to vector<8x64xf32>
    %9 = arith.addf %6, %8 : vector<8x64xf32>
    %c0_9 = arith.constant 0 : index
    %c0_10 = arith.constant 0 : index
    %10 = vector.load %arg6[%c0_9, %c0_10] : memref<64x64xf32, #tpu.memory_space<vmem>>, vector<64x64xf32>
    %11 = arith.truncf %10 : vector<64x64xf32> to vector<64x64xbf16>
    %cst_11 = arith.constant dense<0.000000e+00> : vector<8x64xf32>
    %12 = tpu.matmul %3, %11, %cst_11 {dimension_numbers = #tpu.dot_dimension_numbers<[1], [0], [0], [1], [0, 0, 1, 1], [], []>} : vector<8x64xbf16>, vector<64x64xbf16>, vector<8x64xf32> -> vector<8x64xf32>
    %c0_12 = arith.constant 0 : index
    %c0_13 = arith.constant 0 : index
    %c0_14 = arith.constant 0 : index
    %c0_15 = arith.constant 0 : index
    %13 = vector.load %arg4[%c0_12, %c0_13, %c0_14, %c0_15] : memref<1x8x8x3xf32, #tpu.memory_space<vmem>>, vector<1x8x8x3xf32>
    %14 = vector.shape_cast %13 : vector<1x8x8x3xf32> to vector<8x8x3xf32>
    %15 = vector.extract_strided_slice %14 {offsets = [0, 0, 0], sizes = [8, 8, 1], strides = [1, 1, 1]} : vector<8x8x3xf32> to vector<8x8x1xf32>
    %16 = vector.extract_strided_slice %14 {offsets = [0, 0, 1], sizes = [8, 8, 1], strides = [1, 1, 1]} : vector<8x8x3xf32> to vector<8x8x1xf32>
    %17 = vector.extract_strided_slice %14 {offsets = [0, 0, 2], sizes = [8, 8, 1], strides = [1, 1, 1]} : vector<8x8x3xf32> to vector<8x8x1xf32>
    %18 = vector.shape_cast %9 : vector<8x64xf32> to vector<8x1x64xf32>
    %19 = vector.shape_cast %12 : vector<8x64xf32> to vector<1x8x64xf32>
    %20 = vector.broadcast %18 : vector<8x1x64xf32> to vector<8x8x64xf32>
    %21 = vector.broadcast %19 : vector<1x8x64xf32> to vector<8x8x64xf32>
    %22 = arith.addf %20, %21 : vector<8x8x64xf32>
    %c0_16 = arith.constant 0 : index
    %c0_17 = arith.constant 0 : index
    %23 = vector.load %arg8[%c0_16, %c0_17] : memref<1x64xf32, #tpu.memory_space<vmem>>, vector<1x64xf32>
    %24 = vector.shape_cast %23 : vector<1x64xf32> to vector<1x1x64xf32>
    %25 = vector.broadcast %15 : vector<8x8x1xf32> to vector<8x8x64xf32>
    %26 = vector.broadcast %24 : vector<1x1x64xf32> to vector<8x8x64xf32>
    %27 = arith.mulf %25, %26 : vector<8x8x64xf32>
    %28 = arith.addf %22, %27 : vector<8x8x64xf32>
    %c0_18 = arith.constant 0 : index
    %c0_19 = arith.constant 0 : index
    %29 = vector.load %arg9[%c0_18, %c0_19] : memref<1x64xf32, #tpu.memory_space<vmem>>, vector<1x64xf32>
    %30 = vector.shape_cast %29 : vector<1x64xf32> to vector<1x1x64xf32>
    %31 = vector.broadcast %16 : vector<8x8x1xf32> to vector<8x8x64xf32>
    %32 = vector.broadcast %30 : vector<1x1x64xf32> to vector<8x8x64xf32>
    %33 = arith.mulf %31, %32 : vector<8x8x64xf32>
    %34 = arith.addf %28, %33 : vector<8x8x64xf32>
    %cst_20 = arith.constant 0.000000e+00 : f32
    %35 = vector.broadcast %cst_20 : f32 to vector<8x8x64xf32>
    %36 = arith.subf %35, %34 : vector<8x8x64xf32>
    %37 = math.exp %36 : vector<8x8x64xf32>
    %cst_21 = arith.constant 1.000000e+00 : f32
    %38 = vector.broadcast %cst_21 : f32 to vector<8x8x64xf32>
    %39 = arith.addf %38, %37 : vector<8x8x64xf32>
    %40 = tpu.reciprocal %39 {approx = true} : vector<8x8x64xf32> -> vector<8x8x64xf32>
    %41 = arith.mulf %34, %40 : vector<8x8x64xf32>
    %42 = vector.shape_cast %41 : vector<8x8x64xf32> to vector<64x64xf32>
    %43 = arith.truncf %42 : vector<64x64xf32> to vector<64x64xbf16>
    %c0_22 = arith.constant 0 : index
    %c0_23 = arith.constant 0 : index
    %44 = vector.load %arg10[%c0_22, %c0_23] : memref<64x64xf32, #tpu.memory_space<vmem>>, vector<64x64xf32>
    %45 = arith.truncf %44 : vector<64x64xf32> to vector<64x64xbf16>
    %cst_24 = arith.constant dense<0.000000e+00> : vector<64x64xf32>
    %46 = tpu.matmul %43, %45, %cst_24 {dimension_numbers = #tpu.dot_dimension_numbers<[1], [0], [0], [1], [0, 0, 1, 1], [], []>} : vector<64x64xbf16>, vector<64x64xbf16>, vector<64x64xf32> -> vector<64x64xf32>
    %c0_25 = arith.constant 0 : index
    %c0_26 = arith.constant 0 : index
    %47 = vector.load %arg11[%c0_25, %c0_26] : memref<1x64xf32, #tpu.memory_space<vmem>>, vector<1x64xf32>
    %48 = vector.broadcast %47 : vector<1x64xf32> to vector<64x64xf32>
    %49 = arith.addf %46, %48 : vector<64x64xf32>
    %cst_27 = arith.constant 0.000000e+00 : f32
    %50 = vector.broadcast %cst_27 : f32 to vector<64x64xf32>
    %51 = arith.subf %50, %49 : vector<64x64xf32>
    %52 = math.exp %51 : vector<64x64xf32>
    %cst_28 = arith.constant 1.000000e+00 : f32
    %53 = vector.broadcast %cst_28 : f32 to vector<64x64xf32>
    %54 = arith.addf %53, %52 : vector<64x64xf32>
    %55 = tpu.reciprocal %54 {approx = true} : vector<64x64xf32> -> vector<64x64xf32>
    %56 = arith.mulf %49, %55 : vector<64x64xf32>
    %57 = vector.shape_cast %56 : vector<64x64xf32> to vector<8x8x64xf32>
    %58 = vector.broadcast %17 : vector<8x8x1xf32> to vector<8x8x64xf32>
    %59 = arith.mulf %57, %58 : vector<8x8x64xf32>
    %cst_29 = arith.constant dense<0.000000e+00> : vector<8x64xf32>
    %60 = vector.multi_reduction <add>, %59, %cst_29 [1] : vector<8x8x64xf32> to vector<8x64xf32>
    %61 = arith.truncf %60 : vector<8x64xf32> to vector<8x64xbf16>
    %c0_30 = arith.constant 0 : index
    %c0_31 = arith.constant 0 : index
    %c0_32 = arith.constant 0 : index
    %62 = vector.load %arg14[%c0_30, %c0_31, %c0_32] : memref<1x8x64xbf16, #tpu.memory_space<vmem>>, vector<1x8x64xbf16>
    %63 = vector.shape_cast %62 : vector<1x8x64xbf16> to vector<8x64xbf16>
    %64 = vector.shape_cast %61 : vector<8x64xbf16> to vector<1x8x64xbf16>
    tpu.vector_store %arg14[%c0_30, %c0_31, %c0_32], %64 {strides = array<i32>} : memref<1x8x64xbf16, #tpu.memory_space<vmem>>, vector<1x8x64xbf16>,
    %65 = vector.shape_cast %59 : vector<8x8x64xf32> to vector<64x64xf32>
    %66 = arith.truncf %65 : vector<64x64xf32> to vector<64x64xbf16>
    %c0_33 = arith.constant 0 : index
    %c0_34 = arith.constant 0 : index
    %67 = vector.load %arg12[%c0_33, %c0_34] : memref<64x2xf32, #tpu.memory_space<vmem>>, vector<64x2xf32>
    %68 = arith.truncf %67 : vector<64x2xf32> to vector<64x2xbf16>
    %cst_35 = arith.constant dense<0.000000e+00> : vector<64x2xf32>
    %69 = tpu.matmul %66, %68, %cst_35 {dimension_numbers = #tpu.dot_dimension_numbers<[1], [0], [0], [1], [0, 0, 1, 1], [], []>} : vector<64x64xbf16>, vector<64x2xbf16>, vector<64x2xf32> -> vector<64x2xf32>
    %c0_36 = arith.constant 0 : index
    %c0_37 = arith.constant 0 : index
    %70 = vector.load %arg13[%c0_36, %c0_37] : memref<1x2xf32, #tpu.memory_space<vmem>>, vector<1x2xf32>
    %71 = vector.broadcast %70 : vector<1x2xf32> to vector<64x2xf32>
    %72 = arith.addf %69, %71 : vector<64x2xf32>
    %73 = vector.shape_cast %72 : vector<64x2xf32> to vector<8x8x2xf32>
    %74 = vector.broadcast %17 : vector<8x8x1xf32> to vector<8x8x2xf32>
    %75 = arith.mulf %73, %74 : vector<8x8x2xf32>
    %c0_38 = arith.constant 0 : index
    %c0_39 = arith.constant 0 : index
    %c0_40 = arith.constant 0 : index
    %c0_41 = arith.constant 0 : index
    %76 = vector.load %arg15[%c0_38, %c0_39, %c0_40, %c0_41] : memref<1x8x8x2xf32, #tpu.memory_space<vmem>>, vector<1x8x8x2xf32>
    %77 = vector.shape_cast %76 : vector<1x8x8x2xf32> to vector<8x8x2xf32>
    %78 = vector.shape_cast %75 : vector<8x8x2xf32> to vector<1x8x8x2xf32>
    tpu.vector_store %arg15[%c0_38, %c0_39, %c0_40, %c0_41], %78 {strides = array<i32>} : memref<1x8x8x2xf32, #tpu.memory_space<vmem>>, vector<1x8x8x2xf32>,
    return
  }
  func.func @transform_0(%arg0: i32, %arg1: i32) -> (i32, i32, i32) {
    %c0_i32 = arith.constant 0 : i32
    %c0_i32_0 = arith.constant 0 : i32
    return %arg0, %arg1, %c0_i32 : i32, i32, i32
  }
  func.func @transform_1(%arg0: i32, %arg1: i32) -> (i32, i32, i32) {
    %c0_i32 = arith.constant 0 : i32
    %c0_i32_0 = arith.constant 0 : i32
    %c0_i32_1 = arith.constant 0 : i32
    return %arg0, %c0_i32, %c0_i32_0 : i32, i32, i32
  }
  func.func @transform_2(%arg0: i32, %arg1: i32) -> (i32, i32, i32, i32) {
    %c0_i32 = arith.constant 0 : i32
    %c0_i32_0 = arith.constant 0 : i32
    %c0_i32_1 = arith.constant 0 : i32
    return %arg0, %arg1, %c0_i32, %c0_i32_0 : i32, i32, i32, i32
  }
  func.func @transform_3(%arg0: i32, %arg1: i32) -> (i32, i32) {
    %c0_i32 = arith.constant 0 : i32
    %c0_i32_0 = arith.constant 0 : i32
    %c0_i32_1 = arith.constant 0 : i32
    return %c0_i32, %c0_i32_0 : i32, i32
  }
  func.func @transform_4(%arg0: i32, %arg1: i32) -> (i32, i32) {
    %c0_i32 = arith.constant 0 : i32
    %c0_i32_0 = arith.constant 0 : i32
    %c0_i32_1 = arith.constant 0 : i32
    return %c0_i32, %c0_i32_0 : i32, i32
  }
  func.func @transform_5(%arg0: i32, %arg1: i32) -> (i32, i32) {
    %c0_i32 = arith.constant 0 : i32
    %c0_i32_0 = arith.constant 0 : i32
    %c0_i32_1 = arith.constant 0 : i32
    return %c0_i32, %c0_i32_0 : i32, i32
  }
  func.func @transform_6(%arg0: i32, %arg1: i32) -> (i32, i32) {
    %c0_i32 = arith.constant 0 : i32
    %c0_i32_0 = arith.constant 0 : i32
    %c0_i32_1 = arith.constant 0 : i32
    return %c0_i32, %c0_i32_0 : i32, i32
  }
  func.func @transform_7(%arg0: i32, %arg1: i32) -> (i32, i32) {
    %c0_i32 = arith.constant 0 : i32
    %c0_i32_0 = arith.constant 0 : i32
    %c0_i32_1 = arith.constant 0 : i32
    return %c0_i32, %c0_i32_0 : i32, i32
  }
  func.func @transform_8(%arg0: i32, %arg1: i32) -> (i32, i32) {
    %c0_i32 = arith.constant 0 : i32
    %c0_i32_0 = arith.constant 0 : i32
    %c0_i32_1 = arith.constant 0 : i32
    return %c0_i32, %c0_i32_0 : i32, i32
  }
  func.func @transform_9(%arg0: i32, %arg1: i32) -> (i32, i32) {
    %c0_i32 = arith.constant 0 : i32
    %c0_i32_0 = arith.constant 0 : i32
    %c0_i32_1 = arith.constant 0 : i32
    return %c0_i32, %c0_i32_0 : i32, i32
  }
  func.func @transform_10(%arg0: i32, %arg1: i32) -> (i32, i32) {
    %c0_i32 = arith.constant 0 : i32
    %c0_i32_0 = arith.constant 0 : i32
    %c0_i32_1 = arith.constant 0 : i32
    return %c0_i32, %c0_i32_0 : i32, i32
  }
  func.func @transform_11(%arg0: i32, %arg1: i32) -> (i32, i32) {
    %c0_i32 = arith.constant 0 : i32
    %c0_i32_0 = arith.constant 0 : i32
    %c0_i32_1 = arith.constant 0 : i32
    return %c0_i32, %c0_i32_0 : i32, i32
  }
  func.func @transform_12(%arg0: i32, %arg1: i32) -> (i32, i32, i32) {
    %c0_i32 = arith.constant 0 : i32
    %c0_i32_0 = arith.constant 0 : i32
    return %arg0, %arg1, %c0_i32 : i32, i32, i32
  }
  func.func @transform_13(%arg0: i32, %arg1: i32) -> (i32, i32, i32, i32) {
    %c0_i32 = arith.constant 0 : i32
    %c0_i32_0 = arith.constant 0 : i32
    %c0_i32_1 = arith.constant 0 : i32
    return %arg0, %arg1, %c0_i32, %c0_i32_0 : i32, i32, i32, i32
  }
}

module attributes {stable_mosaic.version = 11 : i64} {
  func.func @_linear_kernel(%arg0: i32, %arg1: memref<8x64xbf16, #tpu.memory_space<vmem>>, %arg2: memref<64x4xf32, #tpu.memory_space<vmem>>, %arg3: memref<1x4xf32, #tpu.memory_space<vmem>>, %arg4: memref<8x1xf32, #tpu.memory_space<vmem>>, %arg5: memref<8x4xf32, #tpu.memory_space<vmem>>) attributes {dimension_semantics = [#tpu.dimension_semantics<parallel>], iteration_bounds = array<i64: 2>, scalar_prefetch = 0 : i64, scratch_operands = 0 : i64, tpu.core_type = #tpu.core_type<tc>, window_params = [{transform_indices = @transform_0, window_bounds = array<i64: 8, 64>}, {pipeline_mode = #tpu.pipeline_mode<synchronous>, transform_indices = @transform_1, window_bounds = array<i64: 64, 4>}, {pipeline_mode = #tpu.pipeline_mode<synchronous>, transform_indices = @transform_2, window_bounds = array<i64: 1, 4>}, {transform_indices = @transform_3, window_bounds = array<i64: 8, 1>}, {transform_indices = @transform_4, window_bounds = array<i64: 8, 4>}]} {
    %c0 = arith.constant 0 : index
    %c0_0 = arith.constant 0 : index
    %0 = vector.load %arg1[%c0, %c0_0] : memref<8x64xbf16, #tpu.memory_space<vmem>>, vector<8x64xbf16>
    %c0_1 = arith.constant 0 : index
    %c0_2 = arith.constant 0 : index
    %1 = vector.load %arg2[%c0_1, %c0_2] : memref<64x4xf32, #tpu.memory_space<vmem>>, vector<64x4xf32>
    %2 = arith.truncf %1 : vector<64x4xf32> to vector<64x4xbf16>
    %cst = arith.constant dense<0.000000e+00> : vector<8x4xf32>
    %3 = tpu.matmul %0, %2, %cst {dimension_numbers = #tpu.dot_dimension_numbers<[1], [0], [0], [1], [0, 0, 1, 1], [], []>} : vector<8x64xbf16>, vector<64x4xbf16>, vector<8x4xf32> -> vector<8x4xf32>
    %c0_3 = arith.constant 0 : index
    %c0_4 = arith.constant 0 : index
    %4 = vector.load %arg3[%c0_3, %c0_4] : memref<1x4xf32, #tpu.memory_space<vmem>>, vector<1x4xf32>
    %5 = vector.broadcast %4 : vector<1x4xf32> to vector<8x4xf32>
    %6 = arith.addf %3, %5 : vector<8x4xf32>
    %c0_5 = arith.constant 0 : index
    %c0_6 = arith.constant 0 : index
    %7 = vector.load %arg4[%c0_5, %c0_6] : memref<8x1xf32, #tpu.memory_space<vmem>>, vector<8x1xf32>
    %8 = vector.broadcast %7 : vector<8x1xf32> to vector<8x4xf32>
    %9 = arith.mulf %6, %8 : vector<8x4xf32>
    %c0_7 = arith.constant 0 : index
    %c0_8 = arith.constant 0 : index
    %10 = vector.load %arg5[%c0_7, %c0_8] : memref<8x4xf32, #tpu.memory_space<vmem>>, vector<8x4xf32>
    tpu.vector_store %arg5[%c0_7, %c0_8], %9 {strides = array<i32>} : memref<8x4xf32, #tpu.memory_space<vmem>>, vector<8x4xf32>,
    return
  }
  func.func @transform_0(%arg0: i32) -> (i32, i32) {
    %c0_i32 = arith.constant 0 : i32
    %c0_i32_0 = arith.constant 0 : i32
    return %arg0, %c0_i32 : i32, i32
  }
  func.func @transform_1(%arg0: i32) -> (i32, i32) {
    %c0_i32 = arith.constant 0 : i32
    %c0_i32_0 = arith.constant 0 : i32
    %c0_i32_1 = arith.constant 0 : i32
    return %c0_i32, %c0_i32_0 : i32, i32
  }
  func.func @transform_2(%arg0: i32) -> (i32, i32) {
    %c0_i32 = arith.constant 0 : i32
    %c0_i32_0 = arith.constant 0 : i32
    %c0_i32_1 = arith.constant 0 : i32
    return %c0_i32, %c0_i32_0 : i32, i32
  }
  func.func @transform_3(%arg0: i32) -> (i32, i32) {
    %c0_i32 = arith.constant 0 : i32
    %c0_i32_0 = arith.constant 0 : i32
    return %arg0, %c0_i32 : i32, i32
  }
  func.func @transform_4(%arg0: i32) -> (i32, i32) {
    %c0_i32 = arith.constant 0 : i32
    %c0_i32_0 = arith.constant 0 : i32
    return %arg0, %c0_i32 : i32, i32
  }
}

module attributes {stable_mosaic.version = 11 : i64} {
  func.func @_dequant_kernel(%arg0: i32, %arg1: memref<2x16xf32, #tpu.memory_space<vmem>>, %arg2: memref<2x16xf32, #tpu.memory_space<vmem>>, %arg3: memref<2x16xf32, #tpu.memory_space<vmem>>, %arg4: memref<2x16xf32, #tpu.memory_space<vmem>>, %arg5: memref<2x16xf32, #tpu.memory_space<vmem>>, %arg6: memref<2x16xf32, #tpu.memory_space<vmem>>, %arg7: memref<2x1xf32, #tpu.memory_space<vmem>>) attributes {dimension_semantics = [#tpu.dimension_semantics<parallel>], iteration_bounds = array<i64: 1>, scalar_prefetch = 0 : i64, scratch_operands = 0 : i64, tpu.core_type = #tpu.core_type<tc>, window_params = [{transform_indices = @transform_0, window_bounds = array<i64: 2, 16>}, {transform_indices = @transform_1, window_bounds = array<i64: 2, 16>}, {transform_indices = @transform_2, window_bounds = array<i64: 2, 16>}, {transform_indices = @transform_3, window_bounds = array<i64: 2, 16>}, {transform_indices = @transform_4, window_bounds = array<i64: 2, 16>}, {transform_indices = @transform_5, window_bounds = array<i64: 2, 16>}, {transform_indices = @transform_6, window_bounds = array<i64: 2, 1>}]} {
    %c0 = arith.constant 0 : index
    %c0_0 = arith.constant 0 : index
    %0 = vector.load %arg4[%c0, %c0_0] : memref<2x16xf32, #tpu.memory_space<vmem>>, vector<2x16xf32>
    %c0_1 = arith.constant 0 : index
    %c0_2 = arith.constant 0 : index
    %1 = vector.load %arg3[%c0_1, %c0_2] : memref<2x16xf32, #tpu.memory_space<vmem>>, vector<2x16xf32>
    %2 = arith.mulf %1, %0 : vector<2x16xf32>
    %c0_3 = arith.constant 0 : index
    %c0_4 = arith.constant 0 : index
    %3 = vector.load %arg2[%c0_3, %c0_4] : memref<2x16xf32, #tpu.memory_space<vmem>>, vector<2x16xf32>
    %4 = arith.mulf %3, %0 : vector<2x16xf32>
    %c0_5 = arith.constant 0 : index
    %c0_6 = arith.constant 0 : index
    %5 = vector.load %arg1[%c0_5, %c0_6] : memref<2x16xf32, #tpu.memory_space<vmem>>, vector<2x16xf32>
    %6 = math.exp %4 : vector<2x16xf32>
    %7 = arith.mulf %2, %6 : vector<2x16xf32>
    %8 = arith.addf %5, %7 : vector<2x16xf32>
    %9 = math.absf %8 : vector<2x16xf32>
    %cst = arith.constant 0.000000e+00 : f32
    %10 = vector.broadcast %cst : f32 to vector<2x16xf32>
    %11 = arith.subf %10, %9 : vector<2x16xf32>
    %12 = math.exp %11 : vector<2x16xf32>
    %cst_7 = arith.constant 1.000000e+00 : f32
    %13 = vector.broadcast %cst_7 : f32 to vector<2x16xf32>
    %14 = arith.addf %13, %12 : vector<2x16xf32>
    %cst_8 = arith.constant 1.000000e+00 : f32
    %15 = vector.broadcast %cst_8 : f32 to vector<2x16xf32>
    %16 = arith.divf %15, %14 : vector<2x16xf32>
    %cst_9 = arith.constant 0.000000e+00 : f32
    %17 = vector.broadcast %cst_9 : f32 to vector<2x16xf32>
    %18 = arith.cmpf oge, %8, %17 : vector<2x16xf32>
    %19 = arith.mulf %12, %16 : vector<2x16xf32>
    %20 = arith.select %18, %16, %19 : vector<2x16xi1>, vector<2x16xf32>
    %cst_10 = arith.constant -5.000000e-01 : f32
    %21 = vector.broadcast %cst_10 : f32 to vector<2x16xf32>
    %22 = arith.mulf %21, %2 : vector<2x16xf32>
    %23 = arith.mulf %22, %2 : vector<2x16xf32>
    %cst_11 = arith.constant 0.918938517 : f32
    %24 = vector.broadcast %cst_11 : f32 to vector<2x16xf32>
    %25 = arith.subf %23, %24 : vector<2x16xf32>
    %26 = arith.mulf %25, %0 : vector<2x16xf32>
    %cst_12 = arith.constant dense<0.000000e+00> : vector<2xf32>
    %27 = vector.multi_reduction <add>, %26, %cst_12 [1] : vector<2x16xf32> to vector<2xf32>
    %28 = vector.shape_cast %27 : vector<2xf32> to vector<2x1xf32>
    %cst_13 = arith.constant dense<0.000000e+00> : vector<2xf32>
    %29 = vector.multi_reduction <add>, %4, %cst_13 [1] : vector<2x16xf32> to vector<2xf32>
    %30 = vector.shape_cast %29 : vector<2xf32> to vector<2x1xf32>
    %31 = math.log1p %12 : vector<2x16xf32>
    %cst_14 = arith.constant 2.000000e+00 : f32
    %32 = vector.broadcast %cst_14 : f32 to vector<2x16xf32>
    %33 = arith.mulf %32, %31 : vector<2x16xf32>
    %34 = arith.addf %9, %33 : vector<2x16xf32>
    %cst_15 = arith.constant 0.000000e+00 : f32
    %35 = vector.broadcast %cst_15 : f32 to vector<2x16xf32>
    %36 = arith.subf %35, %34 : vector<2x16xf32>
    %37 = arith.mulf %0, %36 : vector<2x16xf32>
    %cst_16 = arith.constant dense<0.000000e+00> : vector<2xf32>
    %38 = vector.multi_reduction <add>, %37, %cst_16 [1] : vector<2x16xf32> to vector<2xf32>
    %39 = vector.shape_cast %38 : vector<2xf32> to vector<2x1xf32>
    %c0_17 = arith.constant 0 : index
    %c0_18 = arith.constant 0 : index
    %40 = vector.load %arg5[%c0_17, %c0_18] : memref<2x16xf32, #tpu.memory_space<vmem>>, vector<2x16xf32>
    %41 = arith.addf %40, %20 : vector<2x16xf32>
    %42 = arith.mulf %41, %0 : vector<2x16xf32>
    %c0_19 = arith.constant 0 : index
    %c0_20 = arith.constant 0 : index
    %43 = vector.load %arg6[%c0_19, %c0_20] : memref<2x16xf32, #tpu.memory_space<vmem>>, vector<2x16xf32>
    tpu.vector_store %arg6[%c0_19, %c0_20], %42 {strides = array<i32>} : memref<2x16xf32, #tpu.memory_space<vmem>>, vector<2x16xf32>,
    %44 = arith.subf %28, %30 : vector<2x1xf32>
    %45 = arith.subf %44, %39 : vector<2x1xf32>
    %c0_21 = arith.constant 0 : index
    %c0_22 = arith.constant 0 : index
    %46 = vector.load %arg7[%c0_21, %c0_22] : memref<2x1xf32, #tpu.memory_space<vmem>>, vector<2x1xf32>
    tpu.vector_store %arg7[%c0_21, %c0_22], %45 {strides = array<i32>} : memref<2x1xf32, #tpu.memory_space<vmem>>, vector<2x1xf32>,
    return
  }
  func.func @transform_0(%arg0: i32) -> (i32, i32) {
    %c0_i32 = arith.constant 0 : i32
    %c0_i32_0 = arith.constant 0 : i32
    return %arg0, %c0_i32 : i32, i32
  }
  func.func @transform_1(%arg0: i32) -> (i32, i32) {
    %c0_i32 = arith.constant 0 : i32
    %c0_i32_0 = arith.constant 0 : i32
    return %arg0, %c0_i32 : i32, i32
  }
  func.func @transform_2(%arg0: i32) -> (i32, i32) {
    %c0_i32 = arith.constant 0 : i32
    %c0_i32_0 = arith.constant 0 : i32
    return %arg0, %c0_i32 : i32, i32
  }
  func.func @transform_3(%arg0: i32) -> (i32, i32) {
    %c0_i32 = arith.constant 0 : i32
    %c0_i32_0 = arith.constant 0 : i32
    return %arg0, %c0_i32 : i32, i32
  }
  func.func @transform_4(%arg0: i32) -> (i32, i32) {
    %c0_i32 = arith.constant 0 : i32
    %c0_i32_0 = arith.constant 0 : i32
    return %arg0, %c0_i32 : i32, i32
  }
  func.func @transform_5(%arg0: i32) -> (i32, i32) {
    %c0_i32 = arith.constant 0 : i32
    %c0_i32_0 = arith.constant 0 : i32
    return %arg0, %c0_i32 : i32, i32
  }
  func.func @transform_6(%arg0: i32) -> (i32, i32) {
    %c0_i32 = arith.constant 0 : i32
    %c0_i32_0 = arith.constant 0 : i32
    return %arg0, %c0_i32 : i32, i32
  }
}

module attributes {stable_mosaic.version = 11 : i64} {
  func.func @_dequant_kernel(%arg0: i32, %arg1: memref<2x64xf32, #tpu.memory_space<vmem>>, %arg2: memref<2x64xf32, #tpu.memory_space<vmem>>, %arg3: memref<2x64xf32, #tpu.memory_space<vmem>>, %arg4: memref<2x64xf32, #tpu.memory_space<vmem>>, %arg5: memref<2x64xf32, #tpu.memory_space<vmem>>, %arg6: memref<2x64xf32, #tpu.memory_space<vmem>>, %arg7: memref<2x1xf32, #tpu.memory_space<vmem>>) attributes {dimension_semantics = [#tpu.dimension_semantics<parallel>], iteration_bounds = array<i64: 1>, scalar_prefetch = 0 : i64, scratch_operands = 0 : i64, tpu.core_type = #tpu.core_type<tc>, window_params = [{transform_indices = @transform_0, window_bounds = array<i64: 2, 64>}, {transform_indices = @transform_1, window_bounds = array<i64: 2, 64>}, {transform_indices = @transform_2, window_bounds = array<i64: 2, 64>}, {transform_indices = @transform_3, window_bounds = array<i64: 2, 64>}, {transform_indices = @transform_4, window_bounds = array<i64: 2, 64>}, {transform_indices = @transform_5, window_bounds = array<i64: 2, 64>}, {transform_indices = @transform_6, window_bounds = array<i64: 2, 1>}]} {
    %c0 = arith.constant 0 : index
    %c0_0 = arith.constant 0 : index
    %0 = vector.load %arg4[%c0, %c0_0] : memref<2x64xf32, #tpu.memory_space<vmem>>, vector<2x64xf32>
    %c0_1 = arith.constant 0 : index
    %c0_2 = arith.constant 0 : index
    %1 = vector.load %arg3[%c0_1, %c0_2] : memref<2x64xf32, #tpu.memory_space<vmem>>, vector<2x64xf32>
    %2 = arith.mulf %1, %0 : vector<2x64xf32>
    %c0_3 = arith.constant 0 : index
    %c0_4 = arith.constant 0 : index
    %3 = vector.load %arg2[%c0_3, %c0_4] : memref<2x64xf32, #tpu.memory_space<vmem>>, vector<2x64xf32>
    %4 = arith.mulf %3, %0 : vector<2x64xf32>
    %c0_5 = arith.constant 0 : index
    %c0_6 = arith.constant 0 : index
    %5 = vector.load %arg1[%c0_5, %c0_6] : memref<2x64xf32, #tpu.memory_space<vmem>>, vector<2x64xf32>
    %6 = math.exp %4 : vector<2x64xf32>
    %7 = arith.mulf %2, %6 : vector<2x64xf32>
    %8 = arith.addf %5, %7 : vector<2x64xf32>
    %9 = math.absf %8 : vector<2x64xf32>
    %cst = arith.constant 0.000000e+00 : f32
    %10 = vector.broadcast %cst : f32 to vector<2x64xf32>
    %11 = arith.subf %10, %9 : vector<2x64xf32>
    %12 = math.exp %11 : vector<2x64xf32>
    %cst_7 = arith.constant 1.000000e+00 : f32
    %13 = vector.broadcast %cst_7 : f32 to vector<2x64xf32>
    %14 = arith.addf %13, %12 : vector<2x64xf32>
    %cst_8 = arith.constant 1.000000e+00 : f32
    %15 = vector.broadcast %cst_8 : f32 to vector<2x64xf32>
    %16 = arith.divf %15, %14 : vector<2x64xf32>
    %cst_9 = arith.constant 0.000000e+00 : f32
    %17 = vector.broadcast %cst_9 : f32 to vector<2x64xf32>
    %18 = arith.cmpf oge, %8, %17 : vector<2x64xf32>
    %19 = arith.mulf %12, %16 : vector<2x64xf32>
    %20 = arith.select %18, %16, %19 : vector<2x64xi1>, vector<2x64xf32>
    %cst_10 = arith.constant -5.000000e-01 : f32
    %21 = vector.broadcast %cst_10 : f32 to vector<2x64xf32>
    %22 = arith.mulf %21, %2 : vector<2x64xf32>
    %23 = arith.mulf %22, %2 : vector<2x64xf32>
    %cst_11 = arith.constant 0.918938517 : f32
    %24 = vector.broadcast %cst_11 : f32 to vector<2x64xf32>
    %25 = arith.subf %23, %24 : vector<2x64xf32>
    %26 = arith.mulf %25, %0 : vector<2x64xf32>
    %cst_12 = arith.constant dense<0.000000e+00> : vector<2xf32>
    %27 = vector.multi_reduction <add>, %26, %cst_12 [1] : vector<2x64xf32> to vector<2xf32>
    %28 = vector.shape_cast %27 : vector<2xf32> to vector<2x1xf32>
    %cst_13 = arith.constant dense<0.000000e+00> : vector<2xf32>
    %29 = vector.multi_reduction <add>, %4, %cst_13 [1] : vector<2x64xf32> to vector<2xf32>
    %30 = vector.shape_cast %29 : vector<2xf32> to vector<2x1xf32>
    %31 = math.log1p %12 : vector<2x64xf32>
    %cst_14 = arith.constant 2.000000e+00 : f32
    %32 = vector.broadcast %cst_14 : f32 to vector<2x64xf32>
    %33 = arith.mulf %32, %31 : vector<2x64xf32>
    %34 = arith.addf %9, %33 : vector<2x64xf32>
    %cst_15 = arith.constant 0.000000e+00 : f32
    %35 = vector.broadcast %cst_15 : f32 to vector<2x64xf32>
    %36 = arith.subf %35, %34 : vector<2x64xf32>
    %37 = arith.mulf %0, %36 : vector<2x64xf32>
    %cst_16 = arith.constant dense<0.000000e+00> : vector<2xf32>
    %38 = vector.multi_reduction <add>, %37, %cst_16 [1] : vector<2x64xf32> to vector<2xf32>
    %39 = vector.shape_cast %38 : vector<2xf32> to vector<2x1xf32>
    %c0_17 = arith.constant 0 : index
    %c0_18 = arith.constant 0 : index
    %40 = vector.load %arg5[%c0_17, %c0_18] : memref<2x64xf32, #tpu.memory_space<vmem>>, vector<2x64xf32>
    %41 = arith.addf %40, %20 : vector<2x64xf32>
    %42 = arith.mulf %41, %0 : vector<2x64xf32>
    %c0_19 = arith.constant 0 : index
    %c0_20 = arith.constant 0 : index
    %43 = vector.load %arg6[%c0_19, %c0_20] : memref<2x64xf32, #tpu.memory_space<vmem>>, vector<2x64xf32>
    tpu.vector_store %arg6[%c0_19, %c0_20], %42 {strides = array<i32>} : memref<2x64xf32, #tpu.memory_space<vmem>>, vector<2x64xf32>,
    %44 = arith.subf %28, %30 : vector<2x1xf32>
    %45 = arith.subf %44, %39 : vector<2x1xf32>
    %c0_21 = arith.constant 0 : index
    %c0_22 = arith.constant 0 : index
    %46 = vector.load %arg7[%c0_21, %c0_22] : memref<2x1xf32, #tpu.memory_space<vmem>>, vector<2x1xf32>
    tpu.vector_store %arg7[%c0_21, %c0_22], %45 {strides = array<i32>} : memref<2x1xf32, #tpu.memory_space<vmem>>, vector<2x1xf32>,
    return
  }
  func.func @transform_0(%arg0: i32) -> (i32, i32) {
    %c0_i32 = arith.constant 0 : i32
    %c0_i32_0 = arith.constant 0 : i32
    return %arg0, %c0_i32 : i32, i32
  }
  func.func @transform_1(%arg0: i32) -> (i32, i32) {
    %c0_i32 = arith.constant 0 : i32
    %c0_i32_0 = arith.constant 0 : i32
    return %arg0, %c0_i32 : i32, i32
  }
  func.func @transform_2(%arg0: i32) -> (i32, i32) {
    %c0_i32 = arith.constant 0 : i32
    %c0_i32_0 = arith.constant 0 : i32
    return %arg0, %c0_i32 : i32, i32
  }
  func.func @transform_3(%arg0: i32) -> (i32, i32) {
    %c0_i32 = arith.constant 0 : i32
    %c0_i32_0 = arith.constant 0 : i32
    return %arg0, %c0_i32 : i32, i32
  }
  func.func @transform_4(%arg0: i32) -> (i32, i32) {
    %c0_i32 = arith.constant 0 : i32
    %c0_i32_0 = arith.constant 0 : i32
    return %arg0, %c0_i32 : i32, i32
  }
  func.func @transform_5(%arg0: i32) -> (i32, i32) {
    %c0_i32 = arith.constant 0 : i32
    %c0_i32_0 = arith.constant 0 : i32
    return %arg0, %c0_i32 : i32, i32
  }
  func.func @transform_6(%arg0: i32) -> (i32, i32) {
    %c0_i32 = arith.constant 0 : i32
    %c0_i32_0 = arith.constant 0 : i32
    return %arg0, %c0_i32 : i32, i32
  }
}

</mosaic_0001>

<llo_original>
// kernel: variational_dequantizer_forward.14
$region0: #{variational_dequantizer_forward.14}
  #allocation0 [shape = 'u32[]', space=smem, size = 0x4, offset = 0x4, fixed_abs, tag = 'smem constant byte address 0x4 - core index']
  #allocation1 [shape = 'u32[72,128]{1,0:T(1,128)}', space=vmem, size = 0x9000, scoped, tag = 'internal scratch']
  %s0 = inlined_call_operand.vmem [shape: f32[16,4], index: 0, kind: input, shape index: {}]
  %s1 = inlined_call_operand.vmem [shape: f32[4,64], index: 1, kind: input, shape index: {}]
  %s2 = inlined_call_operand.vmem [shape: f32[1,64], index: 2, kind: input, shape index: {}]
  %s3 = inlined_call_operand.vmem [shape: bf16[16,64], index: 3, kind: output, shape index: {}]
  %s4 = sld [smem:[#allocation0]]
  $region45: #{variational_dequantizer_forward.14} parent=0
    _
  %s6 = ssub.s32 1, %s4
  %s7 = scalar_select 0, %s6, %s4
  loop: start=0, step=1, limit=4
  $region2: #{variational_dequantizer_forward.14} parent=0 // loop_pre_header
    _
  $region3: #{variational_dequantizer_forward.14} parent=0 // loop_header
    %s9 = sphi 0, %s13
    %p10 = scmp.ge.s32.totalorder %s9, 4
    %s19 = sphi 0, %s21
    %s22 = sphi 0, %s19
    %s23 = sphi 0, %s22
    %s39 = sphi 0, %s23
    %s43 = sphi 0, %s43
    %s45 = sphi 0, %s43
    %s46 = sphi 0, %s45
    %s60 = sphi 0, %s46
    %s64 = sphi 0, %s64
    %s66 = sphi 0, %s64
    %s67 = sphi 0, %s66
    %s81 = sphi 0, %s67
    %s87 = sphi 0, %s89
    %s90 = sphi 0, %s87
    %s91 = sphi 0, %s90
    %s107 = sphi 0, %s91
  $region4: #{variational_dequantizer_forward.14} parent=0 // loop_header_branch
    %12 = sbr.rel (%p10) target = $region8
  $region5: #{variational_dequantizer_forward.14} parent=0 // loop_body
    %s14 = ssub.s32 %s9, 1
    %s15 = ssub.s32 %s9, 2
    %s16 = sadd.s32 %s9, 1
    %s17 = ssub.s32 %s9, %s16
    %p18 = scmp.eq.s32.totalorder %s17, 0
    %s20 = sadd.s32 %s19, 1
    %s21 = scalar_select %p18, %s19, %s20
    %p24 = pneg %p18
    %p25 = scmp.eq.s32.totalorder %s9, 1
    %p26 = por %p24, %p25
    %p27 = scmp.ne.s32.totalorder %s19, %s22
    %p28 = scmp.eq.s32.totalorder %s9, 0
    %p29 = por %p27, %p28
    %p30 = scmp.ne.s32.totalorder %s19, %s22
    %p31 = scmp.eq.s32.totalorder %s14, 1
    %p32 = por %p30, %p31
    %p33 = scmp.ne.s32.totalorder %s22, %s23
    %p34 = scmp.eq.s32.totalorder %s14, 0
    %p35 = por %p33, %p34
    %p36 = scmp.ne.s32.totalorder %s22, %s23
    %p37 = scmp.eq.s32.totalorder %s15, 1
    %p38 = por %p36, %p37
    %p40 = scmp.ne.s32.totalorder %s23, %s39
    %p41 = scmp.eq.s32.totalorder %s15, 0
    %p42 = por %p40, %p41
    %s44 = sadd.s32 %s43, 1
    %p47 = scmp.eq.s32.totalorder %s9, 1
    %p48 = scmp.ne.s32.totalorder %s43, %s45
    %p49 = scmp.eq.s32.totalorder %s9, 0
    %p50 = por %p48, %p49
    %p51 = scmp.ne.s32.totalorder %s43, %s45
    %p52 = scmp.eq.s32.totalorder %s14, 1
    %p53 = por %p51, %p52
    %p54 = scmp.ne.s32.totalorder %s45, %s46
    %p55 = scmp.eq.s32.totalorder %s14, 0
    %p56 = por %p54, %p55
    %p57 = scmp.ne.s32.totalorder %s45, %s46
    %p58 = scmp.eq.s32.totalorder %s15, 1
    %p59 = por %p57, %p58
    %p61 = scmp.ne.s32.totalorder %s46, %s60
    %p62 = scmp.eq.s32.totalorder %s15, 0
    %p63 = por %p61, %p62
    %s65 = sadd.s32 %s64, 1
    %p68 = scmp.eq.s32.totalorder %s9, 1
    %p69 = scmp.ne.s32.totalorder %s64, %s66
    %p70 = scmp.eq.s32.totalorder %s9, 0
    %p71 = por %p69, %p70
    %p72 = scmp.ne.s32.totalorder %s64, %s66
    %p73 = scmp.eq.s32.totalorder %s14, 1
    %p74 = por %p72, %p73
    %p75 = scmp.ne.s32.totalorder %s66, %s67
    %p76 = scmp.eq.s32.totalorder %s14, 0
    %p77 = por %p75, %p76
    %p78 = scmp.ne.s32.totalorder %s66, %s67
    %p79 = scmp.eq.s32.totalorder %s15, 1
    %p80 = por %p78, %p79
    %p82 = scmp.ne.s32.totalorder %s67, %s81
    %p83 = scmp.eq.s32.totalorder %s15, 0
    %p84 = por %p82, %p83
    %s85 = ssub.s32 %s9, %s16
    %p86 = scmp.eq.s32.totalorder %s85, 0
    %s88 = sadd.s32 %s87, 1
    %s89 = scalar_select %p86, %s87, %s88
    %p92 = pneg %p86
    %p93 = scmp.eq.s32.totalorder %s9, 1
    %p94 = por %p92, %p93
    %p95 = scmp.ne.s32.totalorder %s87, %s90
    %p96 = scmp.eq.s32.totalorder %s9, 0
    %p97 = por %p95, %p96
    %p98 = scmp.ne.s32.totalorder %s87, %s90
    %p99 = scmp.eq.s32.totalorder %s14, 1
    %p100 = por %p98, %p99
    %p101 = scmp.ne.s32.totalorder %s90, %s91
    %p102 = scmp.eq.s32.totalorder %s14, 0
    %p103 = por %p101, %p102
    %p104 = scmp.ne.s32.totalorder %s90, %s91
    %p105 = scmp.eq.s32.totalorder %s15, 1
    %p106 = por %p104, %p105
    %p108 = scmp.ne.s32.totalorder %s91, %s107
    %p109 = scmp.eq.s32.totalorder %s15, 0
    %p110 = por %p108, %p109
    %p111 = scmp.le.s32.totalorder 1, %s9
    %p112 = scmp.lt.s32.totalorder %s9, 3
    %p113 = pnand %p111, %p112
    %p114 = pneg %p113
    // Predicated region
    $region9: #{variational_dequantizer_forward.14} parent=5 // pred_check
      _
    $region10: #{variational_dequantizer_forward.14} parent=5 // pred_check_branch
      %116 = sbr.rel (%p113) target = $region12
    $region11: #{variational_dequantizer_forward.14} parent=5 // pred_region
      %s117 = ssub.s32 %s9, 1
      // Predicated region
      $region13: #{variational_dequantizer_forward.14} parent=11 // pred_check
        %p118 = pneg %p56
      $region14: #{variational_dequantizer_forward.14} parent=11 // pred_check_branch
        %120 = sbr.rel (%p118) target = $region16
      $region15: #{variational_dequantizer_forward.14} parent=11 // pred_region
        _
      $region16: #{variational_dequantizer_forward.14} parent=11 // pred_fallthru
        _
      // Predicated region
      $region17: #{variational_dequantizer_forward.14} parent=11 // pred_check
        %p121 = pneg %p77
      $region18: #{variational_dequantizer_forward.14} parent=11 // pred_check_branch
        %123 = sbr.rel (%p121) target = $region20
      $region19: #{variational_dequantizer_forward.14} parent=11 // pred_region
        _
      $region20: #{variational_dequantizer_forward.14} parent=11 // pred_fallthru
        _
    $region12: #{variational_dequantizer_forward.14} parent=5 // pred_fallthru
      _
    %p124 = scmp.lt.s32.totalorder %s9, 2
    // Predicated region
    $region21: #{variational_dequantizer_forward.14} parent=5 // pred_check
      %p125 = pneg %p124
    $region22: #{variational_dequantizer_forward.14} parent=5 // pred_check_branch
      %127 = sbr.rel (%p125) target = $region24
    $region23: #{variational_dequantizer_forward.14} parent=5 // pred_region
      // Predicated region
      $region25: #{variational_dequantizer_forward.14} parent=23 // pred_check
        %p128 = pneg %p29
      $region26: #{variational_dequantizer_forward.14} parent=23 // pred_check_branch
        %130 = sbr.rel (%p128) target = $region28
      $region27: #{variational_dequantizer_forward.14} parent=23 // pred_region
        %p131 = scmp.lt.s32.totalorder %s9, 1
        %s132 = scalar_select %p131, %s9, 1
        %s133 = smul.addr %s132, 8
        %s134 = scalar_lea.vmem %s0, %s133
      $region28: #{variational_dequantizer_forward.14} parent=23 // pred_fallthru
        _
    $region24: #{variational_dequantizer_forward.14} parent=5 // pred_fallthru
      _
    %p135 = scmp.le.s32.totalorder 1, %s9
    %p136 = scmp.lt.s32.totalorder %s9, 3
    %p137 = pnand %p135, %p136
    %p138 = pneg %p137
    // Predicated region
    $region29: #{variational_dequantizer_forward.14} parent=5 // pred_check
      _
    $region30: #{variational_dequantizer_forward.14} parent=5 // pred_check_branch
      %140 = sbr.rel (%p137) target = $region32
    $region31: #{variational_dequantizer_forward.14} parent=5 // pred_region
      %s141 = ssub.s32 %s9, 1
      %p142 = scmp.lt.s32.totalorder %s14, 1
      %s143 = scalar_select %p142, %s14, 1
      %s144 = smul.addr %s143, 8
      %s145 = scalar_lea.vmem %s0, %s144
      %p146 = pneg %p35
      %p147 = pneg %p32
      %p148 = pneg %p56
      %p149 = pneg %p53
      %p150 = pneg %p77
      %p151 = pneg %p74
      %p152 = pneg %p103
      %p153 = pneg %p100
      %p154 = scmp.lt.s32.totalorder %s14, 1
      %s155 = scalar_select %p154, %s14, 1
      %s156 = smul.addr %s155, 4
      %s157 = scalar_lea.vmem %s3, %s156
      %p158 = scmp.lt.s32.totalorder %s14, 1
      %s159 = scalar_select %p158, %s14, 1
      %s160 = smul.addr %s159, 8
      %s161 = scalar_lea.vmem %s0, %s160
      %p162 = scmp.lt.s32.totalorder %s14, 1
      %s163 = scalar_select %p162, %s14, 1
      %s164 = smul.addr %s163, 4
      %s165 = scalar_lea.vmem %s3, %s164
      %v167 = vld [vmem:[%s161] sm:$0xff]
      %v168 = vpack.c.bf16 %v167, %v167
      %v169 = vld [vmem:[%s1] sm:$0xf]
      %v170 = vpack.c.bf16 %v169, %v169
      %v171 = vld [vmem:[%s2] sm:$0x1]
      %v173 = vperm.slane %v171, 0
      %vm175 = vcmask 31744
      %v177 = vsel %vm175, %v168, 0
      %vm179 = vcmask 1041408
      %v181 = vsel %vm179, %v170, 0
      %183 = vmatpush.bf16.msra.mxu0 0
      %184 = vmatpush.bf16.msra.mxu0 0
      %185 = vmatpush.bf16.msra.mxu0 0
      %186 = vmatpush.bf16.msra.mxu0 0
      %187 = vmatpush.bf16.msra.mxu0 0
      %188 = vmatpush.bf16.msra.mxu0 0
      %189 = vmatpush.bf16.msra.mxu0 0
      %190 = vmatpush.bf16.msra.mxu0 %v181
      %191 = vmatmul.bf16.gmra.mxu0 %v177
      %v192 = vpop.f32.mrf.mxu0
      %v193 = vadd.f32 %v173, %v192
      %v194 = vpop.f32.mrf.mxu0
      %195 = vdwg.mxu0
      %v196 = vpack.c.bf16 %v193, %v193
      %vm197 = vcmask 519168
      %198 = vst.msk [vmem:[%s165] sm:$0xf] %vm197, %v196
      %p199 = scmp.lt.s32.totalorder %s14, 1
      %s200 = scalar_select %p199, %s14, 1
      %s201 = smul.addr %s200, 4
      %s202 = scalar_lea.vmem %s3, %s201
      // Predicated region
      $region33: #{variational_dequantizer_forward.14} parent=31 // pred_check
        %p203 = pneg %p100
      $region34: #{variational_dequantizer_forward.14} parent=31 // pred_check_branch
        %205 = sbr.rel (%p203) target = $region36
      $region35: #{variational_dequantizer_forward.14} parent=31 // pred_region
        _
      $region36: #{variational_dequantizer_forward.14} parent=31 // pred_fallthru
        _
    $region32: #{variational_dequantizer_forward.14} parent=5 // pred_fallthru
      _
    %p206 = scmp.le.s32.totalorder 2, %s9
    // Predicated region
    $region37: #{variational_dequantizer_forward.14} parent=5 // pred_check
      %p207 = pneg %p206
    $region38: #{variational_dequantizer_forward.14} parent=5 // pred_check_branch
      %209 = sbr.rel (%p207) target = $region40
    $region39: #{variational_dequantizer_forward.14} parent=5 // pred_region
      %s210 = ssub.s32 %s9, 2
      // Predicated region
      $region41: #{variational_dequantizer_forward.14} parent=39 // pred_check
        %p211 = pneg %p106
      $region42: #{variational_dequantizer_forward.14} parent=39 // pred_check_branch
        %213 = sbr.rel (%p211) target = $region44
      $region43: #{variational_dequantizer_forward.14} parent=39 // pred_region
        %p214 = scmp.lt.s32.totalorder %s15, 1
        %s215 = scalar_select %p214, %s15, 1
        %s216 = smul.addr %s215, 4
        %s217 = scalar_lea.vmem %s3, %s216
      $region44: #{variational_dequantizer_forward.14} parent=39 // pred_fallthru
        _
    $region40: #{variational_dequantizer_forward.14} parent=5 // pred_fallthru
      _
  $region6: #{variational_dequantizer_forward.14} parent=0 // loop_footer
    %s13 = sadd.s32 1, %s9
  $region7: #{variational_dequantizer_forward.14} parent=0 // loop_footer_branch
    %8 = sbr.rel target = $region3
  $region8: #{variational_dequantizer_forward.14} parent=0 // loop_exit
    _

// kernel: variational_dequantizer_forward.16
$region0: #{variational_dequantizer_forward.16}
  #allocation0 [shape = 'u32[]', space=smem, size = 0x4, offset = 0x4, fixed_abs, tag = 'smem constant byte address 0x4 - core index']
  #allocation1 [shape = 'u32[72,128]{1,0:T(1,128)}', space=vmem, size = 0x9000, scoped, tag = 'internal scratch']
  %s0 = inlined_call_operand.vmem [shape: bf16[16,64], index: 0, kind: input, shape index: {}]
  %s1 = inlined_call_operand.vmem [shape: bf16[16,64], index: 1, kind: input, shape index: {}]
  %s2 = inlined_call_operand.vmem [shape: f32[64,64], index: 2, kind: input, shape index: {}]
  %s3 = inlined_call_operand.vmem [shape: f32[64,64], index: 3, kind: input, shape index: {}]
  %s4 = inlined_call_operand.vmem [shape: f32[1,64], index: 4, kind: input, shape index: {}]
  %s5 = inlined_call_operand.vmem [shape: f32[64,64], index: 5, kind: input, shape index: {}]
  %s6 = inlined_call_operand.vmem [shape: f32[1,64], index: 6, kind: input, shape index: {}]
  %s7 = inlined_call_operand.vmem [shape: f32[16,1], index: 7, kind: input, shape index: {}]
  %s8 = inlined_call_operand.vmem [shape: bf16[16,64], index: 8, kind: output, shape index: {}]
  %s9 = sld [smem:[#allocation0]]
  $region65: #{variational_dequantizer_forward.16} parent=0
    _
  %s11 = ssub.s32 1, %s9
  %s12 = scalar_select 0, %s11, %s9
  loop: start=0, step=1, limit=4
  $region2: #{variational_dequantizer_forward.16} parent=0 // loop_pre_header
    _
  $region3: #{variational_dequantizer_forward.16} parent=0 // loop_header
    %s14 = sphi 0, %s18
    %p15 = scmp.ge.s32.totalorder %s14, 4
    %s24 = sphi 0, %s26
    %s27 = sphi 0, %s24
    %s28 = sphi 0, %s27
    %s44 = sphi 0, %s28
    %s50 = sphi 0, %s52
    %s53 = sphi 0, %s50
    %s54 = sphi 0, %s53
    %s70 = sphi 0, %s54
    %s74 = sphi 0, %s74
    %s76 = sphi 0, %s74
    %s77 = sphi 0, %s76
    %s91 = sphi 0, %s77
    %s95 = sphi 0, %s95
    %s97 = sphi 0, %s95
    %s98 = sphi 0, %s97
    %s112 = sphi 0, %s98
    %s116 = sphi 0, %s116
    %s118 = sphi 0, %s116
    %s119 = sphi 0, %s118
    %s133 = sphi 0, %s119
    %s137 = sphi 0, %s137
    %s139 = sphi 0, %s137
    %s140 = sphi 0, %s139
    %s154 = sphi 0, %s140
    %s158 = sphi 0, %s158
    %s160 = sphi 0, %s158
    %s161 = sphi 0, %s160
    %s175 = sphi 0, %s161
    %s181 = sphi 0, %s183
    %s184 = sphi 0, %s181
    %s185 = sphi 0, %s184
    %s201 = sphi 0, %s185
    %s207 = sphi 0, %s209
    %s210 = sphi 0, %s207
    %s211 = sphi 0, %s210
    %s227 = sphi 0, %s211
  $region4: #{variational_dequantizer_forward.16} parent=0 // loop_header_branch
    %17 = sbr.rel (%p15) target = $region8
  $region5: #{variational_dequantizer_forward.16} parent=0 // loop_body
    %s19 = ssub.s32 %s14, 1
    %s20 = ssub.s32 %s14, 2
    %s21 = sadd.s32 %s14, 1
    %s22 = ssub.s32 %s14, %s21
    %p23 = scmp.eq.s32.totalorder %s22, 0
    %s25 = sadd.s32 %s24, 1
    %s26 = scalar_select %p23, %s24, %s25
    %p29 = pneg %p23
    %p30 = scmp.eq.s32.totalorder %s14, 1
    %p31 = por %p29, %p30
    %p32 = scmp.ne.s32.totalorder %s24, %s27
    %p33 = scmp.eq.s32.totalorder %s14, 0
    %p34 = por %p32, %p33
    %p35 = scmp.ne.s32.totalorder %s24, %s27
    %p36 = scmp.eq.s32.totalorder %s19, 1
    %p37 = por %p35, %p36
    %p38 = scmp.ne.s32.totalorder %s27, %s28
    %p39 = scmp.eq.s32.totalorder %s19, 0
    %p40 = por %p38, %p39
    %p41 = scmp.ne.s32.totalorder %s27, %s28
    %p42 = scmp.eq.s32.totalorder %s20, 1
    %p43 = por %p41, %p42
    %p45 = scmp.ne.s32.totalorder %s28, %s44
    %p46 = scmp.eq.s32.totalorder %s20, 0
    %p47 = por %p45, %p46
    %s48 = ssub.s32 %s14, %s21
    %p49 = scmp.eq.s32.totalorder %s48, 0
    %s51 = sadd.s32 %s50, 1
    %s52 = scalar_select %p49, %s50, %s51
    %p55 = pneg %p49
    %p56 = scmp.eq.s32.totalorder %s14, 1
    %p57 = por %p55, %p56
    %p58 = scmp.ne.s32.totalorder %s50, %s53
    %p59 = scmp.eq.s32.totalorder %s14, 0
    %p60 = por %p58, %p59
    %p61 = scmp.ne.s32.totalorder %s50, %s53
    %p62 = scmp.eq.s32.totalorder %s19, 1
    %p63 = por %p61, %p62
    %p64 = scmp.ne.s32.totalorder %s53, %s54
    %p65 = scmp.eq.s32.totalorder %s19, 0
    %p66 = por %p64, %p65
    %p67 = scmp.ne.s32.totalorder %s53, %s54
    %p68 = scmp.eq.s32.totalorder %s20, 1
    %p69 = por %p67, %p68
    %p71 = scmp.ne.s32.totalorder %s54, %s70
    %p72 = scmp.eq.s32.totalorder %s20, 0
    %p73 = por %p71, %p72
    %s75 = sadd.s32 %s74, 1
    %p78 = scmp.eq.s32.totalorder %s14, 1
    %p79 = scmp.ne.s32.totalorder %s74, %s76
    %p80 = scmp.eq.s32.totalorder %s14, 0
    %p81 = por %p79, %p80
    %p82 = scmp.ne.s32.totalorder %s74, %s76
    %p83 = scmp.eq.s32.totalorder %s19, 1
    %p84 = por %p82, %p83
    %p85 = scmp.ne.s32.totalorder %s76, %s77
    %p86 = scmp.eq.s32.totalorder %s19, 0
    %p87 = por %p85, %p86
    %p88 = scmp.ne.s32.totalorder %s76, %s77
    %p89 = scmp.eq.s32.totalorder %s20, 1
    %p90 = por %p88, %p89
    %p92 = scmp.ne.s32.totalorder %s77, %s91
    %p93 = scmp.eq.s32.totalorder %s20, 0
    %p94 = por %p92, %p93
    %s96 = sadd.s32 %s95, 1
    %p99 = scmp.eq.s32.totalorder %s14, 1
    %p100 = scmp.ne.s32.totalorder %s95, %s97
    %p101 = scmp.eq.s32.totalorder %s14, 0
    %p102 = por %p100, %p101
    %p103 = scmp.ne.s32.totalorder %s95, %s97
    %p104 = scmp.eq.s32.totalorder %s19, 1
    %p105 = por %p103, %p104
    %p106 = scmp.ne.s32.totalorder %s97, %s98
    %p107 = scmp.eq.s32.totalorder %s19, 0
    %p108 = por %p106, %p107
    %p109 = scmp.ne.s32.totalorder %s97, %s98
    %p110 = scmp.eq.s32.totalorder %s20, 1
    %p111 = por %p109, %p110
    %p113 = scmp.ne.s32.totalorder %s98, %s112
    %p114 = scmp.eq.s32.totalorder %s20, 0
    %p115 = por %p113, %p114
    %s117 = sadd.s32 %s116, 1
    %p120 = scmp.eq.s32.totalorder %s14, 1
    %p121 = scmp.ne.s32.totalorder %s116, %s118
    %p122 = scmp.eq.s32.totalorder %s14, 0
    %p123 = por %p121, %p122
    %p124 = scmp.ne.s32.totalorder %s116, %s118
    %p125 = scmp.eq.s32.totalorder %s19, 1
    %p126 = por %p124, %p125
    %p127 = scmp.ne.s32.totalorder %s118, %s119
    %p128 = scmp.eq.s32.totalorder %s19, 0
    %p129 = por %p127, %p128
    %p130 = scmp.ne.s32.totalorder %s118, %s119
    %p131 = scmp.eq.s32.totalorder %s20, 1
    %p132 = por %p130, %p131
    %p134 = scmp.ne.s32.totalorder %s119, %s133
    %p135 = scmp.eq.s32.totalorder %s20, 0
    %p136 = por %p134, %p135
    %s138 = sadd.s32 %s137, 1
    %p141 = scmp.eq.s32.totalorder %s14, 1
    %p142 = scmp.ne.s32.totalorder %s137, %s139
    %p143 = scmp.eq.s32.totalorder %s14, 0
    %p144 = por %p142, %p143
    %p145 = scmp.ne.s32.totalorder %s137, %s139
    %p146 = scmp.eq.s32.totalorder %s19, 1
    %p147 = por %p145, %p146
    %p148 = scmp.ne.s32.totalorder %s139, %s140
    %p149 = scmp.eq.s32.totalorder %s19, 0
    %p150 = por %p148, %p149
    %p151 = scmp.ne.s32.totalorder %s139, %s140
    %p152 = scmp.eq.s32.totalorder %s20, 1
    %p153 = por %p151, %p152
    %p155 = scmp.ne.s32.totalorder %s140, %s154
    %p156 = scmp.eq.s32.totalorder %s20, 0
    %p157 = por %p155, %p156
    %s159 = sadd.s32 %s158, 1
    %p162 = scmp.eq.s32.totalorder %s14, 1
    %p163 = scmp.ne.s32.totalorder %s158, %s160
    %p164 = scmp.eq.s32.totalorder %s14, 0
    %p165 = por %p163, %p164
    %p166 = scmp.ne.s32.totalorder %s158, %s160
    %p167 = scmp.eq.s32.totalorder %s19, 1
    %p168 = por %p166, %p167
    %p169 = scmp.ne.s32.totalorder %s160, %s161
    %p170 = scmp.eq.s32.totalorder %s19, 0
    %p171 = por %p169, %p170
    %p172 = scmp.ne.s32.totalorder %s160, %s161
    %p173 = scmp.eq.s32.totalorder %s20, 1
    %p174 = por %p172, %p173
    %p176 = scmp.ne.s32.totalorder %s161, %s175
    %p177 = scmp.eq.s32.totalorder %s20, 0
    %p178 = por %p176, %p177
    %s179 = ssub.s32 %s14, %s21
    %p180 = scmp.eq.s32.totalorder %s179, 0
    %s182 = sadd.s32 %s181, 1
    %s183 = scalar_select %p180, %s181, %s182
    %p186 = pneg %p180
    %p187 = scmp.eq.s32.totalorder %s14, 1
    %p188 = por %p186, %p187
    %p189 = scmp.ne.s32.totalorder %s181, %s184
    %p190 = scmp.eq.s32.totalorder %s14, 0
    %p191 = por %p189, %p190
    %p192 = scmp.ne.s32.totalorder %s181, %s184
    %p193 = scmp.eq.s32.totalorder %s19, 1
    %p194 = por %p192, %p193
    %p195 = scmp.ne.s32.totalorder %s184, %s185
    %p196 = scmp.eq.s32.totalorder %s19, 0
    %p197 = por %p195, %p196
    %p198 = scmp.ne.s32.totalorder %s184, %s185
    %p199 = scmp.eq.s32.totalorder %s20, 1
    %p200 = por %p198, %p199
    %p202 = scmp.ne.s32.totalorder %s185, %s201
    %p203 = scmp.eq.s32.totalorder %s20, 0
    %p204 = por %p202, %p203
    %s205 = ssub.s32 %s14, %s21
    %p206 = scmp.eq.s32.totalorder %s205, 0
    %s208 = sadd.s32 %s207, 1
    %s209 = scalar_select %p206, %s207, %s208
    %p212 = pneg %p206
    %p213 = scmp.eq.s32.totalorder %s14, 1
    %p214 = por %p212, %p213
    %p215 = scmp.ne.s32.totalorder %s207, %s210
    %p216 = scmp.eq.s32.totalorder %s14, 0
    %p217 = por %p215, %p216
    %p218 = scmp.ne.s32.totalorder %s207, %s210
    %p219 = scmp.eq.s32.totalorder %s19, 1
    %p220 = por %p218, %p219
    %p221 = scmp.ne.s32.totalorder %s210, %s211
    %p222 = scmp.eq.s32.totalorder %s19, 0
    %p223 = por %p221, %p222
    %p224 = scmp.ne.s32.totalorder %s210, %s211
    %p225 = scmp.eq.s32.totalorder %s20, 1
    %p226 = por %p224, %p225
    %p228 = scmp.ne.s32.totalorder %s211, %s227
    %p229 = scmp.eq.s32.totalorder %s20, 0
    %p230 = por %p228, %p229
    %p231 = scmp.le.s32.totalorder 1, %s14
    %p232 = scmp.lt.s32.totalorder %s14, 3
    %p233 = pnand %p231, %p232
    %p234 = pneg %p233
    // Predicated region
    $region9: #{variational_dequantizer_forward.16} parent=5 // pred_check
      _
    $region10: #{variational_dequantizer_forward.16} parent=5 // pred_check_branch
      %236 = sbr.rel (%p233) target = $region12
    $region11: #{variational_dequantizer_forward.16} parent=5 // pred_region
      %s237 = ssub.s32 %s14, 1
      // Predicated region
      $region13: #{variational_dequantizer_forward.16} parent=11 // pred_check
        %p238 = pneg %p87
      $region14: #{variational_dequantizer_forward.16} parent=11 // pred_check_branch
        %240 = sbr.rel (%p238) target = $region16
      $region15: #{variational_dequantizer_forward.16} parent=11 // pred_region
        _
      $region16: #{variational_dequantizer_forward.16} parent=11 // pred_fallthru
        _
      // Predicated region
      $region17: #{variational_dequantizer_forward.16} parent=11 // pred_check
        %p241 = pneg %p108
      $region18: #{variational_dequantizer_forward.16} parent=11 // pred_check_branch
        %243 = sbr.rel (%p241) target = $region20
      $region19: #{variational_dequantizer_forward.16} parent=11 // pred_region
        _
      $region20: #{variational_dequantizer_forward.16} parent=11 // pred_fallthru
        _
      // Predicated region
      $region21: #{variational_dequantizer_forward.16} parent=11 // pred_check
        %p244 = pneg %p129
      $region22: #{variational_dequantizer_forward.16} parent=11 // pred_check_branch
        %246 = sbr.rel (%p244) target = $region24
      $region23: #{variational_dequantizer_forward.16} parent=11 // pred_region
        _
      $region24: #{variational_dequantizer_forward.16} parent=11 // pred_fallthru
        _
      // Predicated region
      $region25: #{variational_dequantizer_forward.16} parent=11 // pred_check
        %p247 = pneg %p150
      $region26: #{variational_dequantizer_forward.16} parent=11 // pred_check_branch
        %249 = sbr.rel (%p247) target = $region28
      $region27: #{variational_dequantizer_forward.16} parent=11 // pred_region
        _
      $region28: #{variational_dequantizer_forward.16} parent=11 // pred_fallthru
        _
      // Predicated region
      $region29: #{variational_dequantizer_forward.16} parent=11 // pred_check
        %p250 = pneg %p171
      $region30: #{variational_dequantizer_forward.16} parent=11 // pred_check_branch
        %252 = sbr.rel (%p250) target = $region32
      $region31: #{variational_dequantizer_forward.16} parent=11 // pred_region
        _
      $region32: #{variational_dequantizer_forward.16} parent=11 // pred_fallthru
        _
    $region12: #{variational_dequantizer_forward.16} parent=5 // pred_fallthru
      _
    %p253 = scmp.lt.s32.totalorder %s14, 2
    // Predicated region
    $region33: #{variational_dequantizer_forward.16} parent=5 // pred_check
      %p254 = pneg %p253
    $region34: #{variational_dequantizer_forward.16} parent=5 // pred_check_branch
      %256 = sbr.rel (%p254) target = $region36
    $region35: #{variational_dequantizer_forward.16} parent=5 // pred_region
      // Predicated region
      $region37: #{variational_dequantizer_forward.16} parent=35 // pred_check
        %p257 = pneg %p34
      $region38: #{variational_dequantizer_forward.16} parent=35 // pred_check_branch
        %259 = sbr.rel (%p257) target = $region40
      $region39: #{variational_dequantizer_forward.16} parent=35 // pred_region
        %p260 = scmp.lt.s32.totalorder %s14, 1
        %s261 = scalar_select %p260, %s14, 1
        %s262 = smul.addr %s261, 4
        %s263 = scalar_lea.vmem %s0, %s262
      $region40: #{variational_dequantizer_forward.16} parent=35 // pred_fallthru
        _
      // Predicated region
      $region41: #{variational_dequantizer_forward.16} parent=35 // pred_check
        %p264 = pneg %p60
      $region42: #{variational_dequantizer_forward.16} parent=35 // pred_check_branch
        %266 = sbr.rel (%p264) target = $region44
      $region43: #{variational_dequantizer_forward.16} parent=35 // pred_region
        %p267 = scmp.lt.s32.totalorder %s14, 1
        %s268 = scalar_select %p267, %s14, 1
        %s269 = smul.addr %s268, 4
        %s270 = scalar_lea.vmem %s1, %s269
      $region44: #{variational_dequantizer_forward.16} parent=35 // pred_fallthru
        _
      // Predicated region
      $region45: #{variational_dequantizer_forward.16} parent=35 // pred_check
        %p271 = pneg %p191
      $region46: #{variational_dequantizer_forward.16} parent=35 // pred_check_branch
        %273 = sbr.rel (%p271) target = $region48
      $region47: #{variational_dequantizer_forward.16} parent=35 // pred_region
        %p274 = scmp.lt.s32.totalorder %s14, 1
        %s275 = scalar_select %p274, %s14, 1
        %s276 = smul.addr %s275, 8
        %s277 = scalar_lea.vmem %s7, %s276
      $region48: #{variational_dequantizer_forward.16} parent=35 // pred_fallthru
        _
    $region36: #{variational_dequantizer_forward.16} parent=5 // pred_fallthru
      _
    %p278 = scmp.le.s32.totalorder 1, %s14
    %p279 = scmp.lt.s32.totalorder %s14, 3
    %p280 = pnand %p278, %p279
    %p281 = pneg %p280
    // Predicated region
    $region49: #{variational_dequantizer_forward.16} parent=5 // pred_check
      _
    $region50: #{variational_dequantizer_forward.16} parent=5 // pred_check_branch
      %283 = sbr.rel (%p280) target = $region52
    $region51: #{variational_dequantizer_forward.16} parent=5 // pred_region
      %s284 = ssub.s32 %s14, 1
      %p285 = scmp.lt.s32.totalorder %s19, 1
      %s286 = scalar_select %p285, %s19, 1
      %s287 = smul.addr %s286, 4
      %s288 = scalar_lea.vmem %s0, %s287
      %p289 = pneg %p40
      %p290 = pneg %p37
      %p291 = scmp.lt.s32.totalorder %s19, 1
      %s292 = scalar_select %p291, %s19, 1
      %s293 = smul.addr %s292, 4
      %s294 = scalar_lea.vmem %s1, %s293
      %p295 = pneg %p66
      %p296 = pneg %p63
      %p297 = pneg %p87
      %p298 = pneg %p84
      %p299 = pneg %p108
      %p300 = pneg %p105
      %p301 = pneg %p129
      %p302 = pneg %p126
      %p303 = pneg %p150
      %p304 = pneg %p147
      %p305 = pneg %p171
      %p306 = pneg %p168
      %p307 = scmp.lt.s32.totalorder %s19, 1
      %s308 = scalar_select %p307, %s19, 1
      %s309 = smul.addr %s308, 8
      %s310 = scalar_lea.vmem %s7, %s309
      %p311 = pneg %p197
      %p312 = pneg %p194
      %p313 = pneg %p223
      %p314 = pneg %p220
      %p315 = scmp.lt.s32.totalorder %s19, 1
      %s316 = scalar_select %p315, %s19, 1
      %s317 = smul.addr %s316, 4
      %s318 = scalar_lea.vmem %s8, %s317
      %p319 = scmp.lt.s32.totalorder %s19, 1
      %s320 = scalar_select %p319, %s19, 1
      %s321 = smul.addr %s320, 4
      %s322 = scalar_lea.vmem %s0, %s321
      %p323 = scmp.lt.s32.totalorder %s19, 1
      %s324 = scalar_select %p323, %s19, 1
      %s325 = smul.addr %s324, 4
      %s326 = scalar_lea.vmem %s1, %s325
      %p327 = scmp.lt.s32.totalorder %s19, 1
      %s328 = scalar_select %p327, %s19, 1
      %s329 = smul.addr %s328, 8
      %s330 = scalar_lea.vmem %s7, %s329
      %p331 = scmp.lt.s32.totalorder %s19, 1
      %s332 = scalar_select %p331, %s19, 1
      %s333 = smul.addr %s332, 4
      %s334 = scalar_lea.vmem %s8, %s333
      %v336 = vld [vmem:[%s322] sm:$0xf]
      %v337 = vld [vmem:[%s2] sm:$0xff]
      %v338 = vld [vmem:[%s2 + $0x8] sm:$0xff]
      %v339 = vld [vmem:[%s2 + $0x10] sm:$0xff]
      %v340 = vld [vmem:[%s2 + $0x18] sm:$0xff]
      %v341 = vld [vmem:[%s2 + $0x20] sm:$0xff]
      %v342 = vld [vmem:[%s2 + $0x28] sm:$0xff]
      %v343 = vld [vmem:[%s2 + $0x30] sm:$0xff]
      %v344 = vld [vmem:[%s2 + $0x38] sm:$0xff]
      %v345 = vpack.c.bf16 %v338, %v337
      %v346 = vpack.c.bf16 %v340, %v339
      %v347 = vpack.c.bf16 %v342, %v341
      %v348 = vpack.c.bf16 %v344, %v343
      %v349 = vld [vmem:[%s326] sm:$0xf]
      %v350 = vld [vmem:[%s3] sm:$0xff]
      %v351 = vld [vmem:[%s3 + $0x8] sm:$0xff]
      %v352 = vld [vmem:[%s3 + $0x10] sm:$0xff]
      %v353 = vld [vmem:[%s3 + $0x18] sm:$0xff]
      %v354 = vld [vmem:[%s3 + $0x20] sm:$0xff]
      %v355 = vld [vmem:[%s3 + $0x28] sm:$0xff]
      %v356 = vld [vmem:[%s3 + $0x30] sm:$0xff]
      %v357 = vld [vmem:[%s3 + $0x38] sm:$0xff]
      %v358 = vpack.c.bf16 %v351, %v350
      %v359 = vpack.c.bf16 %v353, %v352
      %v360 = vpack.c.bf16 %v355, %v354
      %v361 = vpack.c.bf16 %v357, %v356
      %vm362 = vcmask 523264
      %v364 = vsel %vm362, %v349, 0
      %366 = vmatpush.bf16.msra.mxu0 0
      %367 = vmatpush.bf16.msra.mxu0 0
      %368 = vmatpush.bf16.msra.mxu0 0
      %369 = vmatpush.bf16.msra.mxu0 0
      %370 = vmatpush.bf16.msra.mxu0 %v361
      %371 = vmatpush.bf16.msra.mxu0 %v360
      %372 = vmatpush.bf16.msra.mxu0 %v359
      %373 = vmatpush.bf16.msra.mxu0 %v358
      %374 = vmatmul.bf16.gmra.mxu0 %v364
      %v375 = vpop.f32.mrf.mxu0
      %v376 = vadd.f32 0.0, %v375
      %v377 = vpop.f32.mrf.mxu0
      %378 = vdwg.mxu0
      %v380 = vsel %vm362, %v336, 0
      %382 = vmatpush.bf16.msra.mxu0 0
      %383 = vmatpush.bf16.msra.mxu0 0
      %384 = vmatpush.bf16.msra.mxu0 0
      %385 = vmatpush.bf16.msra.mxu0 0
      %386 = vmatpush.bf16.msra.mxu0 %v348
      %387 = vmatpush.bf16.msra.mxu0 %v347
      %388 = vmatpush.bf16.msra.mxu0 %v346
      %389 = vmatpush.bf16.msra.mxu0 %v345
      %390 = vmatmul.bf16.gmra.mxu0 %v380
      %v391 = vpop.f32.mrf.mxu0
      %v392 = vadd.f32 %v376, %v391
      %v393 = vpop.f32.mrf.mxu0
      %394 = vdwg.mxu0
      %v395 = vld [vmem:[%s4] sm:$0x1]
      %v397 = vperm.slane %v395, 0
      %v399 = vadd.f32 %v392, %v397
      %v400 = vsub.f32 0.0, %v399
      %v401 = vmul.f32 %v400, 1.442695
      %v402 = vpow.pop %v401
      %v403 = vadd.f32 %v402, 1.0
      %v404 = vrcp.pop %v403
      %v405 = vmul.f32 %v399, %v404
      %v406 = vpack.c.bf16 %v405, %v405
      %v407 = vld [vmem:[%s5] sm:$0xff]
      %v408 = vld [vmem:[%s5 + $0x8] sm:$0xff]
      %v409 = vld [vmem:[%s5 + $0x10] sm:$0xff]
      %v410 = vld [vmem:[%s5 + $0x18] sm:$0xff]
      %v411 = vld [vmem:[%s5 + $0x20] sm:$0xff]
      %v412 = vld [vmem:[%s5 + $0x28] sm:$0xff]
      %v413 = vld [vmem:[%s5 + $0x30] sm:$0xff]
      %v414 = vld [vmem:[%s5 + $0x38] sm:$0xff]
      %v415 = vpack.c.bf16 %v408, %v407
      %v416 = vpack.c.bf16 %v410, %v409
      %v417 = vpack.c.bf16 %v412, %v411
      %v418 = vpack.c.bf16 %v414, %v413
      %v419 = vld [vmem:[%s6] sm:$0x1]
      %v421 = vperm.slane %v419, 0
      %v424 = vsel %vm362, %v406, 0
      %426 = vmatpush.bf16.msra.mxu0 0
      %427 = vmatpush.bf16.msra.mxu0 0
      %428 = vmatpush.bf16.msra.mxu0 0
      %429 = vmatpush.bf16.msra.mxu0 0
      %430 = vmatpush.bf16.msra.mxu0 %v418
      %431 = vmatpush.bf16.msra.mxu0 %v417
      %432 = vmatpush.bf16.msra.mxu0 %v416
      %433 = vmatpush.bf16.msra.mxu0 %v415
      %434 = vmatmul.bf16.gmra.mxu0 %v424
      %v435 = vpop.f32.mrf.mxu0
      %v436 = vadd.f32 %v421, %v435
      %v437 = vpop.f32.mrf.mxu0
      %438 = vdwg.mxu0
      %v439 = vunpack.c.l.bf16 %v336
      %v440 = vadd.f32 %v439, %v436
      %v441 = vld [vmem:[%s330] sm:$0xff]
      %443 = vset.pattern.permute.xlu0 0
      %444 = vperm.xlu0 %443, %v441
      %v445 = vpop.permute.xlu0 %444
      %v447 = vmul.f32 %v440, %v445
      %v448 = vpack.c.bf16 %v447, %v447
      %vm449 = vcmask 519168
      %450 = vst.msk [vmem:[%s334] sm:$0xf] %vm449, %v448
      %p451 = scmp.lt.s32.totalorder %s19, 1
      %s452 = scalar_select %p451, %s19, 1
      %s453 = smul.addr %s452, 4
      %s454 = scalar_lea.vmem %s8, %s453
      // Predicated region
      $region53: #{variational_dequantizer_forward.16} parent=51 // pred_check
        %p455 = pneg %p220
      $region54: #{variational_dequantizer_forward.16} parent=51 // pred_check_branch
        %457 = sbr.rel (%p455) target = $region56
      $region55: #{variational_dequantizer_forward.16} parent=51 // pred_region
        _
      $region56: #{variational_dequantizer_forward.16} parent=51 // pred_fallthru
        _
    $region52: #{variational_dequantizer_forward.16} parent=5 // pred_fallthru
      _
    %p458 = scmp.le.s32.totalorder 2, %s14
    // Predicated region
    $region57: #{variational_dequantizer_forward.16} parent=5 // pred_check
      %p459 = pneg %p458
    $region58: #{variational_dequantizer_forward.16} parent=5 // pred_check_branch
      %461 = sbr.rel (%p459) target = $region60
    $region59: #{variational_dequantizer_forward.16} parent=5 // pred_region
      %s462 = ssub.s32 %s14, 2
      // Predicated region
      $region61: #{variational_dequantizer_forward.16} parent=59 // pred_check
        %p463 = pneg %p226
      $region62: #{variational_dequantizer_forward.16} parent=59 // pred_check_branch
        %465 = sbr.rel (%p463) target = $region64
      $region63: #{variational_dequantizer_forward.16} parent=59 // pred_region
        %p466 = scmp.lt.s32.totalorder %s20, 1
        %s467 = scalar_select %p466, %s20, 1
        %s468 = smul.addr %s467, 4
        %s469 = scalar_lea.vmem %s8, %s468
      $region64: #{variational_dequantizer_forward.16} parent=59 // pred_fallthru
        _
    $region60: #{variational_dequantizer_forward.16} parent=5 // pred_fallthru
      _
  $region6: #{variational_dequantizer_forward.16} parent=0 // loop_footer
    %s18 = sadd.s32 1, %s14
  $region7: #{variational_dequantizer_forward.16} parent=0 // loop_footer_branch
    %13 = sbr.rel target = $region3
  $region8: #{variational_dequantizer_forward.16} parent=0 // loop_exit
    _

// kernel: variational_dequantizer_forward.15
$region0: #{variational_dequantizer_forward.15}
  #allocation0 [shape = 'u32[]', space=smem, size = 0x4, offset = 0x4, fixed_abs, tag = 'smem constant byte address 0x4 - core index']
  #allocation1 [shape = 'u32[72,128]{1,0:T(1,128)}', space=vmem, size = 0x9000, scoped, tag = 'internal scratch']
  %s0 = inlined_call_operand.vmem [shape: bf16[2,8,64], index: 0, kind: input, shape index: {}, may-alias: {0,1}]
  %s1 = inlined_call_operand.vmem [shape: bf16[2,8,64], index: 1, kind: input, shape index: {}, may-alias: {0,1}]
  %s2 = inlined_call_operand.vmem [shape: f32[2,8,8,3], index: 2, kind: input, shape index: {}]
  %s3 = inlined_call_operand.vmem [shape: f32[64,64], index: 3, kind: input, shape index: {}]
  %s4 = inlined_call_operand.vmem [shape: f32[64,64], index: 4, kind: input, shape index: {}]
  %s5 = inlined_call_operand.vmem [shape: f32[1,64], index: 5, kind: input, shape index: {}]
  %s6 = inlined_call_operand.vmem [shape: f32[1,64], index: 6, kind: input, shape index: {}]
  %s7 = inlined_call_operand.vmem [shape: f32[1,64], index: 7, kind: input, shape index: {}]
  %s8 = inlined_call_operand.vmem [shape: f32[64,64], index: 8, kind: input, shape index: {}]
  %s9 = inlined_call_operand.vmem [shape: f32[1,64], index: 9, kind: input, shape index: {}]
  %s10 = inlined_call_operand.vmem [shape: bf16[2,8,64], index: 10, kind: output, shape index: {}]
  %s11 = sld [smem:[#allocation0]]
  $region73: #{variational_dequantizer_forward.15} parent=0
    _
  %s13 = ssub.s32 1, %s11
  %s14 = scalar_select 0, %s13, %s11
  loop: start=0, step=1, limit=4
  $region2: #{variational_dequantizer_forward.15} parent=0 // loop_pre_header
    _
  $region3: #{variational_dequantizer_forward.15} parent=0 // loop_header
    %s16 = sphi 0, %s20
    %p17 = scmp.ge.s32.totalorder %s16, 4
    %s23 = sphi 0, %s35
    %s24 = sphi 0, %s31
    %s25 = sphi 0, %s23
    %s26 = sphi 0, %s24
    %s27 = sphi 0, %s25
    %s28 = sphi 0, %s26
    %s40 = sphi 0, %s42
    %s43 = sphi 0, %s40
    %s44 = sphi 0, %s43
    %s60 = sphi 0, %s44
    %s66 = sphi 0, %s68
    %s69 = sphi 0, %s66
    %s70 = sphi 0, %s69
    %s86 = sphi 0, %s70
    %s94 = sphi 0, %s96
    %s97 = sphi 0, %s94
    %s98 = sphi 0, %s97
    %s114 = sphi 0, %s98
    %s118 = sphi 0, %s118
    %s120 = sphi 0, %s118
    %s121 = sphi 0, %s120
    %s135 = sphi 0, %s121
    %s139 = sphi 0, %s139
    %s141 = sphi 0, %s139
    %s142 = sphi 0, %s141
    %s156 = sphi 0, %s142
    %s160 = sphi 0, %s160
    %s162 = sphi 0, %s160
    %s163 = sphi 0, %s162
    %s177 = sphi 0, %s163
    %s181 = sphi 0, %s181
    %s183 = sphi 0, %s181
    %s184 = sphi 0, %s183
    %s198 = sphi 0, %s184
    %s202 = sphi 0, %s202
    %s204 = sphi 0, %s202
    %s205 = sphi 0, %s204
    %s219 = sphi 0, %s205
    %s223 = sphi 0, %s223
    %s225 = sphi 0, %s223
    %s226 = sphi 0, %s225
    %s240 = sphi 0, %s226
    %s244 = sphi 0, %s244
    %s246 = sphi 0, %s244
    %s247 = sphi 0, %s246
    %s261 = sphi 0, %s247
    %s269 = sphi 0, %s271
    %s272 = sphi 0, %s269
    %s273 = sphi 0, %s272
    %s289 = sphi 0, %s273
  $region4: #{variational_dequantizer_forward.15} parent=0 // loop_header_branch
    %19 = sbr.rel (%p17) target = $region8
  $region5: #{variational_dequantizer_forward.15} parent=0 // loop_body
    %s21 = ssub.s32 %s16, 1
    %s22 = ssub.s32 %s16, 2
    %s29 = sadd.s32 1, %s24
    %p30 = scmp.ge.s32.totalorder %s29, 1
    %s31 = scalar_select %p30, 0, %s29
    %s32 = sadd.s32 1, %s23
    %s33 = scalar_select %p30, %s32, %s23
    %p34 = scmp.ge.s32.totalorder %s33, 2
    %s35 = scalar_select %p34, 0, %s33
    %s36 = ssub.s32 %s23, %s35
    %s37 = ssub.s32 %s24, %s31
    %s38 = sor.u32 %s36, %s37
    %p39 = scmp.eq.s32.totalorder %s38, 0
    %s41 = sadd.s32 %s40, 1
    %s42 = scalar_select %p39, %s40, %s41
    %p45 = pneg %p39
    %p46 = scmp.eq.s32.totalorder %s16, 1
    %p47 = por %p45, %p46
    %p48 = scmp.ne.s32.totalorder %s40, %s43
    %p49 = scmp.eq.s32.totalorder %s16, 0
    %p50 = por %p48, %p49
    %p51 = scmp.ne.s32.totalorder %s40, %s43
    %p52 = scmp.eq.s32.totalorder %s21, 1
    %p53 = por %p51, %p52
    %p54 = scmp.ne.s32.totalorder %s43, %s44
    %p55 = scmp.eq.s32.totalorder %s21, 0
    %p56 = por %p54, %p55
    %p57 = scmp.ne.s32.totalorder %s43, %s44
    %p58 = scmp.eq.s32.totalorder %s22, 1
    %p59 = por %p57, %p58
    %p61 = scmp.ne.s32.totalorder %s44, %s60
    %p62 = scmp.eq.s32.totalorder %s22, 0
    %p63 = por %p61, %p62
    %s64 = ssub.s32 %s23, %s35
    %p65 = scmp.eq.s32.totalorder %s64, 0
    %s67 = sadd.s32 %s66, 1
    %s68 = scalar_select %p65, %s66, %s67
    %p71 = pneg %p65
    %p72 = scmp.eq.s32.totalorder %s16, 1
    %p73 = por %p71, %p72
    %p74 = scmp.ne.s32.totalorder %s66, %s69
    %p75 = scmp.eq.s32.totalorder %s16, 0
    %p76 = por %p74, %p75
    %p77 = scmp.ne.s32.totalorder %s66, %s69
    %p78 = scmp.eq.s32.totalorder %s21, 1
    %p79 = por %p77, %p78
    %p80 = scmp.ne.s32.totalorder %s69, %s70
    %p81 = scmp.eq.s32.totalorder %s21, 0
    %p82 = por %p80, %p81
    %p83 = scmp.ne.s32.totalorder %s69, %s70
    %p84 = scmp.eq.s32.totalorder %s22, 1
    %p85 = por %p83, %p84
    %p87 = scmp.ne.s32.totalorder %s70, %s86
    %p88 = scmp.eq.s32.totalorder %s22, 0
    %p89 = por %p87, %p88
    %s90 = ssub.s32 %s23, %s35
    %s91 = ssub.s32 %s24, %s31
    %s92 = sor.u32 %s90, %s91
    %p93 = scmp.eq.s32.totalorder %s92, 0
    %s95 = sadd.s32 %s94, 1
    %s96 = scalar_select %p93, %s94, %s95
    %p99 = pneg %p93
    %p100 = scmp.eq.s32.totalorder %s16, 1
    %p101 = por %p99, %p100
    %p102 = scmp.ne.s32.totalorder %s94, %s97
    %p103 = scmp.eq.s32.totalorder %s16, 0
    %p104 = por %p102, %p103
    %p105 = scmp.ne.s32.totalorder %s94, %s97
    %p106 = scmp.eq.s32.totalorder %s21, 1
    %p107 = por %p105, %p106
    %p108 = scmp.ne.s32.totalorder %s97, %s98
    %p109 = scmp.eq.s32.totalorder %s21, 0
    %p110 = por %p108, %p109
    %p111 = scmp.ne.s32.totalorder %s97, %s98
    %p112 = scmp.eq.s32.totalorder %s22, 1
    %p113 = por %p111, %p112
    %p115 = scmp.ne.s32.totalorder %s98, %s114
    %p116 = scmp.eq.s32.totalorder %s22, 0
    %p117 = por %p115, %p116
    %s119 = sadd.s32 %s118, 1
    %p122 = scmp.eq.s32.totalorder %s16, 1
    %p123 = scmp.ne.s32.totalorder %s118, %s120
    %p124 = scmp.eq.s32.totalorder %s16, 0
    %p125 = por %p123, %p124
    %p126 = scmp.ne.s32.totalorder %s118, %s120
    %p127 = scmp.eq.s32.totalorder %s21, 1
    %p128 = por %p126, %p127
    %p129 = scmp.ne.s32.totalorder %s120, %s121
    %p130 = scmp.eq.s32.totalorder %s21, 0
    %p131 = por %p129, %p130
    %p132 = scmp.ne.s32.totalorder %s120, %s121
    %p133 = scmp.eq.s32.totalorder %s22, 1
    %p134 = por %p132, %p133
    %p136 = scmp.ne.s32.totalorder %s121, %s135
    %p137 = scmp.eq.s32.totalorder %s22, 0
    %p138 = por %p136, %p137
    %s140 = sadd.s32 %s139, 1
    %p143 = scmp.eq.s32.totalorder %s16, 1
    %p144 = scmp.ne.s32.totalorder %s139, %s141
    %p145 = scmp.eq.s32.totalorder %s16, 0
    %p146 = por %p144, %p145
    %p147 = scmp.ne.s32.totalorder %s139, %s141
    %p148 = scmp.eq.s32.totalorder %s21, 1
    %p149 = por %p147, %p148
    %p150 = scmp.ne.s32.totalorder %s141, %s142
    %p151 = scmp.eq.s32.totalorder %s21, 0
    %p152 = por %p150, %p151
    %p153 = scmp.ne.s32.totalorder %s141, %s142
    %p154 = scmp.eq.s32.totalorder %s22, 1
    %p155 = por %p153, %p154
    %p157 = scmp.ne.s32.totalorder %s142, %s156
    %p158 = scmp.eq.s32.totalorder %s22, 0
    %p159 = por %p157, %p158
    %s161 = sadd.s32 %s160, 1
    %p164 = scmp.eq.s32.totalorder %s16, 1
    %p165 = scmp.ne.s32.totalorder %s160, %s162
    %p166 = scmp.eq.s32.totalorder %s16, 0
    %p167 = por %p165, %p166
    %p168 = scmp.ne.s32.totalorder %s160, %s162
    %p169 = scmp.eq.s32.totalorder %s21, 1
    %p170 = por %p168, %p169
    %p171 = scmp.ne.s32.totalorder %s162, %s163
    %p172 = scmp.eq.s32.totalorder %s21, 0
    %p173 = por %p171, %p172
    %p174 = scmp.ne.s32.totalorder %s162, %s163
    %p175 = scmp.eq.s32.totalorder %s22, 1
    %p176 = por %p174, %p175
    %p178 = scmp.ne.s32.totalorder %s163, %s177
    %p179 = scmp.eq.s32.totalorder %s22, 0
    %p180 = por %p178, %p179
    %s182 = sadd.s32 %s181, 1
    %p185 = scmp.eq.s32.totalorder %s16, 1
    %p186 = scmp.ne.s32.totalorder %s181, %s183
    %p187 = scmp.eq.s32.totalorder %s16, 0
    %p188 = por %p186, %p187
    %p189 = scmp.ne.s32.totalorder %s181, %s183
    %p190 = scmp.eq.s32.totalorder %s21, 1
    %p191 = por %p189, %p190
    %p192 = scmp.ne.s32.totalorder %s183, %s184
    %p193 = scmp.eq.s32.totalorder %s21, 0
    %p194 = por %p192, %p193
    %p195 = scmp.ne.s32.totalorder %s183, %s184
    %p196 = scmp.eq.s32.totalorder %s22, 1
    %p197 = por %p195, %p196
    %p199 = scmp.ne.s32.totalorder %s184, %s198
    %p200 = scmp.eq.s32.totalorder %s22, 0
    %p201 = por %p199, %p200
    %s203 = sadd.s32 %s202, 1
    %p206 = scmp.eq.s32.totalorder %s16, 1
    %p207 = scmp.ne.s32.totalorder %s202, %s204
    %p208 = scmp.eq.s32.totalorder %s16, 0
    %p209 = por %p207, %p208
    %p210 = scmp.ne.s32.totalorder %s202, %s204
    %p211 = scmp.eq.s32.totalorder %s21, 1
    %p212 = por %p210, %p211
    %p213 = scmp.ne.s32.totalorder %s204, %s205
    %p214 = scmp.eq.s32.totalorder %s21, 0
    %p215 = por %p213, %p214
    %p216 = scmp.ne.s32.totalorder %s204, %s205
    %p217 = scmp.eq.s32.totalorder %s22, 1
    %p218 = por %p216, %p217
    %p220 = scmp.ne.s32.totalorder %s205, %s219
    %p221 = scmp.eq.s32.totalorder %s22, 0
    %p222 = por %p220, %p221
    %s224 = sadd.s32 %s223, 1
    %p227 = scmp.eq.s32.totalorder %s16, 1
    %p228 = scmp.ne.s32.totalorder %s223, %s225
    %p229 = scmp.eq.s32.totalorder %s16, 0
    %p230 = por %p228, %p229
    %p231 = scmp.ne.s32.totalorder %s223, %s225
    %p232 = scmp.eq.s32.totalorder %s21, 1
    %p233 = por %p231, %p232
    %p234 = scmp.ne.s32.totalorder %s225, %s226
    %p235 = scmp.eq.s32.totalorder %s21, 0
    %p236 = por %p234, %p235
    %p237 = scmp.ne.s32.totalorder %s225, %s226
    %p238 = scmp.eq.s32.totalorder %s22, 1
    %p239 = por %p237, %p238
    %p241 = scmp.ne.s32.totalorder %s226, %s240
    %p242 = scmp.eq.s32.totalorder %s22, 0
    %p243 = por %p241, %p242
    %s245 = sadd.s32 %s244, 1
    %p248 = scmp.eq.s32.totalorder %s16, 1
    %p249 = scmp.ne.s32.totalorder %s244, %s246
    %p250 = scmp.eq.s32.totalorder %s16, 0
    %p251 = por %p249, %p250
    %p252 = scmp.ne.s32.totalorder %s244, %s246
    %p253 = scmp.eq.s32.totalorder %s21, 1
    %p254 = por %p252, %p253
    %p255 = scmp.ne.s32.totalorder %s246, %s247
    %p256 = scmp.eq.s32.totalorder %s21, 0
    %p257 = por %p255, %p256
    %p258 = scmp.ne.s32.totalorder %s246, %s247
    %p259 = scmp.eq.s32.totalorder %s22, 1
    %p260 = por %p258, %p259
    %p262 = scmp.ne.s32.totalorder %s247, %s261
    %p263 = scmp.eq.s32.totalorder %s22, 0
    %p264 = por %p262, %p263
    %s265 = ssub.s32 %s23, %s35
    %s266 = ssub.s32 %s24, %s31
    %s267 = sor.u32 %s265, %s266
    %p268 = scmp.eq.s32.totalorder %s267, 0
    %s270 = sadd.s32 %s269, 1
    %s271 = scalar_select %p268, %s269, %s270
    %p274 = pneg %p268
    %p275 = scmp.eq.s32.totalorder %s16, 1
    %p276 = por %p274, %p275
    %p277 = scmp.ne.s32.totalorder %s269, %s272
    %p278 = scmp.eq.s32.totalorder %s16, 0
    %p279 = por %p277, %p278
    %p280 = scmp.ne.s32.totalorder %s269, %s272
    %p281 = scmp.eq.s32.totalorder %s21, 1
    %p282 = por %p280, %p281
    %p283 = scmp.ne.s32.totalorder %s272, %s273
    %p284 = scmp.eq.s32.totalorder %s21, 0
    %p285 = por %p283, %p284
    %p286 = scmp.ne.s32.totalorder %s272, %s273
    %p287 = scmp.eq.s32.totalorder %s22, 1
    %p288 = por %p286, %p287
    %p290 = scmp.ne.s32.totalorder %s273, %s289
    %p291 = scmp.eq.s32.totalorder %s22, 0
    %p292 = por %p290, %p291
    %p293 = scmp.le.s32.totalorder 1, %s16
    %p294 = scmp.lt.s32.totalorder %s16, 3
    %p295 = pnand %p293, %p294
    %p296 = pneg %p295
    // Predicated region
    $region9: #{variational_dequantizer_forward.15} parent=5 // pred_check
      _
    $region10: #{variational_dequantizer_forward.15} parent=5 // pred_check_branch
      %298 = sbr.rel (%p295) target = $region12
    $region11: #{variational_dequantizer_forward.15} parent=5 // pred_region
      %s299 = ssub.s32 %s16, 1
      // Predicated region
      $region13: #{variational_dequantizer_forward.15} parent=11 // pred_check
        %p300 = pneg %p131
      $region14: #{variational_dequantizer_forward.15} parent=11 // pred_check_branch
        %302 = sbr.rel (%p300) target = $region16
      $region15: #{variational_dequantizer_forward.15} parent=11 // pred_region
        _
      $region16: #{variational_dequantizer_forward.15} parent=11 // pred_fallthru
        _
      // Predicated region
      $region17: #{variational_dequantizer_forward.15} parent=11 // pred_check
        %p303 = pneg %p152
      $region18: #{variational_dequantizer_forward.15} parent=11 // pred_check_branch
        %305 = sbr.rel (%p303) target = $region20
      $region19: #{variational_dequantizer_forward.15} parent=11 // pred_region
        _
      $region20: #{variational_dequantizer_forward.15} parent=11 // pred_fallthru
        _
      // Predicated region
      $region21: #{variational_dequantizer_forward.15} parent=11 // pred_check
        %p306 = pneg %p173
      $region22: #{variational_dequantizer_forward.15} parent=11 // pred_check_branch
        %308 = sbr.rel (%p306) target = $region24
      $region23: #{variational_dequantizer_forward.15} parent=11 // pred_region
        _
      $region24: #{variational_dequantizer_forward.15} parent=11 // pred_fallthru
        _
      // Predicated region
      $region25: #{variational_dequantizer_forward.15} parent=11 // pred_check
        %p309 = pneg %p194
      $region26: #{variational_dequantizer_forward.15} parent=11 // pred_check_branch
        %311 = sbr.rel (%p309) target = $region28
      $region27: #{variational_dequantizer_forward.15} parent=11 // pred_region
        _
      $region28: #{variational_dequantizer_forward.15} parent=11 // pred_fallthru
        _
      // Predicated region
      $region29: #{variational_dequantizer_forward.15} parent=11 // pred_check
        %p312 = pneg %p215
      $region30: #{variational_dequantizer_forward.15} parent=11 // pred_check_branch
        %314 = sbr.rel (%p312) target = $region32
      $region31: #{variational_dequantizer_forward.15} parent=11 // pred_region
        _
      $region32: #{variational_dequantizer_forward.15} parent=11 // pred_fallthru
        _
      // Predicated region
      $region33: #{variational_dequantizer_forward.15} parent=11 // pred_check
        %p315 = pneg %p236
      $region34: #{variational_dequantizer_forward.15} parent=11 // pred_check_branch
        %317 = sbr.rel (%p315) target = $region36
      $region35: #{variational_dequantizer_forward.15} parent=11 // pred_region
        _
      $region36: #{variational_dequantizer_forward.15} parent=11 // pred_fallthru
        _
      // Predicated region
      $region37: #{variational_dequantizer_forward.15} parent=11 // pred_check
        %p318 = pneg %p257
      $region38: #{variational_dequantizer_forward.15} parent=11 // pred_check_branch
        %320 = sbr.rel (%p318) target = $region40
      $region39: #{variational_dequantizer_forward.15} parent=11 // pred_region
        _
      $region40: #{variational_dequantizer_forward.15} parent=11 // pred_fallthru
        _
    $region12: #{variational_dequantizer_forward.15} parent=5 // pred_fallthru
      _
    %p321 = scmp.lt.s32.totalorder %s16, 2
    // Predicated region
    $region41: #{variational_dequantizer_forward.15} parent=5 // pred_check
      %p322 = pneg %p321
    $region42: #{variational_dequantizer_forward.15} parent=5 // pred_check_branch
      %324 = sbr.rel (%p322) target = $region44
    $region43: #{variational_dequantizer_forward.15} parent=5 // pred_region
      // Predicated region
      $region45: #{variational_dequantizer_forward.15} parent=43 // pred_check
        %p325 = pneg %p50
      $region46: #{variational_dequantizer_forward.15} parent=43 // pred_check_branch
        %327 = sbr.rel (%p325) target = $region48
      $region47: #{variational_dequantizer_forward.15} parent=43 // pred_region
        %p328 = scmp.lt.s32.totalorder %s23, 1
        %s329 = scalar_select %p328, %s23, 1
        %p330 = scmp.lt.s32.totalorder %s24, 0
        %s331 = scalar_select %p330, %s24, 0
        %s332 = sadd.s32 %s331, %s329
        %s333 = smul.addr %s332, 4
        %s334 = scalar_lea.vmem %s0, %s333
      $region48: #{variational_dequantizer_forward.15} parent=43 // pred_fallthru
        _
      // Predicated region
      $region49: #{variational_dequantizer_forward.15} parent=43 // pred_check
        %p335 = pneg %p76
      $region50: #{variational_dequantizer_forward.15} parent=43 // pred_check_branch
        %337 = sbr.rel (%p335) target = $region52
      $region51: #{variational_dequantizer_forward.15} parent=43 // pred_region
        %p338 = scmp.lt.s32.totalorder %s23, 1
        %s339 = scalar_select %p338, %s23, 1
        %s340 = smul.addr %s339, 4
        %s341 = scalar_lea.vmem %s1, %s340
      $region52: #{variational_dequantizer_forward.15} parent=43 // pred_fallthru
        _
      // Predicated region
      $region53: #{variational_dequantizer_forward.15} parent=43 // pred_check
        %p342 = pneg %p104
      $region54: #{variational_dequantizer_forward.15} parent=43 // pred_check_branch
        %344 = sbr.rel (%p342) target = $region56
      $region55: #{variational_dequantizer_forward.15} parent=43 // pred_region
        %s345 = smul.u32 8, %s24
        %p346 = scmp.lt.s32.totalorder %s23, 1
        %s347 = scalar_select %p346, %s23, 1
        %p348 = scmp.lt.s32.totalorder %s345, 7
        %s349 = scalar_select %p348, %s345, 7
        %s350 = smul.addr %s347, 8
        %s351 = sadd.s32 %s349, %s350
        %s352 = smul.addr %s351, 8
        %s353 = scalar_lea.vmem %s2, %s352
        %s354 = smul.u32 8, %s24
      $region56: #{variational_dequantizer_forward.15} parent=43 // pred_fallthru
        _
    $region44: #{variational_dequantizer_forward.15} parent=5 // pred_fallthru
      _
    %p355 = scmp.le.s32.totalorder 1, %s16
    %p356 = scmp.lt.s32.totalorder %s16, 3
    %p357 = pnand %p355, %p356
    %p358 = pneg %p357
    // Predicated region
    $region57: #{variational_dequantizer_forward.15} parent=5 // pred_check
      _
    $region58: #{variational_dequantizer_forward.15} parent=5 // pred_check_branch
      %360 = sbr.rel (%p357) target = $region60
    $region59: #{variational_dequantizer_forward.15} parent=5 // pred_region
      %s361 = ssub.s32 %s16, 1
      %p362 = scmp.lt.s32.totalorder %s25, 1
      %s363 = scalar_select %p362, %s25, 1
      %p364 = scmp.lt.s32.totalorder %s26, 0
      %s365 = scalar_select %p364, %s26, 0
      %s366 = sadd.s32 %s365, %s363
      %s367 = smul.addr %s366, 4
      %s368 = scalar_lea.vmem %s0, %s367
      %p369 = pneg %p56
      %p370 = pneg %p53
      %p371 = scmp.lt.s32.totalorder %s25, 1
      %s372 = scalar_select %p371, %s25, 1
      %s373 = smul.addr %s372, 4
      %s374 = scalar_lea.vmem %s1, %s373
      %p375 = pneg %p82
      %p376 = pneg %p79
      %s377 = smul.u32 8, %s26
      %p378 = scmp.lt.s32.totalorder %s25, 1
      %s379 = scalar_select %p378, %s25, 1
      %p380 = scmp.lt.s32.totalorder %s377, 7
      %s381 = scalar_select %p380, %s377, 7
      %s382 = smul.addr %s379, 8
      %s383 = sadd.s32 %s381, %s382
      %s384 = smul.addr %s383, 8
      %s385 = scalar_lea.vmem %s2, %s384
      %p386 = pneg %p110
      %p387 = pneg %p107
      %p388 = pneg %p131
      %p389 = pneg %p128
      %p390 = pneg %p152
      %p391 = pneg %p149
      %p392 = pneg %p173
      %p393 = pneg %p170
      %p394 = pneg %p194
      %p395 = pneg %p191
      %p396 = pneg %p215
      %p397 = pneg %p212
      %p398 = pneg %p236
      %p399 = pneg %p233
      %p400 = pneg %p257
      %p401 = pneg %p254
      %p402 = pneg %p285
      %p403 = pneg %p282
      %p404 = scmp.lt.s32.totalorder %s25, 1
      %s405 = scalar_select %p404, %s25, 1
      %p406 = scmp.lt.s32.totalorder %s26, 0
      %s407 = scalar_select %p406, %s26, 0
      %s408 = sadd.s32 %s407, %s405
      %s409 = smul.addr %s408, 4
      %s410 = scalar_lea.vmem %s10, %s409
      %p411 = scmp.lt.s32.totalorder %s25, 1
      %s412 = scalar_select %p411, %s25, 1
      %p413 = scmp.lt.s32.totalorder %s26, 0
      %s414 = scalar_select %p413, %s26, 0
      %s415 = sadd.s32 %s414, %s412
      %s416 = smul.addr %s415, 4
      %s417 = scalar_lea.vmem %s0, %s416
      %p418 = scmp.lt.s32.totalorder %s25, 1
      %s419 = scalar_select %p418, %s25, 1
      %s420 = smul.addr %s419, 4
      %s421 = scalar_lea.vmem %s1, %s420
      %s422 = smul.u32 8, %s26
      %p423 = scmp.lt.s32.totalorder %s25, 1
      %s424 = scalar_select %p423, %s25, 1
      %p425 = scmp.lt.s32.totalorder %s422, 7
      %s426 = scalar_select %p425, %s422, 7
      %s427 = smul.addr %s424, 8
      %s428 = sadd.s32 %s426, %s427
      %s429 = smul.addr %s428, 8
      %s430 = scalar_lea.vmem %s2, %s429
      %s431 = smul.u32 8, %s26
      %p432 = scmp.lt.s32.totalorder %s25, 1
      %s433 = scalar_select %p432, %s25, 1
      %p434 = scmp.lt.s32.totalorder %s26, 0
      %s435 = scalar_select %p434, %s26, 0
      %s436 = sadd.s32 %s435, %s433
      %s437 = smul.addr %s436, 4
      %s438 = scalar_lea.vmem %s10, %s437
      %v440 = vld [vmem:[%s417] sm:$0xf]
      %v441 = vld [vmem:[%s421] sm:$0xf]
      %v442 = vld [vmem:[%s3] sm:$0xff]
      %v443 = vld [vmem:[%s3 + $0x8] sm:$0xff]
      %v444 = vld [vmem:[%s3 + $0x10] sm:$0xff]
      %v445 = vld [vmem:[%s3 + $0x18] sm:$0xff]
      %v446 = vld [vmem:[%s3 + $0x20] sm:$0xff]
      %v447 = vld [vmem:[%s3 + $0x28] sm:$0xff]
      %v448 = vld [vmem:[%s3 + $0x30] sm:$0xff]
      %v449 = vld [vmem:[%s3 + $0x38] sm:$0xff]
      %v450 = vpack.c.bf16 %v443, %v442
      %v451 = vpack.c.bf16 %v445, %v444
      %v452 = vpack.c.bf16 %v447, %v446
      %v453 = vpack.c.bf16 %v449, %v448
      %v454 = vld [vmem:[%s5] sm:$0x1]
      %v456 = vperm.slane %v454, 0
      %vm458 = vcmask 523264
      %v460 = vsel %vm458, %v440, 0
      %462 = vmatpush.bf16.msra.mxu0 0
      %463 = vmatpush.bf16.msra.mxu0 0
      %464 = vmatpush.bf16.msra.mxu0 0
      %465 = vmatpush.bf16.msra.mxu0 0
      %466 = vmatpush.bf16.msra.mxu0 %v453
      %467 = vmatpush.bf16.msra.mxu0 %v452
      %468 = vmatpush.bf16.msra.mxu0 %v451
      %469 = vmatpush.bf16.msra.mxu0 %v450
      %470 = vmatmul.bf16.gmra.mxu0 %v460
      %v471 = vpop.f32.mrf.mxu0
      %v472 = vadd.f32 %v456, %v471
      %v473 = vpop.f32.mrf.mxu0
      %474 = vdwg.mxu0
      %v475 = vld [vmem:[%s4] sm:$0xff]
      %v476 = vld [vmem:[%s4 + $0x8] sm:$0xff]
      %v477 = vld [vmem:[%s4 + $0x10] sm:$0xff]
      %v478 = vld [vmem:[%s4 + $0x18] sm:$0xff]
      %v479 = vld [vmem:[%s4 + $0x20] sm:$0xff]
      %v480 = vld [vmem:[%s4 + $0x28] sm:$0xff]
      %v481 = vld [vmem:[%s4 + $0x30] sm:$0xff]
      %v482 = vld [vmem:[%s4 + $0x38] sm:$0xff]
      %v483 = vpack.c.bf16 %v476, %v475
      %v484 = vpack.c.bf16 %v478, %v477
      %v485 = vpack.c.bf16 %v480, %v479
      %v486 = vpack.c.bf16 %v482, %v481
      %v488 = vsel %vm458, %v441, 0
      %490 = vmatpush.bf16.msra.mxu0 0
      %491 = vmatpush.bf16.msra.mxu0 0
      %492 = vmatpush.bf16.msra.mxu0 0
      %493 = vmatpush.bf16.msra.mxu0 0
      %494 = vmatpush.bf16.msra.mxu0 %v486
      %495 = vmatpush.bf16.msra.mxu0 %v485
      %496 = vmatpush.bf16.msra.mxu0 %v484
      %497 = vmatpush.bf16.msra.mxu0 %v483
      %498 = vmatmul.bf16.gmra.mxu0 %v488
      %v499 = vpop.f32.mrf.mxu0
      %v500 = vadd.f32 0.0, %v499
      %v501 = vpop.f32.mrf.mxu0
      %502 = vdwg.mxu0
      %v503 = vld [vmem:[%s430] sm:$0xff]
      %v504 = vld [vmem:[%s430 + $0x8] sm:$0xff]
      %v505 = vld [vmem:[%s430 + $0x10] sm:$0xff]
      %v506 = vld [vmem:[%s430 + $0x18] sm:$0xff]
      %v507 = vld [vmem:[%s430 + $0x20] sm:$0xff]
      %v508 = vld [vmem:[%s430 + $0x28] sm:$0xff]
      %v509 = vld [vmem:[%s430 + $0x30] sm:$0xff]
      %v510 = vld [vmem:[%s430 + $0x38] sm:$0xff]
      %v512 = vrot.slane %v472, 1
      %v513 = vrot.slane %v472, 2
      %v514 = vrot.slane %v472, 3
      %v515 = vrot.slane %v472, 4
      %v516 = vrot.slane %v472, 5
      %v517 = vrot.slane %v472, 6
      %v518 = vrot.slane %v472, 7
      %v519 = vperm.slane %v472, 0
      %v520 = vperm.slane %v512, 0
      %v521 = vperm.slane %v513, 0
      %v522 = vperm.slane %v514, 0
      %v523 = vperm.slane %v515, 0
      %v524 = vperm.slane %v516, 0
      %v525 = vperm.slane %v517, 0
      %v526 = vperm.slane %v518, 0
      %v535 = vadd.f32 %v519, %v500
      %v536 = vadd.f32 %v520, %v500
      %v537 = vadd.f32 %v521, %v500
      %v538 = vadd.f32 %v522, %v500
      %v539 = vadd.f32 %v523, %v500
      %v540 = vadd.f32 %v524, %v500
      %v541 = vadd.f32 %v525, %v500
      %v542 = vadd.f32 %v526, %v500
      %v543 = vld [vmem:[%s6] sm:$0x1]
      %545 = vset.pattern.permute.xlu0 0
      %546 = vperm.xlu0 %545, %v503
      %v547 = vpop.permute.xlu0 %546
      %550 = vset.pattern.permute.xlu0 0
      %551 = vperm.xlu0 %550, %v504
      %v552 = vpop.permute.xlu0 %551
      %555 = vset.pattern.permute.xlu0 0
      %556 = vperm.xlu0 %555, %v505
      %v557 = vpop.permute.xlu0 %556
      %560 = vset.pattern.permute.xlu0 0
      %561 = vperm.xlu0 %560, %v506
      %v562 = vpop.permute.xlu0 %561
      %565 = vset.pattern.permute.xlu0 0
      %566 = vperm.xlu0 %565, %v507
      %v567 = vpop.permute.xlu0 %566
      %570 = vset.pattern.permute.xlu0 0
      %571 = vperm.xlu0 %570, %v508
      %v572 = vpop.permute.xlu0 %571
      %575 = vset.pattern.permute.xlu0 0
      %576 = vperm.xlu0 %575, %v509
      %v577 = vpop.permute.xlu0 %576
      %580 = vset.pattern.permute.xlu0 0
      %581 = vperm.xlu0 %580, %v510
      %v582 = vpop.permute.xlu0 %581
      %v585 = vperm.slane %v543, 0
      %v587 = vmul.f32 %v547, %v585
      %v588 = vmul.f32 %v552, %v585
      %v589 = vmul.f32 %v557, %v585
      %v590 = vmul.f32 %v562, %v585
      %v591 = vmul.f32 %v567, %v585
      %v592 = vmul.f32 %v572, %v585
      %v593 = vmul.f32 %v577, %v585
      %v594 = vmul.f32 %v582, %v585
      %v595 = vadd.f32 %v535, %v587
      %v596 = vadd.f32 %v536, %v588
      %v597 = vadd.f32 %v537, %v589
      %v598 = vadd.f32 %v538, %v590
      %v599 = vadd.f32 %v539, %v591
      %v600 = vadd.f32 %v540, %v592
      %v601 = vadd.f32 %v541, %v593
      %v602 = vadd.f32 %v542, %v594
      %v603 = vld [vmem:[%s7] sm:$0x1]
      %604 = vset.pattern.permute.xlu0 1
      %605 = vperm.xlu0 %604, %v503
      %v606 = vpop.permute.xlu0 %605
      %608 = vset.pattern.permute.xlu0 1
      %609 = vperm.xlu0 %608, %v504
      %v610 = vpop.permute.xlu0 %609
      %612 = vset.pattern.permute.xlu0 1
      %613 = vperm.xlu0 %612, %v505
      %v614 = vpop.permute.xlu0 %613
      %616 = vset.pattern.permute.xlu0 1
      %617 = vperm.xlu0 %616, %v506
      %v618 = vpop.permute.xlu0 %617
      %620 = vset.pattern.permute.xlu0 1
      %621 = vperm.xlu0 %620, %v507
      %v622 = vpop.permute.xlu0 %621
      %624 = vset.pattern.permute.xlu0 1
      %625 = vperm.xlu0 %624, %v508
      %v626 = vpop.permute.xlu0 %625
      %628 = vset.pattern.permute.xlu0 1
      %629 = vperm.xlu0 %628, %v509
      %v630 = vpop.permute.xlu0 %629
      %632 = vset.pattern.permute.xlu0 1
      %633 = vperm.xlu0 %632, %v510
      %v634 = vpop.permute.xlu0 %633
      %v637 = vperm.slane %v603, 0
      %v639 = vmul.f32 %v606, %v637
      %v640 = vmul.f32 %v610, %v637
      %v641 = vmul.f32 %v614, %v637
      %v642 = vmul.f32 %v618, %v637
      %v643 = vmul.f32 %v622, %v637
      %v644 = vmul.f32 %v626, %v637
      %v645 = vmul.f32 %v630, %v637
      %v646 = vmul.f32 %v634, %v637
      %v647 = vadd.f32 %v595, %v639
      %v648 = vadd.f32 %v596, %v640
      %v649 = vadd.f32 %v597, %v641
      %v650 = vadd.f32 %v598, %v642
      %v651 = vadd.f32 %v599, %v643
      %v652 = vadd.f32 %v600, %v644
      %v653 = vadd.f32 %v601, %v645
      %v654 = vadd.f32 %v602, %v646
      %v655 = vsub.f32 0.0, %v647
      %v656 = vsub.f32 0.0, %v648
      %v657 = vsub.f32 0.0, %v649
      %v658 = vsub.f32 0.0, %v650
      %v659 = vsub.f32 0.0, %v651
      %v660 = vsub.f32 0.0, %v652
      %v661 = vsub.f32 0.0, %v653
      %v662 = vsub.f32 0.0, %v654
      %v663 = vmul.f32 %v655, 1.442695
      %v664 = vpow.pop %v663
      %v665 = vmul.f32 %v656, 1.442695
      %v666 = vpow.pop %v665
      %v667 = vmul.f32 %v657, 1.442695
      %v668 = vpow.pop %v667
      %v669 = vmul.f32 %v658, 1.442695
      %v670 = vpow.pop %v669
      %v671 = vmul.f32 %v659, 1.442695
      %v672 = vpow.pop %v671
      %v673 = vmul.f32 %v660, 1.442695
      %v674 = vpow.pop %v673
      %v675 = vmul.f32 %v661, 1.442695
      %v676 = vpow.pop %v675
      %v677 = vmul.f32 %v662, 1.442695
      %v678 = vpow.pop %v677
      %v679 = vadd.f32 %v664, 1.0
      %v680 = vadd.f32 %v666, 1.0
      %v681 = vadd.f32 %v668, 1.0
      %v682 = vadd.f32 %v670, 1.0
      %v683 = vadd.f32 %v672, 1.0
      %v684 = vadd.f32 %v674, 1.0
      %v685 = vadd.f32 %v676, 1.0
      %v686 = vadd.f32 %v678, 1.0
      %v687 = vrcp.pop %v679
      %v688 = vrcp.pop %v680
      %v689 = vrcp.pop %v681
      %v690 = vrcp.pop %v682
      %v691 = vrcp.pop %v683
      %v692 = vrcp.pop %v684
      %v693 = vrcp.pop %v685
      %v694 = vrcp.pop %v686
      %v695 = vmul.f32 %v647, %v687
      %v696 = vmul.f32 %v648, %v688
      %v697 = vmul.f32 %v649, %v689
      %v698 = vmul.f32 %v650, %v690
      %v699 = vmul.f32 %v651, %v691
      %v700 = vmul.f32 %v652, %v692
      %v701 = vmul.f32 %v653, %v693
      %v702 = vmul.f32 %v654, %v694
      %v703 = vpack.c.bf16 %v696, %v695
      %v704 = vpack.c.bf16 %v698, %v697
      %v705 = vpack.c.bf16 %v700, %v699
      %v706 = vpack.c.bf16 %v702, %v701
      %v707 = vld [vmem:[%s8] sm:$0xff]
      %v708 = vld [vmem:[%s8 + $0x8] sm:$0xff]
      %v709 = vld [vmem:[%s8 + $0x10] sm:$0xff]
      %v710 = vld [vmem:[%s8 + $0x18] sm:$0xff]
      %v711 = vld [vmem:[%s8 + $0x20] sm:$0xff]
      %v712 = vld [vmem:[%s8 + $0x28] sm:$0xff]
      %v713 = vld [vmem:[%s8 + $0x30] sm:$0xff]
      %v714 = vld [vmem:[%s8 + $0x38] sm:$0xff]
      %v715 = vpack.c.bf16 %v708, %v707
      %v716 = vpack.c.bf16 %v710, %v709
      %v717 = vpack.c.bf16 %v712, %v711
      %v718 = vpack.c.bf16 %v714, %v713
      %v719 = vld [vmem:[%s9] sm:$0x1]
      %v721 = vperm.slane %v719, 0
      %v724 = vsel %vm458, %v703, 0
      %v727 = vsel %vm458, %v704, 0
      %v730 = vsel %vm458, %v705, 0
      %v733 = vsel %vm458, %v706, 0
      %735 = vmatpush.bf16.msra.mxu0 0
      %736 = vmatpush.bf16.msra.mxu0 0
      %737 = vmatpush.bf16.msra.mxu0 0
      %738 = vmatpush.bf16.msra.mxu0 0
      %739 = vmatpush.bf16.msra.mxu0 %v718
      %740 = vmatpush.bf16.msra.mxu0 %v717
      %741 = vmatpush.bf16.msra.mxu0 %v716
      %742 = vmatpush.bf16.msra.mxu0 %v715
      %743 = vmatmul.bf16.gmra.mxu0 %v724
      %v744 = vpop.f32.mrf.mxu0
      %v745 = vadd.f32 %v721, %v744
      %v746 = vpop.f32.mrf.mxu0
      %v747 = vadd.f32 %v721, %v746
      %748 = vmatmul.bf16.gmra.mxu0 %v727
      %v749 = vpop.f32.mrf.mxu0
      %v750 = vadd.f32 %v721, %v749
      %v751 = vpop.f32.mrf.mxu0
      %v752 = vadd.f32 %v721, %v751
      %753 = vmatmul.bf16.gmra.mxu0 %v730
      %v754 = vpop.f32.mrf.mxu0
      %v755 = vadd.f32 %v721, %v754
      %v756 = vpop.f32.mrf.mxu0
      %v757 = vadd.f32 %v721, %v756
      %758 = vmatmul.bf16.gmra.mxu0 %v733
      %v759 = vpop.f32.mrf.mxu0
      %v760 = vadd.f32 %v721, %v759
      %v761 = vpop.f32.mrf.mxu0
      %v762 = vadd.f32 %v721, %v761
      %763 = vdwg.mxu0
      %v764 = vsub.f32 0.0, %v745
      %v765 = vsub.f32 0.0, %v747
      %v766 = vsub.f32 0.0, %v750
      %v767 = vsub.f32 0.0, %v752
      %v768 = vsub.f32 0.0, %v755
      %v769 = vsub.f32 0.0, %v757
      %v770 = vsub.f32 0.0, %v760
      %v771 = vsub.f32 0.0, %v762
      %v772 = vmul.f32 %v764, 1.442695
      %v773 = vpow.pop %v772
      %v774 = vmul.f32 %v765, 1.442695
      %v775 = vpow.pop %v774
      %v776 = vmul.f32 %v766, 1.442695
      %v777 = vpow.pop %v776
      %v778 = vmul.f32 %v767, 1.442695
      %v779 = vpow.pop %v778
      %v780 = vmul.f32 %v768, 1.442695
      %v781 = vpow.pop %v780
      %v782 = vmul.f32 %v769, 1.442695
      %v783 = vpow.pop %v782
      %v784 = vmul.f32 %v770, 1.442695
      %v785 = vpow.pop %v784
      %v786 = vmul.f32 %v771, 1.442695
      %v787 = vpow.pop %v786
      %v788 = vadd.f32 %v773, 1.0
      %v789 = vadd.f32 %v775, 1.0
      %v790 = vadd.f32 %v777, 1.0
      %v791 = vadd.f32 %v779, 1.0
      %v792 = vadd.f32 %v781, 1.0
      %v793 = vadd.f32 %v783, 1.0
      %v794 = vadd.f32 %v785, 1.0
      %v795 = vadd.f32 %v787, 1.0
      %v796 = vrcp.pop %v788
      %v797 = vrcp.pop %v789
      %v798 = vrcp.pop %v790
      %v799 = vrcp.pop %v791
      %v800 = vrcp.pop %v792
      %v801 = vrcp.pop %v793
      %v802 = vrcp.pop %v794
      %v803 = vrcp.pop %v795
      %v804 = vmul.f32 %v745, %v796
      %v805 = vmul.f32 %v747, %v797
      %v806 = vmul.f32 %v750, %v798
      %v807 = vmul.f32 %v752, %v799
      %v808 = vmul.f32 %v755, %v800
      %v809 = vmul.f32 %v757, %v801
      %v810 = vmul.f32 %v760, %v802
      %v811 = vmul.f32 %v762, %v803
      %812 = vset.pattern.permute.xlu0 2
      %813 = vperm.xlu0 %812, %v503
      %v814 = vpop.permute.xlu0 %813
      %816 = vset.pattern.permute.xlu0 2
      %817 = vperm.xlu0 %816, %v504
      %v818 = vpop.permute.xlu0 %817
      %820 = vset.pattern.permute.xlu0 2
      %821 = vperm.xlu0 %820, %v505
      %v822 = vpop.permute.xlu0 %821
      %824 = vset.pattern.permute.xlu0 2
      %825 = vperm.xlu0 %824, %v506
      %v826 = vpop.permute.xlu0 %825
      %828 = vset.pattern.permute.xlu0 2
      %829 = vperm.xlu0 %828, %v507
      %v830 = vpop.permute.xlu0 %829
      %832 = vset.pattern.permute.xlu0 2
      %833 = vperm.xlu0 %832, %v508
      %v834 = vpop.permute.xlu0 %833
      %836 = vset.pattern.permute.xlu0 2
      %837 = vperm.xlu0 %836, %v509
      %v838 = vpop.permute.xlu0 %837
      %840 = vset.pattern.permute.xlu0 2
      %841 = vperm.xlu0 %840, %v510
      %v842 = vpop.permute.xlu0 %841
      %v844 = vmul.f32 %v804, %v814
      %v845 = vmul.f32 %v805, %v818
      %v846 = vmul.f32 %v806, %v822
      %v847 = vmul.f32 %v807, %v826
      %v848 = vmul.f32 %v808, %v830
      %v849 = vmul.f32 %v809, %v834
      %v850 = vmul.f32 %v810, %v838
      %v851 = vmul.f32 %v811, %v842
      %v852 = vsel %vm458, %v844, 0.0
      %v853 = vrot.slane %v852, 4
      %v854 = vadd.f32 %v852, %v853
      %v855 = vrot.slane %v854, 2
      %v856 = vadd.f32 %v854, %v855
      %v857 = vrot.slane %v856, 1
      %v858 = vadd.f32 %v856, %v857
      %v859 = vsel %vm458, %v845, 0.0
      %v860 = vrot.slane %v859, 4
      %v861 = vadd.f32 %v859, %v860
      %v862 = vrot.slane %v861, 2
      %v863 = vadd.f32 %v861, %v862
      %v864 = vrot.slane %v863, 1
      %v865 = vadd.f32 %v863, %v864
      %v866 = vsel %vm458, %v846, 0.0
      %v867 = vrot.slane %v866, 4
      %v868 = vadd.f32 %v866, %v867
      %v869 = vrot.slane %v868, 2
      %v870 = vadd.f32 %v868, %v869
      %v871 = vrot.slane %v870, 1
      %v872 = vadd.f32 %v870, %v871
      %v873 = vsel %vm458, %v847, 0.0
      %v874 = vrot.slane %v873, 4
      %v875 = vadd.f32 %v873, %v874
      %v876 = vrot.slane %v875, 2
      %v877 = vadd.f32 %v875, %v876
      %v878 = vrot.slane %v877, 1
      %v879 = vadd.f32 %v877, %v878
      %v880 = vsel %vm458, %v848, 0.0
      %v881 = vrot.slane %v880, 4
      %v882 = vadd.f32 %v880, %v881
      %v883 = vrot.slane %v882, 2
      %v884 = vadd.f32 %v882, %v883
      %v885 = vrot.slane %v884, 1
      %v886 = vadd.f32 %v884, %v885
      %v887 = vsel %vm458, %v849, 0.0
      %v888 = vrot.slane %v887, 4
      %v889 = vadd.f32 %v887, %v888
      %v890 = vrot.slane %v889, 2
      %v891 = vadd.f32 %v889, %v890
      %v892 = vrot.slane %v891, 1
      %v893 = vadd.f32 %v891, %v892
      %v894 = vsel %vm458, %v850, 0.0
      %v895 = vrot.slane %v894, 4
      %v896 = vadd.f32 %v894, %v895
      %v897 = vrot.slane %v896, 2
      %v898 = vadd.f32 %v896, %v897
      %v899 = vrot.slane %v898, 1
      %v900 = vadd.f32 %v898, %v899
      %v901 = vsel %vm458, %v851, 0.0
      %v902 = vrot.slane %v901, 4
      %v903 = vadd.f32 %v901, %v902
      %v904 = vrot.slane %v903, 2
      %v905 = vadd.f32 %v903, %v904
      %v906 = vrot.slane %v905, 1
      %v907 = vadd.f32 %v905, %v906
      %v908 = vpack.c.bf16 %v858, %v858
      %v909 = vpack.c.bf16 %v865, %v865
      %v910 = vpack.c.bf16 %v872, %v872
      %v911 = vpack.c.bf16 %v879, %v879
      %v912 = vpack.c.bf16 %v886, %v886
      %v913 = vpack.c.bf16 %v893, %v893
      %v914 = vpack.c.bf16 %v900, %v900
      %v915 = vpack.c.bf16 %v907, %v907
      %v924 = vunpack.c.l.b16 %v908
      %v925 = vunpack.c.l.b16 %v909
      %v926 = vunpack.c.l.b16 %v910
      %v927 = vunpack.c.l.b16 %v911
      %v928 = vunpack.c.l.b16 %v912
      %v929 = vunpack.c.l.b16 %v913
      %v930 = vunpack.c.l.b16 %v914
      %v931 = vunpack.c.l.b16 %v915
      %vm932 = vcmask 1041409
      %v933 = vsel %vm932, %v925, %v924
      %vm934 = vcmask 1042434
      %v935 = vsel %vm934, %v926, %v933
      %vm936 = vcmask 1043459
      %v937 = vsel %vm936, %v927, %v935
      %vm938 = vcmask 1044484
      %v939 = vsel %vm938, %v928, %v937
      %vm940 = vcmask 1045509
      %v941 = vsel %vm940, %v929, %v939
      %vm942 = vcmask 1046534
      %v943 = vsel %vm942, %v930, %v941
      %vm944 = vcmask 1047559
      %v945 = vsel %vm944, %v931, %v943
      %v946 = vpack.c.b16 %v945, %v945
      %vm948 = vcmask 519168
      %949 = vst.msk [vmem:[%s438] sm:$0xf] %vm948, %v946
      %p950 = scmp.lt.s32.totalorder %s25, 1
      %s951 = scalar_select %p950, %s25, 1
      %p952 = scmp.lt.s32.totalorder %s26, 0
      %s953 = scalar_select %p952, %s26, 0
      %s954 = sadd.s32 %s953, %s951
      %s955 = smul.addr %s954, 4
      %s956 = scalar_lea.vmem %s10, %s955
      // Predicated region
      $region61: #{variational_dequantizer_forward.15} parent=59 // pred_check
        %p957 = pneg %p282
      $region62: #{variational_dequantizer_forward.15} parent=59 // pred_check_branch
        %959 = sbr.rel (%p957) target = $region64
      $region63: #{variational_dequantizer_forward.15} parent=59 // pred_region
        _
      $region64: #{variational_dequantizer_forward.15} parent=59 // pred_fallthru
        _
    $region60: #{variational_dequantizer_forward.15} parent=5 // pred_fallthru
      _
    %p960 = scmp.le.s32.totalorder 2, %s16
    // Predicated region
    $region65: #{variational_dequantizer_forward.15} parent=5 // pred_check
      %p961 = pneg %p960
    $region66: #{variational_dequantizer_forward.15} parent=5 // pred_check_branch
      %963 = sbr.rel (%p961) target = $region68
    $region67: #{variational_dequantizer_forward.15} parent=5 // pred_region
      %s964 = ssub.s32 %s16, 2
      // Predicated region
      $region69: #{variational_dequantizer_forward.15} parent=67 // pred_check
        %p965 = pneg %p288
      $region70: #{variational_dequantizer_forward.15} parent=67 // pred_check_branch
        %967 = sbr.rel (%p965) target = $region72
      $region71: #{variational_dequantizer_forward.15} parent=67 // pred_region
        %p968 = scmp.lt.s32.totalorder %s27, 1
        %s969 = scalar_select %p968, %s27, 1
        %p970 = scmp.lt.s32.totalorder %s28, 0
        %s971 = scalar_select %p970, %s28, 0
        %s972 = sadd.s32 %s971, %s969
        %s973 = smul.addr %s972, 4
        %s974 = scalar_lea.vmem %s10, %s973
      $region72: #{variational_dequantizer_forward.15} parent=67 // pred_fallthru
        _
    $region68: #{variational_dequantizer_forward.15} parent=5 // pred_fallthru
      _
  $region6: #{variational_dequantizer_forward.15} parent=0 // loop_footer
    %s20 = sadd.s32 1, %s16
  $region7: #{variational_dequantizer_forward.15} parent=0 // loop_footer_branch
    %15 = sbr.rel target = $region3
  $region8: #{variational_dequantizer_forward.15} parent=0 // loop_exit
    _

// kernel: variational_dequantizer_forward.20
$region0: #{variational_dequantizer_forward.20}
  #allocation0 [shape = 'u32[]', space=smem, size = 0x4, offset = 0x4, fixed_abs, tag = 'smem constant byte address 0x4 - core index']
  #allocation1 [shape = 'u32[72,128]{1,0:T(1,128)}', space=vmem, size = 0x9000, scoped, tag = 'internal scratch']
  %s0 = inlined_call_operand.vmem [shape: bf16[16,64], index: 0, kind: input, shape index: {}]
  %s1 = inlined_call_operand.vmem [shape: bf16[16,64], index: 1, kind: input, shape index: {}]
  %s2 = inlined_call_operand.vmem [shape: f32[64,64], index: 2, kind: input, shape index: {}]
  %s3 = inlined_call_operand.vmem [shape: f32[64,64], index: 3, kind: input, shape index: {}]
  %s4 = inlined_call_operand.vmem [shape: f32[1,64], index: 4, kind: input, shape index: {}]
  %s5 = inlined_call_operand.hbm [shape: f32[64,64], index: 5, kind: input, shape index: {}]
  %s6 = inlined_call_operand.vmem [shape: f32[1,64], index: 6, kind: input, shape index: {}]
  %s7 = inlined_call_operand.vmem [shape: f32[16,1], index: 7, kind: input, shape index: {}]
  %s8 = inlined_call_operand.vmem [shape: bf16[16,64], index: 8, kind: output, shape index: {}]
  %s9 = sld [smem:[#allocation0]]
  $region69: #{variational_dequantizer_forward.20} parent=0
    _
  %s11 = ssub.s32 1, %s9
  %s12 = scalar_select 0, %s11, %s9
  $region1: #{variational_dequantizer_forward.20} parent=0
    #allocation2 [shape = 'u8[32768]{0}', space=vmem, size = 0x8000, scoped, tag = 'input window, operand 5, single buffered']
    #allocation3 [shape = 's32[2]{0}', space=sflag, size = 0x8, scoped, tag = 'scoped memory for variational_dequantizer_forward.20']
    %13 = vsyncpa [#allocation3], 0
    loop: start=0, step=1, limit=4
    $region2: #{variational_dequantizer_forward.20} parent=1 // loop_pre_header
      _
    $region3: #{variational_dequantizer_forward.20} parent=1 // loop_header
      %s15 = sphi 0, %s19
      %p16 = scmp.ge.s32.totalorder %s15, 4
      %s25 = sphi 0, %s27
      %s28 = sphi 0, %s25
      %s29 = sphi 0, %s28
      %s45 = sphi 0, %s29
      %s51 = sphi 0, %s53
      %s54 = sphi 0, %s51
      %s55 = sphi 0, %s54
      %s71 = sphi 0, %s55
      %s75 = sphi 0, %s75
      %s77 = sphi 0, %s75
      %s78 = sphi 0, %s77
      %s92 = sphi 0, %s78
      %s96 = sphi 0, %s96
      %s98 = sphi 0, %s96
      %s99 = sphi 0, %s98
      %s113 = sphi 0, %s99
      %s117 = sphi 0, %s117
      %s119 = sphi 0, %s117
      %s120 = sphi 0, %s119
      %s134 = sphi 0, %s120
      %s138 = sphi 0, %s138
      %s140 = sphi 0, %s138
      %s141 = sphi 0, %s140
      %s155 = sphi 0, %s141
      %s159 = sphi 0, %s159
      %s161 = sphi 0, %s159
      %s162 = sphi 0, %s161
      %s176 = sphi 0, %s162
      %s182 = sphi 0, %s184
      %s185 = sphi 0, %s182
      %s186 = sphi 0, %s185
      %s202 = sphi 0, %s186
      %s208 = sphi 0, %s210
      %s211 = sphi 0, %s208
      %s212 = sphi 0, %s211
      %s228 = sphi 0, %s212
    $region4: #{variational_dequantizer_forward.20} parent=1 // loop_header_branch
      %18 = sbr.rel (%p16) target = $region8
    $region5: #{variational_dequantizer_forward.20} parent=1 // loop_body
      %s20 = ssub.s32 %s15, 1
      %s21 = ssub.s32 %s15, 2
      %s22 = sadd.s32 %s15, 1
      %s23 = ssub.s32 %s15, %s22
      %p24 = scmp.eq.s32.totalorder %s23, 0
      %s26 = sadd.s32 %s25, 1
      %s27 = scalar_select %p24, %s25, %s26
      %p30 = pneg %p24
      %p31 = scmp.eq.s32.totalorder %s15, 1
      %p32 = por %p30, %p31
      %p33 = scmp.ne.s32.totalorder %s25, %s28
      %p34 = scmp.eq.s32.totalorder %s15, 0
      %p35 = por %p33, %p34
      %p36 = scmp.ne.s32.totalorder %s25, %s28
      %p37 = scmp.eq.s32.totalorder %s20, 1
      %p38 = por %p36, %p37
      %p39 = scmp.ne.s32.totalorder %s28, %s29
      %p40 = scmp.eq.s32.totalorder %s20, 0
      %p41 = por %p39, %p40
      %p42 = scmp.ne.s32.totalorder %s28, %s29
      %p43 = scmp.eq.s32.totalorder %s21, 1
      %p44 = por %p42, %p43
      %p46 = scmp.ne.s32.totalorder %s29, %s45
      %p47 = scmp.eq.s32.totalorder %s21, 0
      %p48 = por %p46, %p47
      %s49 = ssub.s32 %s15, %s22
      %p50 = scmp.eq.s32.totalorder %s49, 0
      %s52 = sadd.s32 %s51, 1
      %s53 = scalar_select %p50, %s51, %s52
      %p56 = pneg %p50
      %p57 = scmp.eq.s32.totalorder %s15, 1
      %p58 = por %p56, %p57
      %p59 = scmp.ne.s32.totalorder %s51, %s54
      %p60 = scmp.eq.s32.totalorder %s15, 0
      %p61 = por %p59, %p60
      %p62 = scmp.ne.s32.totalorder %s51, %s54
      %p63 = scmp.eq.s32.totalorder %s20, 1
      %p64 = por %p62, %p63
      %p65 = scmp.ne.s32.totalorder %s54, %s55
      %p66 = scmp.eq.s32.totalorder %s20, 0
      %p67 = por %p65, %p66
      %p68 = scmp.ne.s32.totalorder %s54, %s55
      %p69 = scmp.eq.s32.totalorder %s21, 1
      %p70 = por %p68, %p69
      %p72 = scmp.ne.s32.totalorder %s55, %s71
      %p73 = scmp.eq.s32.totalorder %s21, 0
      %p74 = por %p72, %p73
      %s76 = sadd.s32 %s75, 1
      %p79 = scmp.eq.s32.totalorder %s15, 1
      %p80 = scmp.ne.s32.totalorder %s75, %s77
      %p81 = scmp.eq.s32.totalorder %s15, 0
      %p82 = por %p80, %p81
      %p83 = scmp.ne.s32.totalorder %s75, %s77
      %p84 = scmp.eq.s32.totalorder %s20, 1
      %p85 = por %p83, %p84
      %p86 = scmp.ne.s32.totalorder %s77, %s78
      %p87 = scmp.eq.s32.totalorder %s20, 0
      %p88 = por %p86, %p87
      %p89 = scmp.ne.s32.totalorder %s77, %s78
      %p90 = scmp.eq.s32.totalorder %s21, 1
      %p91 = por %p89, %p90
      %p93 = scmp.ne.s32.totalorder %s78, %s92
      %p94 = scmp.eq.s32.totalorder %s21, 0
      %p95 = por %p93, %p94
      %s97 = sadd.s32 %s96, 1
      %p100 = scmp.eq.s32.totalorder %s15, 1
      %p101 = scmp.ne.s32.totalorder %s96, %s98
      %p102 = scmp.eq.s32.totalorder %s15, 0
      %p103 = por %p101, %p102
      %p104 = scmp.ne.s32.totalorder %s96, %s98
      %p105 = scmp.eq.s32.totalorder %s20, 1
      %p106 = por %p104, %p105
      %p107 = scmp.ne.s32.totalorder %s98, %s99
      %p108 = scmp.eq.s32.totalorder %s20, 0
      %p109 = por %p107, %p108
      %p110 = scmp.ne.s32.totalorder %s98, %s99
      %p111 = scmp.eq.s32.totalorder %s21, 1
      %p112 = por %p110, %p111
      %p114 = scmp.ne.s32.totalorder %s99, %s113
      %p115 = scmp.eq.s32.totalorder %s21, 0
      %p116 = por %p114, %p115
      %s118 = sadd.s32 %s117, 1
      %p121 = scmp.eq.s32.totalorder %s15, 1
      %p122 = scmp.ne.s32.totalorder %s117, %s119
      %p123 = scmp.eq.s32.totalorder %s15, 0
      %p124 = por %p122, %p123
      %p125 = scmp.ne.s32.totalorder %s117, %s119
      %p126 = scmp.eq.s32.totalorder %s20, 1
      %p127 = por %p125, %p126
      %p128 = scmp.ne.s32.totalorder %s119, %s120
      %p129 = scmp.eq.s32.totalorder %s20, 0
      %p130 = por %p128, %p129
      %p131 = scmp.ne.s32.totalorder %s119, %s120
      %p132 = scmp.eq.s32.totalorder %s21, 1
      %p133 = por %p131, %p132
      %p135 = scmp.ne.s32.totalorder %s120, %s134
      %p136 = scmp.eq.s32.totalorder %s21, 0
      %p137 = por %p135, %p136
      %s139 = sadd.s32 %s138, 1
      %p142 = scmp.eq.s32.totalorder %s15, 1
      %p143 = scmp.ne.s32.totalorder %s138, %s140
      %p144 = scmp.eq.s32.totalorder %s15, 0
      %p145 = por %p143, %p144
      %p146 = scmp.ne.s32.totalorder %s138, %s140
      %p147 = scmp.eq.s32.totalorder %s20, 1
      %p148 = por %p146, %p147
      %p149 = scmp.ne.s32.totalorder %s140, %s141
      %p150 = scmp.eq.s32.totalorder %s20, 0
      %p151 = por %p149, %p150
      %p152 = scmp.ne.s32.totalorder %s140, %s141
      %p153 = scmp.eq.s32.totalorder %s21, 1
      %p154 = por %p152, %p153
      %p156 = scmp.ne.s32.totalorder %s141, %s155
      %p157 = scmp.eq.s32.totalorder %s21, 0
      %p158 = por %p156, %p157
      %s160 = sadd.s32 %s159, 1
      %p163 = scmp.eq.s32.totalorder %s15, 1
      %p164 = scmp.ne.s32.totalorder %s159, %s161
      %p165 = scmp.eq.s32.totalorder %s15, 0
      %p166 = por %p164, %p165
      %p167 = scmp.ne.s32.totalorder %s159, %s161
      %p168 = scmp.eq.s32.totalorder %s20, 1
      %p169 = por %p167, %p168
      %p170 = scmp.ne.s32.totalorder %s161, %s162
      %p171 = scmp.eq.s32.totalorder %s20, 0
      %p172 = por %p170, %p171
      %p173 = scmp.ne.s32.totalorder %s161, %s162
      %p174 = scmp.eq.s32.totalorder %s21, 1
      %p175 = por %p173, %p174
      %p177 = scmp.ne.s32.totalorder %s162, %s176
      %p178 = scmp.eq.s32.totalorder %s21, 0
      %p179 = por %p177, %p178
      %s180 = ssub.s32 %s15, %s22
      %p181 = scmp.eq.s32.totalorder %s180, 0
      %s183 = sadd.s32 %s182, 1
      %s184 = scalar_select %p181, %s182, %s183
      %p187 = pneg %p181
      %p188 = scmp.eq.s32.totalorder %s15, 1
      %p189 = por %p187, %p188
      %p190 = scmp.ne.s32.totalorder %s182, %s185
      %p191 = scmp.eq.s32.totalorder %s15, 0
      %p192 = por %p190, %p191
      %p193 = scmp.ne.s32.totalorder %s182, %s185
      %p194 = scmp.eq.s32.totalorder %s20, 1
      %p195 = por %p193, %p194
      %p196 = scmp.ne.s32.totalorder %s185, %s186
      %p197 = scmp.eq.s32.totalorder %s20, 0
      %p198 = por %p196, %p197
      %p199 = scmp.ne.s32.totalorder %s185, %s186
      %p200 = scmp.eq.s32.totalorder %s21, 1
      %p201 = por %p199, %p200
      %p203 = scmp.ne.s32.totalorder %s186, %s202
      %p204 = scmp.eq.s32.totalorder %s21, 0
      %p205 = por %p203, %p204
      %s206 = ssub.s32 %s15, %s22
      %p207 = scmp.eq.s32.totalorder %s206, 0
      %s209 = sadd.s32 %s208, 1
      %s210 = scalar_select %p207, %s208, %s209
      %p213 = pneg %p207
      %p214 = scmp.eq.s32.totalorder %s15, 1
      %p215 = por %p213, %p214
      %p216 = scmp.ne.s32.totalorder %s208, %s211
      %p217 = scmp.eq.s32.totalorder %s15, 0
      %p218 = por %p216, %p217
      %p219 = scmp.ne.s32.totalorder %s208, %s211
      %p220 = scmp.eq.s32.totalorder %s20, 1
      %p221 = por %p219, %p220
      %p222 = scmp.ne.s32.totalorder %s211, %s212
      %p223 = scmp.eq.s32.totalorder %s20, 0
      %p224 = por %p222, %p223
      %p225 = scmp.ne.s32.totalorder %s211, %s212
      %p226 = scmp.eq.s32.totalorder %s21, 1
      %p227 = por %p225, %p226
      %p229 = scmp.ne.s32.totalorder %s212, %s228
      %p230 = scmp.eq.s32.totalorder %s21, 0
      %p231 = por %p229, %p230
      %p232 = scmp.le.s32.totalorder 1, %s15
      %p233 = scmp.lt.s32.totalorder %s15, 3
      %p234 = pnand %p232, %p233
      %p235 = pneg %p234
      // Predicated region
      $region9: #{variational_dequantizer_forward.20} parent=5 // pred_check
        _
      $region10: #{variational_dequantizer_forward.20} parent=5 // pred_check_branch
        %237 = sbr.rel (%p234) target = $region12
      $region11: #{variational_dequantizer_forward.20} parent=5 // pred_region
        %s238 = ssub.s32 %s15, 1
        // Predicated region
        $region13: #{variational_dequantizer_forward.20} parent=11 // pred_check
          %p239 = pneg %p88
        $region14: #{variational_dequantizer_forward.20} parent=11 // pred_check_branch
          %241 = sbr.rel (%p239) target = $region16
        $region15: #{variational_dequantizer_forward.20} parent=11 // pred_region
          _
        $region16: #{variational_dequantizer_forward.20} parent=11 // pred_fallthru
          _
        // Predicated region
        $region17: #{variational_dequantizer_forward.20} parent=11 // pred_check
          %p242 = pneg %p109
        $region18: #{variational_dequantizer_forward.20} parent=11 // pred_check_branch
          %244 = sbr.rel (%p242) target = $region20
        $region19: #{variational_dequantizer_forward.20} parent=11 // pred_region
          _
        $region20: #{variational_dequantizer_forward.20} parent=11 // pred_fallthru
          _
        // Predicated region
        $region21: #{variational_dequantizer_forward.20} parent=11 // pred_check
          %p245 = pneg %p130
        $region22: #{variational_dequantizer_forward.20} parent=11 // pred_check_branch
          %247 = sbr.rel (%p245) target = $region24
        $region23: #{variational_dequantizer_forward.20} parent=11 // pred_region
          _
        $region24: #{variational_dequantizer_forward.20} parent=11 // pred_fallthru
          _
        // Predicated region
        $region25: #{variational_dequantizer_forward.20} parent=11 // pred_check
          %p248 = pneg %p151
        $region26: #{variational_dequantizer_forward.20} parent=11 // pred_check_branch
          %250 = sbr.rel (%p248) target = $region28
        $region27: #{variational_dequantizer_forward.20} parent=11 // pred_region
          %252 = vsyncadd [#allocation3], 0
          %s253 = sshll.u32 %s5, 4
          %s254 = int_to_ptr.hbm [resolvable:$true] %s253
          %s255 = sshll.u32 [#allocation2], 4
          %s256 = int_to_ptr.vmem [resolvable:$true] %s255
          %261 = dma.hbm_to_vmem [thread:$0]  %s254, 1024, %s256, [#allocation3], 128, 128, 8
        $region28: #{variational_dequantizer_forward.20} parent=11 // pred_fallthru
          _
        // Predicated region
        $region29: #{variational_dequantizer_forward.20} parent=11 // pred_check
          %p262 = pneg %p172
        $region30: #{variational_dequantizer_forward.20} parent=11 // pred_check_branch
          %264 = sbr.rel (%p262) target = $region32
        $region31: #{variational_dequantizer_forward.20} parent=11 // pred_region
          _
        $region32: #{variational_dequantizer_forward.20} parent=11 // pred_fallthru
          _
      $region12: #{variational_dequantizer_forward.20} parent=5 // pred_fallthru
        _
      %p265 = scmp.lt.s32.totalorder %s15, 2
      // Predicated region
      $region33: #{variational_dequantizer_forward.20} parent=5 // pred_check
        %p266 = pneg %p265
      $region34: #{variational_dequantizer_forward.20} parent=5 // pred_check_branch
        %268 = sbr.rel (%p266) target = $region36
      $region35: #{variational_dequantizer_forward.20} parent=5 // pred_region
        // Predicated region
        $region37: #{variational_dequantizer_forward.20} parent=35 // pred_check
          %p269 = pneg %p35
        $region38: #{variational_dequantizer_forward.20} parent=35 // pred_check_branch
          %271 = sbr.rel (%p269) target = $region40
        $region39: #{variational_dequantizer_forward.20} parent=35 // pred_region
          %p272 = scmp.lt.s32.totalorder %s15, 1
          %s273 = scalar_select %p272, %s15, 1
          %s274 = smul.addr %s273, 4
          %s275 = scalar_lea.vmem %s0, %s274
        $region40: #{variational_dequantizer_forward.20} parent=35 // pred_fallthru
          _
        // Predicated region
        $region41: #{variational_dequantizer_forward.20} parent=35 // pred_check
          %p276 = pneg %p61
        $region42: #{variational_dequantizer_forward.20} parent=35 // pred_check_branch
          %278 = sbr.rel (%p276) target = $region44
        $region43: #{variational_dequantizer_forward.20} parent=35 // pred_region
          %p279 = scmp.lt.s32.totalorder %s15, 1
          %s280 = scalar_select %p279, %s15, 1
          %s281 = smul.addr %s280, 4
          %s282 = scalar_lea.vmem %s1, %s281
        $region44: #{variational_dequantizer_forward.20} parent=35 // pred_fallthru
          _
        // Predicated region
        $region45: #{variational_dequantizer_forward.20} parent=35 // pred_check
          %p283 = pneg %p192
        $region46: #{variational_dequantizer_forward.20} parent=35 // pred_check_branch
          %285 = sbr.rel (%p283) target = $region48
        $region47: #{variational_dequantizer_forward.20} parent=35 // pred_region
          %p286 = scmp.lt.s32.totalorder %s15, 1
          %s287 = scalar_select %p286, %s15, 1
          %s288 = smul.addr %s287, 8
          %s289 = scalar_lea.vmem %s7, %s288
        $region48: #{variational_dequantizer_forward.20} parent=35 // pred_fallthru
          _
      $region36: #{variational_dequantizer_forward.20} parent=5 // pred_fallthru
        _
      %p290 = scmp.le.s32.totalorder 1, %s15
      %p291 = scmp.lt.s32.totalorder %s15, 3
      %p292 = pnand %p290, %p291
      %p293 = pneg %p292
      // Predicated region
      $region49: #{variational_dequantizer_forward.20} parent=5 // pred_check
        _
      $region50: #{variational_dequantizer_forward.20} parent=5 // pred_check_branch
        %295 = sbr.rel (%p292) target = $region52
      $region51: #{variational_dequantizer_forward.20} parent=5 // pred_region
        %s296 = ssub.s32 %s15, 1
        // Predicated region
        $region53: #{variational_dequantizer_forward.20} parent=51 // pred_check
          %p297 = pneg %p151
        $region54: #{variational_dequantizer_forward.20} parent=51 // pred_check_branch
          %299 = sbr.rel (%p297) target = $region56
        $region55: #{variational_dequantizer_forward.20} parent=51 // pred_region
          %301 = dma.done [#allocation3], 1024
        $region56: #{variational_dequantizer_forward.20} parent=51 // pred_fallthru
          _
        %p302 = scmp.lt.s32.totalorder %s20, 1
        %s303 = scalar_select %p302, %s20, 1
        %s304 = smul.addr %s303, 4
        %s305 = scalar_lea.vmem %s0, %s304
        %p306 = pneg %p41
        %p307 = pneg %p38
        %p308 = scmp.lt.s32.totalorder %s20, 1
        %s309 = scalar_select %p308, %s20, 1
        %s310 = smul.addr %s309, 4
        %s311 = scalar_lea.vmem %s1, %s310
        %p312 = pneg %p67
        %p313 = pneg %p64
        %p314 = pneg %p88
        %p315 = pneg %p85
        %p316 = pneg %p109
        %p317 = pneg %p106
        %p318 = pneg %p130
        %p319 = pneg %p127
        %p320 = pneg %p151
        %p321 = pneg %p148
        %p322 = pneg %p172
        %p323 = pneg %p169
        %p324 = scmp.lt.s32.totalorder %s20, 1
        %s325 = scalar_select %p324, %s20, 1
        %s326 = smul.addr %s325, 8
        %s327 = scalar_lea.vmem %s7, %s326
        %p328 = pneg %p198
        %p329 = pneg %p195
        %p330 = pneg %p224
        %p331 = pneg %p221
        %p332 = scmp.lt.s32.totalorder %s20, 1
        %s333 = scalar_select %p332, %s20, 1
        %s334 = smul.addr %s333, 4
        %s335 = scalar_lea.vmem %s8, %s334
        %p336 = scmp.lt.s32.totalorder %s20, 1
        %s337 = scalar_select %p336, %s20, 1
        %s338 = smul.addr %s337, 4
        %s339 = scalar_lea.vmem %s0, %s338
        %p340 = scmp.lt.s32.totalorder %s20, 1
        %s341 = scalar_select %p340, %s20, 1
        %s342 = smul.addr %s341, 4
        %s343 = scalar_lea.vmem %s1, %s342
        %p344 = scmp.lt.s32.totalorder %s20, 1
        %s345 = scalar_select %p344, %s20, 1
        %s346 = smul.addr %s345, 8
        %s347 = scalar_lea.vmem %s7, %s346
        %p348 = scmp.lt.s32.totalorder %s20, 1
        %s349 = scalar_select %p348, %s20, 1
        %s350 = smul.addr %s349, 4
        %s351 = scalar_lea.vmem %s8, %s350
        %v353 = vld [vmem:[%s339] sm:$0xf]
        %v354 = vld [vmem:[%s2] sm:$0xff]
        %v355 = vld [vmem:[%s2 + $0x8] sm:$0xff]
        %v356 = vld [vmem:[%s2 + $0x10] sm:$0xff]
        %v357 = vld [vmem:[%s2 + $0x18] sm:$0xff]
        %v358 = vld [vmem:[%s2 + $0x20] sm:$0xff]
        %v359 = vld [vmem:[%s2 + $0x28] sm:$0xff]
        %v360 = vld [vmem:[%s2 + $0x30] sm:$0xff]
        %v361 = vld [vmem:[%s2 + $0x38] sm:$0xff]
        %v362 = vpack.c.bf16 %v355, %v354
        %v363 = vpack.c.bf16 %v357, %v356
        %v364 = vpack.c.bf16 %v359, %v358
        %v365 = vpack.c.bf16 %v361, %v360
        %v366 = vld [vmem:[%s343] sm:$0xf]
        %v367 = vld [vmem:[%s3] sm:$0xff]
        %v368 = vld [vmem:[%s3 + $0x8] sm:$0xff]
        %v369 = vld [vmem:[%s3 + $0x10] sm:$0xff]
        %v370 = vld [vmem:[%s3 + $0x18] sm:$0xff]
        %v371 = vld [vmem:[%s3 + $0x20] sm:$0xff]
        %v372 = vld [vmem:[%s3 + $0x28] sm:$0xff]
        %v373 = vld [vmem:[%s3 + $0x30] sm:$0xff]
        %v374 = vld [vmem:[%s3 + $0x38] sm:$0xff]
        %v375 = vpack.c.bf16 %v368, %v367
        %v376 = vpack.c.bf16 %v370, %v369
        %v377 = vpack.c.bf16 %v372, %v371
        %v378 = vpack.c.bf16 %v374, %v373
        %vm379 = vcmask 523264
        %v381 = vsel %vm379, %v366, 0
        %383 = vmatpush.bf16.msra.mxu0 0
        %384 = vmatpush.bf16.msra.mxu0 0
        %385 = vmatpush.bf16.msra.mxu0 0
        %386 = vmatpush.bf16.msra.mxu0 0
        %387 = vmatpush.bf16.msra.mxu0 %v378
        %388 = vmatpush.bf16.msra.mxu0 %v377
        %389 = vmatpush.bf16.msra.mxu0 %v376
        %390 = vmatpush.bf16.msra.mxu0 %v375
        %391 = vmatmul.bf16.gmra.mxu0 %v381
        %v392 = vpop.f32.mrf.mxu0
        %v393 = vadd.f32 0.0, %v392
        %v394 = vpop.f32.mrf.mxu0
        %395 = vdwg.mxu0
        %v397 = vsel %vm379, %v353, 0
        %399 = vmatpush.bf16.msra.mxu0 0
        %400 = vmatpush.bf16.msra.mxu0 0
        %401 = vmatpush.bf16.msra.mxu0 0
        %402 = vmatpush.bf16.msra.mxu0 0
        %403 = vmatpush.bf16.msra.mxu0 %v365
        %404 = vmatpush.bf16.msra.mxu0 %v364
        %405 = vmatpush.bf16.msra.mxu0 %v363
        %406 = vmatpush.bf16.msra.mxu0 %v362
        %407 = vmatmul.bf16.gmra.mxu0 %v397
        %v408 = vpop.f32.mrf.mxu0
        %v409 = vadd.f32 %v393, %v408
        %v410 = vpop.f32.mrf.mxu0
        %411 = vdwg.mxu0
        %v412 = vld [vmem:[%s4] sm:$0x1]
        %v414 = vperm.slane %v412, 0
        %v416 = vadd.f32 %v409, %v414
        %v417 = vsub.f32 0.0, %v416
        %v418 = vmul.f32 %v417, 1.442695
        %v419 = vpow.pop %v418
        %v420 = vadd.f32 %v419, 1.0
        %v421 = vrcp.pop %v420
        %v422 = vmul.f32 %v416, %v421
        %v423 = vpack.c.bf16 %v422, %v422
        %v424 = vld [vmem:[#allocation2] sm:$0xff]
        %v425 = vld [vmem:[#allocation2 + $0x8] sm:$0xff]
        %v426 = vld [vmem:[#allocation2 + $0x10] sm:$0xff]
        %v427 = vld [vmem:[#allocation2 + $0x18] sm:$0xff]
        %v428 = vld [vmem:[#allocation2 + $0x20] sm:$0xff]
        %v429 = vld [vmem:[#allocation2 + $0x28] sm:$0xff]
        %v430 = vld [vmem:[#allocation2 + $0x30] sm:$0xff]
        %v431 = vld [vmem:[#allocation2 + $0x38] sm:$0xff]
        %v432 = vpack.c.bf16 %v425, %v424
        %v433 = vpack.c.bf16 %v427, %v426
        %v434 = vpack.c.bf16 %v429, %v428
        %v435 = vpack.c.bf16 %v431, %v430
        %v436 = vld [vmem:[%s6] sm:$0x1]
        %v438 = vperm.slane %v436, 0
        %v441 = vsel %vm379, %v423, 0
        %443 = vmatpush.bf16.msra.mxu0 0
        %444 = vmatpush.bf16.msra.mxu0 0
        %445 = vmatpush.bf16.msra.mxu0 0
        %446 = vmatpush.bf16.msra.mxu0 0
        %447 = vmatpush.bf16.msra.mxu0 %v435
        %448 = vmatpush.bf16.msra.mxu0 %v434
        %449 = vmatpush.bf16.msra.mxu0 %v433
        %450 = vmatpush.bf16.msra.mxu0 %v432
        %451 = vmatmul.bf16.gmra.mxu0 %v441
        %v452 = vpop.f32.mrf.mxu0
        %v453 = vadd.f32 %v438, %v452
        %v454 = vpop.f32.mrf.mxu0
        %455 = vdwg.mxu0
        %v456 = vunpack.c.l.bf16 %v353
        %v457 = vadd.f32 %v456, %v453
        %v458 = vld [vmem:[%s347] sm:$0xff]
        %460 = vset.pattern.permute.xlu0 0
        %461 = vperm.xlu0 %460, %v458
        %v462 = vpop.permute.xlu0 %461
        %v464 = vmul.f32 %v457, %v462
        %v465 = vpack.c.bf16 %v464, %v464
        %vm466 = vcmask 519168
        %467 = vst.msk [vmem:[%s351] sm:$0xf] %vm466, %v465
        %p468 = scmp.lt.s32.totalorder %s20, 1
        %s469 = scalar_select %p468, %s20, 1
        %s470 = smul.addr %s469, 4
        %s471 = scalar_lea.vmem %s8, %s470
        // Predicated region
        $region57: #{variational_dequantizer_forward.20} parent=51 // pred_check
          %p472 = pneg %p221
        $region58: #{variational_dequantizer_forward.20} parent=51 // pred_check_branch
          %474 = sbr.rel (%p472) target = $region60
        $region59: #{variational_dequantizer_forward.20} parent=51 // pred_region
          _
        $region60: #{variational_dequantizer_forward.20} parent=51 // pred_fallthru
          _
      $region52: #{variational_dequantizer_forward.20} parent=5 // pred_fallthru
        _
      %p475 = scmp.le.s32.totalorder 2, %s15
      // Predicated region
      $region61: #{variational_dequantizer_forward.20} parent=5 // pred_check
        %p476 = pneg %p475
      $region62: #{variational_dequantizer_forward.20} parent=5 // pred_check_branch
        %478 = sbr.rel (%p476) target = $region64
      $region63: #{variational_dequantizer_forward.20} parent=5 // pred_region
        %s479 = ssub.s32 %s15, 2
        // Predicated region
        $region65: #{variational_dequantizer_forward.20} parent=63 // pred_check
          %p480 = pneg %p227
        $region66: #{variational_dequantizer_forward.20} parent=63 // pred_check_branch
          %482 = sbr.rel (%p480) target = $region68
        $region67: #{variational_dequantizer_forward.20} parent=63 // pred_region
          %p483 = scmp.lt.s32.totalorder %s21, 1
          %s484 = scalar_select %p483, %s21, 1
          %s485 = smul.addr %s484, 4
          %s486 = scalar_lea.vmem %s8, %s485
        $region68: #{variational_dequantizer_forward.20} parent=63 // pred_fallthru
          _
      $region64: #{variational_dequantizer_forward.20} parent=5 // pred_fallthru
        _
    $region6: #{variational_dequantizer_forward.20} parent=1 // loop_footer
      %s19 = sadd.s32 1, %s15
    $region7: #{variational_dequantizer_forward.20} parent=1 // loop_footer_branch
      %14 = sbr.rel target = $region3
    $region8: #{variational_dequantizer_forward.20} parent=1 // loop_exit
      _
    %487 = vsyncpa [#allocation3], 1
    %s488 = scalar_lea.sflag [#allocation3], 1
    %489 = vsyncpa %s488, 1

// kernel: variational_dequantizer_forward.23
$region0: #{variational_dequantizer_forward.23}
  #allocation0 [shape = 'u32[]', space=smem, size = 0x4, offset = 0x4, fixed_abs, tag = 'smem constant byte address 0x4 - core index']
  #allocation1 [shape = 'u32[72,128]{1,0:T(1,128)}', space=vmem, size = 0x9000, scoped, tag = 'internal scratch']
  %s0 = inlined_call_operand.vmem [shape: bf16[16,64], index: 0, kind: input, shape index: {}]
  %s1 = inlined_call_operand.vmem [shape: bf16[16,64], index: 1, kind: input, shape index: {}]
  %s2 = inlined_call_operand.hbm [shape: f32[64,64], index: 2, kind: input, shape index: {}]
  %s3 = inlined_call_operand.hbm [shape: f32[64,64], index: 3, kind: input, shape index: {}]
  %s4 = inlined_call_operand.vmem [shape: f32[1,64], index: 4, kind: input, shape index: {}]
  %s5 = inlined_call_operand.hbm [shape: f32[64,64], index: 5, kind: input, shape index: {}]
  %s6 = inlined_call_operand.vmem [shape: f32[1,64], index: 6, kind: input, shape index: {}]
  %s7 = inlined_call_operand.vmem [shape: f32[16,1], index: 7, kind: input, shape index: {}]
  %s8 = inlined_call_operand.vmem [shape: bf16[16,64], index: 8, kind: output, shape index: {}]
  %s9 = sld [smem:[#allocation0]]
  $region77: #{variational_dequantizer_forward.23} parent=0
    _
  %s11 = ssub.s32 1, %s9
  %s12 = scalar_select 0, %s11, %s9
  $region1: #{variational_dequantizer_forward.23} parent=0
    #allocation2 [shape = 'u8[32768]{0}', space=vmem, size = 0x8000, scoped, tag = 'input window, operand 2, single buffered']
    #allocation3 [shape = 's32[2]{0}', space=sflag, size = 0x8, scoped, tag = 'scoped memory for variational_dequantizer_forward.23']
    #allocation4 [shape = 'u8[32768]{0}', space=vmem, size = 0x8000, scoped, tag = 'input window, operand 3, single buffered']
    #allocation5 [shape = 's32[1]{0}', space=sflag, size = 0x4, scoped, tag = 'scoped memory for variational_dequantizer_forward.23']
    #allocation6 [shape = 'u8[32768]{0}', space=vmem, size = 0x8000, scoped, tag = 'input window, operand 5, single buffered']
    %13 = vsyncpa [#allocation3], 0
    %14 = vsyncpa [#allocation5], 0
    loop: start=0, step=1, limit=4
    $region2: #{variational_dequantizer_forward.23} parent=1 // loop_pre_header
      _
    $region3: #{variational_dequantizer_forward.23} parent=1 // loop_header
      %s16 = sphi 0, %s20
      %p17 = scmp.ge.s32.totalorder %s16, 4
      %s26 = sphi 0, %s28
      %s29 = sphi 0, %s26
      %s30 = sphi 0, %s29
      %s46 = sphi 0, %s30
      %s52 = sphi 0, %s54
      %s55 = sphi 0, %s52
      %s56 = sphi 0, %s55
      %s72 = sphi 0, %s56
      %s76 = sphi 0, %s76
      %s78 = sphi 0, %s76
      %s79 = sphi 0, %s78
      %s93 = sphi 0, %s79
      %s97 = sphi 0, %s97
      %s99 = sphi 0, %s97
      %s100 = sphi 0, %s99
      %s114 = sphi 0, %s100
      %s118 = sphi 0, %s118
      %s120 = sphi 0, %s118
      %s121 = sphi 0, %s120
      %s135 = sphi 0, %s121
      %s139 = sphi 0, %s139
      %s141 = sphi 0, %s139
      %s142 = sphi 0, %s141
      %s156 = sphi 0, %s142
      %s160 = sphi 0, %s160
      %s162 = sphi 0, %s160
      %s163 = sphi 0, %s162
      %s177 = sphi 0, %s163
      %s183 = sphi 0, %s185
      %s186 = sphi 0, %s183
      %s187 = sphi 0, %s186
      %s203 = sphi 0, %s187
      %s209 = sphi 0, %s211
      %s212 = sphi 0, %s209
      %s213 = sphi 0, %s212
      %s229 = sphi 0, %s213
    $region4: #{variational_dequantizer_forward.23} parent=1 // loop_header_branch
      %19 = sbr.rel (%p17) target = $region8
    $region5: #{variational_dequantizer_forward.23} parent=1 // loop_body
      %s21 = ssub.s32 %s16, 1
      %s22 = ssub.s32 %s16, 2
      %s23 = sadd.s32 %s16, 1
      %s24 = ssub.s32 %s16, %s23
      %p25 = scmp.eq.s32.totalorder %s24, 0
      %s27 = sadd.s32 %s26, 1
      %s28 = scalar_select %p25, %s26, %s27
      %p31 = pneg %p25
      %p32 = scmp.eq.s32.totalorder %s16, 1
      %p33 = por %p31, %p32
      %p34 = scmp.ne.s32.totalorder %s26, %s29
      %p35 = scmp.eq.s32.totalorder %s16, 0
      %p36 = por %p34, %p35
      %p37 = scmp.ne.s32.totalorder %s26, %s29
      %p38 = scmp.eq.s32.totalorder %s21, 1
      %p39 = por %p37, %p38
      %p40 = scmp.ne.s32.totalorder %s29, %s30
      %p41 = scmp.eq.s32.totalorder %s21, 0
      %p42 = por %p40, %p41
      %p43 = scmp.ne.s32.totalorder %s29, %s30
      %p44 = scmp.eq.s32.totalorder %s22, 1
      %p45 = por %p43, %p44
      %p47 = scmp.ne.s32.totalorder %s30, %s46
      %p48 = scmp.eq.s32.totalorder %s22, 0
      %p49 = por %p47, %p48
      %s50 = ssub.s32 %s16, %s23
      %p51 = scmp.eq.s32.totalorder %s50, 0
      %s53 = sadd.s32 %s52, 1
      %s54 = scalar_select %p51, %s52, %s53
      %p57 = pneg %p51
      %p58 = scmp.eq.s32.totalorder %s16, 1
      %p59 = por %p57, %p58
      %p60 = scmp.ne.s32.totalorder %s52, %s55
      %p61 = scmp.eq.s32.totalorder %s16, 0
      %p62 = por %p60, %p61
      %p63 = scmp.ne.s32.totalorder %s52, %s55
      %p64 = scmp.eq.s32.totalorder %s21, 1
      %p65 = por %p63, %p64
      %p66 = scmp.ne.s32.totalorder %s55, %s56
      %p67 = scmp.eq.s32.totalorder %s21, 0
      %p68 = por %p66, %p67
      %p69 = scmp.ne.s32.totalorder %s55, %s56
      %p70 = scmp.eq.s32.totalorder %s22, 1
      %p71 = por %p69, %p70
      %p73 = scmp.ne.s32.totalorder %s56, %s72
      %p74 = scmp.eq.s32.totalorder %s22, 0
      %p75 = por %p73, %p74
      %s77 = sadd.s32 %s76, 1
      %p80 = scmp.eq.s32.totalorder %s16, 1
      %p81 = scmp.ne.s32.totalorder %s76, %s78
      %p82 = scmp.eq.s32.totalorder %s16, 0
      %p83 = por %p81, %p82
      %p84 = scmp.ne.s32.totalorder %s76, %s78
      %p85 = scmp.eq.s32.totalorder %s21, 1
      %p86 = por %p84, %p85
      %p87 = scmp.ne.s32.totalorder %s78, %s79
      %p88 = scmp.eq.s32.totalorder %s21, 0
      %p89 = por %p87, %p88
      %p90 = scmp.ne.s32.totalorder %s78, %s79
      %p91 = scmp.eq.s32.totalorder %s22, 1
      %p92 = por %p90, %p91
      %p94 = scmp.ne.s32.totalorder %s79, %s93
      %p95 = scmp.eq.s32.totalorder %s22, 0
      %p96 = por %p94, %p95
      %s98 = sadd.s32 %s97, 1
      %p101 = scmp.eq.s32.totalorder %s16, 1
      %p102 = scmp.ne.s32.totalorder %s97, %s99
      %p103 = scmp.eq.s32.totalorder %s16, 0
      %p104 = por %p102, %p103
      %p105 = scmp.ne.s32.totalorder %s97, %s99
      %p106 = scmp.eq.s32.totalorder %s21, 1
      %p107 = por %p105, %p106
      %p108 = scmp.ne.s32.totalorder %s99, %s100
      %p109 = scmp.eq.s32.totalorder %s21, 0
      %p110 = por %p108, %p109
      %p111 = scmp.ne.s32.totalorder %s99, %s100
      %p112 = scmp.eq.s32.totalorder %s22, 1
      %p113 = por %p111, %p112
      %p115 = scmp.ne.s32.totalorder %s100, %s114
      %p116 = scmp.eq.s32.totalorder %s22, 0
      %p117 = por %p115, %p116
      %s119 = sadd.s32 %s118, 1
      %p122 = scmp.eq.s32.totalorder %s16, 1
      %p123 = scmp.ne.s32.totalorder %s118, %s120
      %p124 = scmp.eq.s32.totalorder %s16, 0
      %p125 = por %p123, %p124
      %p126 = scmp.ne.s32.totalorder %s118, %s120
      %p127 = scmp.eq.s32.totalorder %s21, 1
      %p128 = por %p126, %p127
      %p129 = scmp.ne.s32.totalorder %s120, %s121
      %p130 = scmp.eq.s32.totalorder %s21, 0
      %p131 = por %p129, %p130
      %p132 = scmp.ne.s32.totalorder %s120, %s121
      %p133 = scmp.eq.s32.totalorder %s22, 1
      %p134 = por %p132, %p133
      %p136 = scmp.ne.s32.totalorder %s121, %s135
      %p137 = scmp.eq.s32.totalorder %s22, 0
      %p138 = por %p136, %p137
      %s140 = sadd.s32 %s139, 1
      %p143 = scmp.eq.s32.totalorder %s16, 1
      %p144 = scmp.ne.s32.totalorder %s139, %s141
      %p145 = scmp.eq.s32.totalorder %s16, 0
      %p146 = por %p144, %p145
      %p147 = scmp.ne.s32.totalorder %s139, %s141
      %p148 = scmp.eq.s32.totalorder %s21, 1
      %p149 = por %p147, %p148
      %p150 = scmp.ne.s32.totalorder %s141, %s142
      %p151 = scmp.eq.s32.totalorder %s21, 0
      %p152 = por %p150, %p151
      %p153 = scmp.ne.s32.totalorder %s141, %s142
      %p154 = scmp.eq.s32.totalorder %s22, 1
      %p155 = por %p153, %p154
      %p157 = scmp.ne.s32.totalorder %s142, %s156
      %p158 = scmp.eq.s32.totalorder %s22, 0
      %p159 = por %p157, %p158
      %s161 = sadd.s32 %s160, 1
      %p164 = scmp.eq.s32.totalorder %s16, 1
      %p165 = scmp.ne.s32.totalorder %s160, %s162
      %p166 = scmp.eq.s32.totalorder %s16, 0
      %p167 = por %p165, %p166
      %p168 = scmp.ne.s32.totalorder %s160, %s162
      %p169 = scmp.eq.s32.totalorder %s21, 1
      %p170 = por %p168, %p169
      %p171 = scmp.ne.s32.totalorder %s162, %s163
      %p172 = scmp.eq.s32.totalorder %s21, 0
      %p173 = por %p171, %p172
      %p174 = scmp.ne.s32.totalorder %s162, %s163
      %p175 = scmp.eq.s32.totalorder %s22, 1
      %p176 = por %p174, %p175
      %p178 = scmp.ne.s32.totalorder %s163, %s177
      %p179 = scmp.eq.s32.totalorder %s22, 0
      %p180 = por %p178, %p179
      %s181 = ssub.s32 %s16, %s23
      %p182 = scmp.eq.s32.totalorder %s181, 0
      %s184 = sadd.s32 %s183, 1
      %s185 = scalar_select %p182, %s183, %s184
      %p188 = pneg %p182
      %p189 = scmp.eq.s32.totalorder %s16, 1
      %p190 = por %p188, %p189
      %p191 = scmp.ne.s32.totalorder %s183, %s186
      %p192 = scmp.eq.s32.totalorder %s16, 0
      %p193 = por %p191, %p192
      %p194 = scmp.ne.s32.totalorder %s183, %s186
      %p195 = scmp.eq.s32.totalorder %s21, 1
      %p196 = por %p194, %p195
      %p197 = scmp.ne.s32.totalorder %s186, %s187
      %p198 = scmp.eq.s32.totalorder %s21, 0
      %p199 = por %p197, %p198
      %p200 = scmp.ne.s32.totalorder %s186, %s187
      %p201 = scmp.eq.s32.totalorder %s22, 1
      %p202 = por %p200, %p201
      %p204 = scmp.ne.s32.totalorder %s187, %s203
      %p205 = scmp.eq.s32.totalorder %s22, 0
      %p206 = por %p204, %p205
      %s207 = ssub.s32 %s16, %s23
      %p208 = scmp.eq.s32.totalorder %s207, 0
      %s210 = sadd.s32 %s209, 1
      %s211 = scalar_select %p208, %s209, %s210
      %p214 = pneg %p208
      %p215 = scmp.eq.s32.totalorder %s16, 1
      %p216 = por %p214, %p215
      %p217 = scmp.ne.s32.totalorder %s209, %s212
      %p218 = scmp.eq.s32.totalorder %s16, 0
      %p219 = por %p217, %p218
      %p220 = scmp.ne.s32.totalorder %s209, %s212
      %p221 = scmp.eq.s32.totalorder %s21, 1
      %p222 = por %p220, %p221
      %p223 = scmp.ne.s32.totalorder %s212, %s213
      %p224 = scmp.eq.s32.totalorder %s21, 0
      %p225 = por %p223, %p224
      %p226 = scmp.ne.s32.totalorder %s212, %s213
      %p227 = scmp.eq.s32.totalorder %s22, 1
      %p228 = por %p226, %p227
      %p230 = scmp.ne.s32.totalorder %s213, %s229
      %p231 = scmp.eq.s32.totalorder %s22, 0
      %p232 = por %p230, %p231
      %p233 = scmp.le.s32.totalorder 1, %s16
      %p234 = scmp.lt.s32.totalorder %s16, 3
      %p235 = pnand %p233, %p234
      %p236 = pneg %p235
      // Predicated region
      $region9: #{variational_dequantizer_forward.23} parent=5 // pred_check
        _
      $region10: #{variational_dequantizer_forward.23} parent=5 // pred_check_branch
        %238 = sbr.rel (%p235) target = $region12
      $region11: #{variational_dequantizer_forward.23} parent=5 // pred_region
        %s239 = ssub.s32 %s16, 1
        // Predicated region
        $region13: #{variational_dequantizer_forward.23} parent=11 // pred_check
          %p240 = pneg %p89
        $region14: #{variational_dequantizer_forward.23} parent=11 // pred_check_branch
          %242 = sbr.rel (%p240) target = $region16
        $region15: #{variational_dequantizer_forward.23} parent=11 // pred_region
          %244 = vsyncadd [#allocation3], 0
          %s245 = sshll.u32 %s2, 4
          %s246 = int_to_ptr.hbm [resolvable:$true] %s245
          %s247 = sshll.u32 [#allocation2], 4
          %s248 = int_to_ptr.vmem [resolvable:$true] %s247
          %253 = dma.hbm_to_vmem [thread:$0]  %s246, 1024, %s248, [#allocation3], 128, 128, 8
        $region16: #{variational_dequantizer_forward.23} parent=11 // pred_fallthru
          _
        // Predicated region
        $region17: #{variational_dequantizer_forward.23} parent=11 // pred_check
          %p254 = pneg %p110
        $region18: #{variational_dequantizer_forward.23} parent=11 // pred_check_branch
          %256 = sbr.rel (%p254) target = $region20
        $region19: #{variational_dequantizer_forward.23} parent=11 // pred_region
          %258 = vsyncadd [#allocation5], 0
          %s259 = sshll.u32 %s3, 4
          %s260 = int_to_ptr.hbm [resolvable:$true] %s259
          %s261 = sshll.u32 [#allocation4], 4
          %s262 = int_to_ptr.vmem [resolvable:$true] %s261
          %267 = dma.hbm_to_vmem [thread:$0]  %s260, 1024, %s262, [#allocation5], 128, 128, 8
        $region20: #{variational_dequantizer_forward.23} parent=11 // pred_fallthru
          _
        // Predicated region
        $region21: #{variational_dequantizer_forward.23} parent=11 // pred_check
          %p268 = pneg %p131
        $region22: #{variational_dequantizer_forward.23} parent=11 // pred_check_branch
          %270 = sbr.rel (%p268) target = $region24
        $region23: #{variational_dequantizer_forward.23} parent=11 // pred_region
          _
        $region24: #{variational_dequantizer_forward.23} parent=11 // pred_fallthru
          _
        // Predicated region
        $region25: #{variational_dequantizer_forward.23} parent=11 // pred_check
          %p271 = pneg %p152
        $region26: #{variational_dequantizer_forward.23} parent=11 // pred_check_branch
          %273 = sbr.rel (%p271) target = $region28
        $region27: #{variational_dequantizer_forward.23} parent=11 // pred_region
          %275 = vsyncadd [#allocation5], 0
          %s276 = sshll.u32 %s5, 4
          %s277 = int_to_ptr.hbm [resolvable:$true] %s276
          %s278 = sshll.u32 [#allocation6], 4
          %s279 = int_to_ptr.vmem [resolvable:$true] %s278
          %284 = dma.hbm_to_vmem [thread:$0]  %s277, 1024, %s279, [#allocation5], 128, 128, 8
        $region28: #{variational_dequantizer_forward.23} parent=11 // pred_fallthru
          _
        // Predicated region
        $region29: #{variational_dequantizer_forward.23} parent=11 // pred_check
          %p285 = pneg %p173
        $region30: #{variational_dequantizer_forward.23} parent=11 // pred_check_branch
          %287 = sbr.rel (%p285) target = $region32
        $region31: #{variational_dequantizer_forward.23} parent=11 // pred_region
          _
        $region32: #{variational_dequantizer_forward.23} parent=11 // pred_fallthru
          _
      $region12: #{variational_dequantizer_forward.23} parent=5 // pred_fallthru
        _
      %p288 = scmp.lt.s32.totalorder %s16, 2
      // Predicated region
      $region33: #{variational_dequantizer_forward.23} parent=5 // pred_check
        %p289 = pneg %p288
      $region34: #{variational_dequantizer_forward.23} parent=5 // pred_check_branch
        %291 = sbr.rel (%p289) target = $region36
      $region35: #{variational_dequantizer_forward.23} parent=5 // pred_region
        // Predicated region
        $region37: #{variational_dequantizer_forward.23} parent=35 // pred_check
          %p292 = pneg %p36
        $region38: #{variational_dequantizer_forward.23} parent=35 // pred_check_branch
          %294 = sbr.rel (%p292) target = $region40
        $region39: #{variational_dequantizer_forward.23} parent=35 // pred_region
          %p295 = scmp.lt.s32.totalorder %s16, 1
          %s296 = scalar_select %p295, %s16, 1
          %s297 = smul.addr %s296, 4
          %s298 = scalar_lea.vmem %s0, %s297
        $region40: #{variational_dequantizer_forward.23} parent=35 // pred_fallthru
          _
        // Predicated region
        $region41: #{variational_dequantizer_forward.23} parent=35 // pred_check
          %p299 = pneg %p62
        $region42: #{variational_dequantizer_forward.23} parent=35 // pred_check_branch
          %301 = sbr.rel (%p299) target = $region44
        $region43: #{variational_dequantizer_forward.23} parent=35 // pred_region
          %p302 = scmp.lt.s32.totalorder %s16, 1
          %s303 = scalar_select %p302, %s16, 1
          %s304 = smul.addr %s303, 4
          %s305 = scalar_lea.vmem %s1, %s304
        $region44: #{variational_dequantizer_forward.23} parent=35 // pred_fallthru
          _
        // Predicated region
        $region45: #{variational_dequantizer_forward.23} parent=35 // pred_check
          %p306 = pneg %p193
        $region46: #{variational_dequantizer_forward.23} parent=35 // pred_check_branch
          %308 = sbr.rel (%p306) target = $region48
        $region47: #{variational_dequantizer_forward.23} parent=35 // pred_region
          %p309 = scmp.lt.s32.totalorder %s16, 1
          %s310 = scalar_select %p309, %s16, 1
          %s311 = smul.addr %s310, 8
          %s312 = scalar_lea.vmem %s7, %s311
        $region48: #{variational_dequantizer_forward.23} parent=35 // pred_fallthru
          _
      $region36: #{variational_dequantizer_forward.23} parent=5 // pred_fallthru
        _
      %p313 = scmp.le.s32.totalorder 1, %s16
      %p314 = scmp.lt.s32.totalorder %s16, 3
      %p315 = pnand %p313, %p314
      %p316 = pneg %p315
      // Predicated region
      $region49: #{variational_dequantizer_forward.23} parent=5 // pred_check
        _
      $region50: #{variational_dequantizer_forward.23} parent=5 // pred_check_branch
        %318 = sbr.rel (%p315) target = $region52
      $region51: #{variational_dequantizer_forward.23} parent=5 // pred_region
        %s319 = ssub.s32 %s16, 1
        // Predicated region
        $region53: #{variational_dequantizer_forward.23} parent=51 // pred_check
          %p320 = pneg %p89
        $region54: #{variational_dequantizer_forward.23} parent=51 // pred_check_branch
          %322 = sbr.rel (%p320) target = $region56
        $region55: #{variational_dequantizer_forward.23} parent=51 // pred_region
          %324 = dma.done [#allocation3], 1024
        $region56: #{variational_dequantizer_forward.23} parent=51 // pred_fallthru
          _
        // Predicated region
        $region57: #{variational_dequantizer_forward.23} parent=51 // pred_check
          %p325 = pneg %p110
        $region58: #{variational_dequantizer_forward.23} parent=51 // pred_check_branch
          %327 = sbr.rel (%p325) target = $region60
        $region59: #{variational_dequantizer_forward.23} parent=51 // pred_region
          %329 = dma.done [#allocation5], 1024
        $region60: #{variational_dequantizer_forward.23} parent=51 // pred_fallthru
          _
        // Predicated region
        $region61: #{variational_dequantizer_forward.23} parent=51 // pred_check
          %p330 = pneg %p152
        $region62: #{variational_dequantizer_forward.23} parent=51 // pred_check_branch
          %332 = sbr.rel (%p330) target = $region64
        $region63: #{variational_dequantizer_forward.23} parent=51 // pred_region
          %334 = dma.done [#allocation5], 1024
        $region64: #{variational_dequantizer_forward.23} parent=51 // pred_fallthru
          _
        %p335 = scmp.lt.s32.totalorder %s21, 1
        %s336 = scalar_select %p335, %s21, 1
        %s337 = smul.addr %s336, 4
        %s338 = scalar_lea.vmem %s0, %s337
        %p339 = pneg %p42
        %p340 = pneg %p39
        %p341 = scmp.lt.s32.totalorder %s21, 1
        %s342 = scalar_select %p341, %s21, 1
        %s343 = smul.addr %s342, 4
        %s344 = scalar_lea.vmem %s1, %s343
        %p345 = pneg %p68
        %p346 = pneg %p65
        %p347 = pneg %p89
        %p348 = pneg %p86
        %p349 = pneg %p110
        %p350 = pneg %p107
        %p351 = pneg %p131
        %p352 = pneg %p128
        %p353 = pneg %p152
        %p354 = pneg %p149
        %p355 = pneg %p173
        %p356 = pneg %p170
        %p357 = scmp.lt.s32.totalorder %s21, 1
        %s358 = scalar_select %p357, %s21, 1
        %s359 = smul.addr %s358, 8
        %s360 = scalar_lea.vmem %s7, %s359
        %p361 = pneg %p199
        %p362 = pneg %p196
        %p363 = pneg %p225
        %p364 = pneg %p222
        %p365 = scmp.lt.s32.totalorder %s21, 1
        %s366 = scalar_select %p365, %s21, 1
        %s367 = smul.addr %s366, 4
        %s368 = scalar_lea.vmem %s8, %s367
        %p369 = scmp.lt.s32.totalorder %s21, 1
        %s370 = scalar_select %p369, %s21, 1
        %s371 = smul.addr %s370, 4
        %s372 = scalar_lea.vmem %s0, %s371
        %p373 = scmp.lt.s32.totalorder %s21, 1
        %s374 = scalar_select %p373, %s21, 1
        %s375 = smul.addr %s374, 4
        %s376 = scalar_lea.vmem %s1, %s375
        %p377 = scmp.lt.s32.totalorder %s21, 1
        %s378 = scalar_select %p377, %s21, 1
        %s379 = smul.addr %s378, 8
        %s380 = scalar_lea.vmem %s7, %s379
        %p381 = scmp.lt.s32.totalorder %s21, 1
        %s382 = scalar_select %p381, %s21, 1
        %s383 = smul.addr %s382, 4
        %s384 = scalar_lea.vmem %s8, %s383
        %v386 = vld [vmem:[%s372] sm:$0xf]
        %v387 = vld [vmem:[#allocation2] sm:$0xff]
        %v388 = vld [vmem:[#allocation2 + $0x8] sm:$0xff]
        %v389 = vld [vmem:[#allocation2 + $0x10] sm:$0xff]
        %v390 = vld [vmem:[#allocation2 + $0x18] sm:$0xff]
        %v391 = vld [vmem:[#allocation2 + $0x20] sm:$0xff]
        %v392 = vld [vmem:[#allocation2 + $0x28] sm:$0xff]
        %v393 = vld [vmem:[#allocation2 + $0x30] sm:$0xff]
        %v394 = vld [vmem:[#allocation2 + $0x38] sm:$0xff]
        %v395 = vpack.c.bf16 %v388, %v387
        %v396 = vpack.c.bf16 %v390, %v389
        %v397 = vpack.c.bf16 %v392, %v391
        %v398 = vpack.c.bf16 %v394, %v393
        %v399 = vld [vmem:[%s376] sm:$0xf]
        %v400 = vld [vmem:[#allocation4] sm:$0xff]
        %v401 = vld [vmem:[#allocation4 + $0x8] sm:$0xff]
        %v402 = vld [vmem:[#allocation4 + $0x10] sm:$0xff]
        %v403 = vld [vmem:[#allocation4 + $0x18] sm:$0xff]
        %v404 = vld [vmem:[#allocation4 + $0x20] sm:$0xff]
        %v405 = vld [vmem:[#allocation4 + $0x28] sm:$0xff]
        %v406 = vld [vmem:[#allocation4 + $0x30] sm:$0xff]
        %v407 = vld [vmem:[#allocation4 + $0x38] sm:$0xff]
        %v408 = vpack.c.bf16 %v401, %v400
        %v409 = vpack.c.bf16 %v403, %v402
        %v410 = vpack.c.bf16 %v405, %v404
        %v411 = vpack.c.bf16 %v407, %v406
        %vm412 = vcmask 523264
        %v414 = vsel %vm412, %v399, 0
        %416 = vmatpush.bf16.msra.mxu0 0
        %417 = vmatpush.bf16.msra.mxu0 0
        %418 = vmatpush.bf16.msra.mxu0 0
        %419 = vmatpush.bf16.msra.mxu0 0
        %420 = vmatpush.bf16.msra.mxu0 %v411
        %421 = vmatpush.bf16.msra.mxu0 %v410
        %422 = vmatpush.bf16.msra.mxu0 %v409
        %423 = vmatpush.bf16.msra.mxu0 %v408
        %424 = vmatmul.bf16.gmra.mxu0 %v414
        %v425 = vpop.f32.mrf.mxu0
        %v426 = vadd.f32 0.0, %v425
        %v427 = vpop.f32.mrf.mxu0
        %428 = vdwg.mxu0
        %v430 = vsel %vm412, %v386, 0
        %432 = vmatpush.bf16.msra.mxu0 0
        %433 = vmatpush.bf16.msra.mxu0 0
        %434 = vmatpush.bf16.msra.mxu0 0
        %435 = vmatpush.bf16.msra.mxu0 0
        %436 = vmatpush.bf16.msra.mxu0 %v398
        %437 = vmatpush.bf16.msra.mxu0 %v397
        %438 = vmatpush.bf16.msra.mxu0 %v396
        %439 = vmatpush.bf16.msra.mxu0 %v395
        %440 = vmatmul.bf16.gmra.mxu0 %v430
        %v441 = vpop.f32.mrf.mxu0
        %v442 = vadd.f32 %v426, %v441
        %v443 = vpop.f32.mrf.mxu0
        %444 = vdwg.mxu0
        %v445 = vld [vmem:[%s4] sm:$0x1]
        %v447 = vperm.slane %v445, 0
        %v449 = vadd.f32 %v442, %v447
        %v450 = vsub.f32 0.0, %v449
        %v451 = vmul.f32 %v450, 1.442695
        %v452 = vpow.pop %v451
        %v453 = vadd.f32 %v452, 1.0
        %v454 = vrcp.pop %v453
        %v455 = vmul.f32 %v449, %v454
        %v456 = vpack.c.bf16 %v455, %v455
        %v457 = vld [vmem:[#allocation6] sm:$0xff]
        %v458 = vld [vmem:[#allocation6 + $0x8] sm:$0xff]
        %v459 = vld [vmem:[#allocation6 + $0x10] sm:$0xff]
        %v460 = vld [vmem:[#allocation6 + $0x18] sm:$0xff]
        %v461 = vld [vmem:[#allocation6 + $0x20] sm:$0xff]
        %v462 = vld [vmem:[#allocation6 + $0x28] sm:$0xff]
        %v463 = vld [vmem:[#allocation6 + $0x30] sm:$0xff]
        %v464 = vld [vmem:[#allocation6 + $0x38] sm:$0xff]
        %v465 = vpack.c.bf16 %v458, %v457
        %v466 = vpack.c.bf16 %v460, %v459
        %v467 = vpack.c.bf16 %v462, %v461
        %v468 = vpack.c.bf16 %v464, %v463
        %v469 = vld [vmem:[%s6] sm:$0x1]
        %v471 = vperm.slane %v469, 0
        %v474 = vsel %vm412, %v456, 0
        %476 = vmatpush.bf16.msra.mxu0 0
        %477 = vmatpush.bf16.msra.mxu0 0
        %478 = vmatpush.bf16.msra.mxu0 0
        %479 = vmatpush.bf16.msra.mxu0 0
        %480 = vmatpush.bf16.msra.mxu0 %v468
        %481 = vmatpush.bf16.msra.mxu0 %v467
        %482 = vmatpush.bf16.msra.mxu0 %v466
        %483 = vmatpush.bf16.msra.mxu0 %v465
        %484 = vmatmul.bf16.gmra.mxu0 %v474
        %v485 = vpop.f32.mrf.mxu0
        %v486 = vadd.f32 %v471, %v485
        %v487 = vpop.f32.mrf.mxu0
        %488 = vdwg.mxu0
        %v489 = vunpack.c.l.bf16 %v386
        %v490 = vadd.f32 %v489, %v486
        %v491 = vld [vmem:[%s380] sm:$0xff]
        %493 = vset.pattern.permute.xlu0 0
        %494 = vperm.xlu0 %493, %v491
        %v495 = vpop.permute.xlu0 %494
        %v497 = vmul.f32 %v490, %v495
        %v498 = vpack.c.bf16 %v497, %v497
        %vm499 = vcmask 519168
        %500 = vst.msk [vmem:[%s384] sm:$0xf] %vm499, %v498
        %p501 = scmp.lt.s32.totalorder %s21, 1
        %s502 = scalar_select %p501, %s21, 1
        %s503 = smul.addr %s502, 4
        %s504 = scalar_lea.vmem %s8, %s503
        // Predicated region
        $region65: #{variational_dequantizer_forward.23} parent=51 // pred_check
          %p505 = pneg %p222
        $region66: #{variational_dequantizer_forward.23} parent=51 // pred_check_branch
          %507 = sbr.rel (%p505) target = $region68
        $region67: #{variational_dequantizer_forward.23} parent=51 // pred_region
          _
        $region68: #{variational_dequantizer_forward.23} parent=51 // pred_fallthru
          _
      $region52: #{variational_dequantizer_forward.23} parent=5 // pred_fallthru
        _
      %p508 = scmp.le.s32.totalorder 2, %s16
      // Predicated region
      $region69: #{variational_dequantizer_forward.23} parent=5 // pred_check
        %p509 = pneg %p508
      $region70: #{variational_dequantizer_forward.23} parent=5 // pred_check_branch
        %511 = sbr.rel (%p509) target = $region72
      $region71: #{variational_dequantizer_forward.23} parent=5 // pred_region
        %s512 = ssub.s32 %s16, 2
        // Predicated region
        $region73: #{variational_dequantizer_forward.23} parent=71 // pred_check
          %p513 = pneg %p228
        $region74: #{variational_dequantizer_forward.23} parent=71 // pred_check_branch
          %515 = sbr.rel (%p513) target = $region76
        $region75: #{variational_dequantizer_forward.23} parent=71 // pred_region
          %p516 = scmp.lt.s32.totalorder %s22, 1
          %s517 = scalar_select %p516, %s22, 1
          %s518 = smul.addr %s517, 4
          %s519 = scalar_lea.vmem %s8, %s518
        $region76: #{variational_dequantizer_forward.23} parent=71 // pred_fallthru
          _
      $region72: #{variational_dequantizer_forward.23} parent=5 // pred_fallthru
        _
    $region6: #{variational_dequantizer_forward.23} parent=1 // loop_footer
      %s20 = sadd.s32 1, %s16
    $region7: #{variational_dequantizer_forward.23} parent=1 // loop_footer_branch
      %15 = sbr.rel target = $region3
    $region8: #{variational_dequantizer_forward.23} parent=1 // loop_exit
      _
    %520 = vsyncpa [#allocation3], 1
    %s521 = scalar_lea.sflag [#allocation3], 1
    %522 = vsyncpa %s521, 1
    %523 = vsyncpa [#allocation5], 1

// kernel: variational_dequantizer_forward.24
$region0: #{variational_dequantizer_forward.24}
  #allocation0 [shape = 'u32[]', space=smem, size = 0x4, offset = 0x4, fixed_abs, tag = 'smem constant byte address 0x4 - core index']
  #allocation1 [shape = 'u32[72,128]{1,0:T(1,128)}', space=vmem, size = 0x9000, scoped, tag = 'internal scratch']
  %s0 = inlined_call_operand.vmem [shape: bf16[16,64], index: 0, kind: input, shape index: {}]
  %s1 = inlined_call_operand.vmem [shape: f32[64,4], index: 1, kind: input, shape index: {}]
  %s2 = inlined_call_operand.vmem [shape: f32[1,4], index: 2, kind: input, shape index: {}]
  %s3 = inlined_call_operand.vmem [shape: f32[16,1], index: 3, kind: input, shape index: {}]
  %s4 = inlined_call_operand.vmem [shape: f32[16,4], index: 4, kind: output, shape index: {}]
  %s5 = sld [smem:[#allocation0]]
  $region49: #{variational_dequantizer_forward.24} parent=0
    _
  %s7 = ssub.s32 1, %s5
  %s8 = scalar_select 0, %s7, %s5
  loop: start=0, step=1, limit=4
  $region2: #{variational_dequantizer_forward.24} parent=0 // loop_pre_header
    _
  $region3: #{variational_dequantizer_forward.24} parent=0 // loop_header
    %s10 = sphi 0, %s14
    %p11 = scmp.ge.s32.totalorder %s10, 4
    %s20 = sphi 0, %s22
    %s23 = sphi 0, %s20
    %s24 = sphi 0, %s23
    %s40 = sphi 0, %s24
    %s44 = sphi 0, %s44
    %s46 = sphi 0, %s44
    %s47 = sphi 0, %s46
    %s61 = sphi 0, %s47
    %s65 = sphi 0, %s65
    %s67 = sphi 0, %s65
    %s68 = sphi 0, %s67
    %s82 = sphi 0, %s68
    %s88 = sphi 0, %s90
    %s91 = sphi 0, %s88
    %s92 = sphi 0, %s91
    %s108 = sphi 0, %s92
    %s114 = sphi 0, %s116
    %s117 = sphi 0, %s114
    %s118 = sphi 0, %s117
    %s134 = sphi 0, %s118
  $region4: #{variational_dequantizer_forward.24} parent=0 // loop_header_branch
    %13 = sbr.rel (%p11) target = $region8
  $region5: #{variational_dequantizer_forward.24} parent=0 // loop_body
    %s15 = ssub.s32 %s10, 1
    %s16 = ssub.s32 %s10, 2
    %s17 = sadd.s32 %s10, 1
    %s18 = ssub.s32 %s10, %s17
    %p19 = scmp.eq.s32.totalorder %s18, 0
    %s21 = sadd.s32 %s20, 1
    %s22 = scalar_select %p19, %s20, %s21
    %p25 = pneg %p19
    %p26 = scmp.eq.s32.totalorder %s10, 1
    %p27 = por %p25, %p26
    %p28 = scmp.ne.s32.totalorder %s20, %s23
    %p29 = scmp.eq.s32.totalorder %s10, 0
    %p30 = por %p28, %p29
    %p31 = scmp.ne.s32.totalorder %s20, %s23
    %p32 = scmp.eq.s32.totalorder %s15, 1
    %p33 = por %p31, %p32
    %p34 = scmp.ne.s32.totalorder %s23, %s24
    %p35 = scmp.eq.s32.totalorder %s15, 0
    %p36 = por %p34, %p35
    %p37 = scmp.ne.s32.totalorder %s23, %s24
    %p38 = scmp.eq.s32.totalorder %s16, 1
    %p39 = por %p37, %p38
    %p41 = scmp.ne.s32.totalorder %s24, %s40
    %p42 = scmp.eq.s32.totalorder %s16, 0
    %p43 = por %p41, %p42
    %s45 = sadd.s32 %s44, 1
    %p48 = scmp.eq.s32.totalorder %s10, 1
    %p49 = scmp.ne.s32.totalorder %s44, %s46
    %p50 = scmp.eq.s32.totalorder %s10, 0
    %p51 = por %p49, %p50
    %p52 = scmp.ne.s32.totalorder %s44, %s46
    %p53 = scmp.eq.s32.totalorder %s15, 1
    %p54 = por %p52, %p53
    %p55 = scmp.ne.s32.totalorder %s46, %s47
    %p56 = scmp.eq.s32.totalorder %s15, 0
    %p57 = por %p55, %p56
    %p58 = scmp.ne.s32.totalorder %s46, %s47
    %p59 = scmp.eq.s32.totalorder %s16, 1
    %p60 = por %p58, %p59
    %p62 = scmp.ne.s32.totalorder %s47, %s61
    %p63 = scmp.eq.s32.totalorder %s16, 0
    %p64 = por %p62, %p63
    %s66 = sadd.s32 %s65, 1
    %p69 = scmp.eq.s32.totalorder %s10, 1
    %p70 = scmp.ne.s32.totalorder %s65, %s67
    %p71 = scmp.eq.s32.totalorder %s10, 0
    %p72 = por %p70, %p71
    %p73 = scmp.ne.s32.totalorder %s65, %s67
    %p74 = scmp.eq.s32.totalorder %s15, 1
    %p75 = por %p73, %p74
    %p76 = scmp.ne.s32.totalorder %s67, %s68
    %p77 = scmp.eq.s32.totalorder %s15, 0
    %p78 = por %p76, %p77
    %p79 = scmp.ne.s32.totalorder %s67, %s68
    %p80 = scmp.eq.s32.totalorder %s16, 1
    %p81 = por %p79, %p80
    %p83 = scmp.ne.s32.totalorder %s68, %s82
    %p84 = scmp.eq.s32.totalorder %s16, 0
    %p85 = por %p83, %p84
    %s86 = ssub.s32 %s10, %s17
    %p87 = scmp.eq.s32.totalorder %s86, 0
    %s89 = sadd.s32 %s88, 1
    %s90 = scalar_select %p87, %s88, %s89
    %p93 = pneg %p87
    %p94 = scmp.eq.s32.totalorder %s10, 1
    %p95 = por %p93, %p94
    %p96 = scmp.ne.s32.totalorder %s88, %s91
    %p97 = scmp.eq.s32.totalorder %s10, 0
    %p98 = por %p96, %p97
    %p99 = scmp.ne.s32.totalorder %s88, %s91
    %p100 = scmp.eq.s32.totalorder %s15, 1
    %p101 = por %p99, %p100
    %p102 = scmp.ne.s32.totalorder %s91, %s92
    %p103 = scmp.eq.s32.totalorder %s15, 0
    %p104 = por %p102, %p103
    %p105 = scmp.ne.s32.totalorder %s91, %s92
    %p106 = scmp.eq.s32.totalorder %s16, 1
    %p107 = por %p105, %p106
    %p109 = scmp.ne.s32.totalorder %s92, %s108
    %p110 = scmp.eq.s32.totalorder %s16, 0
    %p111 = por %p109, %p110
    %s112 = ssub.s32 %s10, %s17
    %p113 = scmp.eq.s32.totalorder %s112, 0
    %s115 = sadd.s32 %s114, 1
    %s116 = scalar_select %p113, %s114, %s115
    %p119 = pneg %p113
    %p120 = scmp.eq.s32.totalorder %s10, 1
    %p121 = por %p119, %p120
    %p122 = scmp.ne.s32.totalorder %s114, %s117
    %p123 = scmp.eq.s32.totalorder %s10, 0
    %p124 = por %p122, %p123
    %p125 = scmp.ne.s32.totalorder %s114, %s117
    %p126 = scmp.eq.s32.totalorder %s15, 1
    %p127 = por %p125, %p126
    %p128 = scmp.ne.s32.totalorder %s117, %s118
    %p129 = scmp.eq.s32.totalorder %s15, 0
    %p130 = por %p128, %p129
    %p131 = scmp.ne.s32.totalorder %s117, %s118
    %p132 = scmp.eq.s32.totalorder %s16, 1
    %p133 = por %p131, %p132
    %p135 = scmp.ne.s32.totalorder %s118, %s134
    %p136 = scmp.eq.s32.totalorder %s16, 0
    %p137 = por %p135, %p136
    %p138 = scmp.le.s32.totalorder 1, %s10
    %p139 = scmp.lt.s32.totalorder %s10, 3
    %p140 = pnand %p138, %p139
    %p141 = pneg %p140
    // Predicated region
    $region9: #{variational_dequantizer_forward.24} parent=5 // pred_check
      _
    $region10: #{variational_dequantizer_forward.24} parent=5 // pred_check_branch
      %143 = sbr.rel (%p140) target = $region12
    $region11: #{variational_dequantizer_forward.24} parent=5 // pred_region
      %s144 = ssub.s32 %s10, 1
      // Predicated region
      $region13: #{variational_dequantizer_forward.24} parent=11 // pred_check
        %p145 = pneg %p57
      $region14: #{variational_dequantizer_forward.24} parent=11 // pred_check_branch
        %147 = sbr.rel (%p145) target = $region16
      $region15: #{variational_dequantizer_forward.24} parent=11 // pred_region
        _
      $region16: #{variational_dequantizer_forward.24} parent=11 // pred_fallthru
        _
      // Predicated region
      $region17: #{variational_dequantizer_forward.24} parent=11 // pred_check
        %p148 = pneg %p78
      $region18: #{variational_dequantizer_forward.24} parent=11 // pred_check_branch
        %150 = sbr.rel (%p148) target = $region20
      $region19: #{variational_dequantizer_forward.24} parent=11 // pred_region
        _
      $region20: #{variational_dequantizer_forward.24} parent=11 // pred_fallthru
        _
    $region12: #{variational_dequantizer_forward.24} parent=5 // pred_fallthru
      _
    %p151 = scmp.lt.s32.totalorder %s10, 2
    // Predicated region
    $region21: #{variational_dequantizer_forward.24} parent=5 // pred_check
      %p152 = pneg %p151
    $region22: #{variational_dequantizer_forward.24} parent=5 // pred_check_branch
      %154 = sbr.rel (%p152) target = $region24
    $region23: #{variational_dequantizer_forward.24} parent=5 // pred_region
      // Predicated region
      $region25: #{variational_dequantizer_forward.24} parent=23 // pred_check
        %p155 = pneg %p30
      $region26: #{variational_dequantizer_forward.24} parent=23 // pred_check_branch
        %157 = sbr.rel (%p155) target = $region28
      $region27: #{variational_dequantizer_forward.24} parent=23 // pred_region
        %p158 = scmp.lt.s32.totalorder %s10, 1
        %s159 = scalar_select %p158, %s10, 1
        %s160 = smul.addr %s159, 4
        %s161 = scalar_lea.vmem %s0, %s160
      $region28: #{variational_dequantizer_forward.24} parent=23 // pred_fallthru
        _
      // Predicated region
      $region29: #{variational_dequantizer_forward.24} parent=23 // pred_check
        %p162 = pneg %p98
      $region30: #{variational_dequantizer_forward.24} parent=23 // pred_check_branch
        %164 = sbr.rel (%p162) target = $region32
      $region31: #{variational_dequantizer_forward.24} parent=23 // pred_region
        %p165 = scmp.lt.s32.totalorder %s10, 1
        %s166 = scalar_select %p165, %s10, 1
        %s167 = smul.addr %s166, 8
        %s168 = scalar_lea.vmem %s3, %s167
      $region32: #{variational_dequantizer_forward.24} parent=23 // pred_fallthru
        _
    $region24: #{variational_dequantizer_forward.24} parent=5 // pred_fallthru
      _
    %p169 = scmp.le.s32.totalorder 1, %s10
    %p170 = scmp.lt.s32.totalorder %s10, 3
    %p171 = pnand %p169, %p170
    %p172 = pneg %p171
    // Predicated region
    $region33: #{variational_dequantizer_forward.24} parent=5 // pred_check
      _
    $region34: #{variational_dequantizer_forward.24} parent=5 // pred_check_branch
      %174 = sbr.rel (%p171) target = $region36
    $region35: #{variational_dequantizer_forward.24} parent=5 // pred_region
      %s175 = ssub.s32 %s10, 1
      %p176 = scmp.lt.s32.totalorder %s15, 1
      %s177 = scalar_select %p176, %s15, 1
      %s178 = smul.addr %s177, 4
      %s179 = scalar_lea.vmem %s0, %s178
      %p180 = pneg %p36
      %p181 = pneg %p33
      %p182 = pneg %p57
      %p183 = pneg %p54
      %p184 = pneg %p78
      %p185 = pneg %p75
      %p186 = scmp.lt.s32.totalorder %s15, 1
      %s187 = scalar_select %p186, %s15, 1
      %s188 = smul.addr %s187, 8
      %s189 = scalar_lea.vmem %s3, %s188
      %p190 = pneg %p104
      %p191 = pneg %p101
      %p192 = pneg %p130
      %p193 = pneg %p127
      %p194 = scmp.lt.s32.totalorder %s15, 1
      %s195 = scalar_select %p194, %s15, 1
      %s196 = smul.addr %s195, 8
      %s197 = scalar_lea.vmem %s4, %s196
      %p198 = scmp.lt.s32.totalorder %s15, 1
      %s199 = scalar_select %p198, %s15, 1
      %s200 = smul.addr %s199, 4
      %s201 = scalar_lea.vmem %s0, %s200
      %p202 = scmp.lt.s32.totalorder %s15, 1
      %s203 = scalar_select %p202, %s15, 1
      %s204 = smul.addr %s203, 8
      %s205 = scalar_lea.vmem %s3, %s204
      %p206 = scmp.lt.s32.totalorder %s15, 1
      %s207 = scalar_select %p206, %s15, 1
      %s208 = smul.addr %s207, 8
      %s209 = scalar_lea.vmem %s4, %s208
      %v211 = vld [vmem:[%s201] sm:$0xf]
      %v212 = vld [vmem:[%s1] sm:$0xff]
      %v213 = vld [vmem:[%s1 + $0x8] sm:$0xff]
      %v214 = vld [vmem:[%s1 + $0x10] sm:$0xff]
      %v215 = vld [vmem:[%s1 + $0x18] sm:$0xff]
      %v216 = vld [vmem:[%s1 + $0x20] sm:$0xff]
      %v217 = vld [vmem:[%s1 + $0x28] sm:$0xff]
      %v218 = vld [vmem:[%s1 + $0x30] sm:$0xff]
      %v219 = vld [vmem:[%s1 + $0x38] sm:$0xff]
      %v220 = vpack.c.bf16 %v213, %v212
      %v221 = vpack.c.bf16 %v215, %v214
      %v222 = vpack.c.bf16 %v217, %v216
      %v223 = vpack.c.bf16 %v219, %v218
      %v224 = vld [vmem:[%s2] sm:$0x1]
      %v226 = vperm.slane %v224, 0
      %vm228 = vcmask 523264
      %v230 = vsel %vm228, %v211, 0
      %232 = vmatpush.bf16.msra.mxu0 0
      %233 = vmatpush.bf16.msra.mxu0 0
      %234 = vmatpush.bf16.msra.mxu0 0
      %235 = vmatpush.bf16.msra.mxu0 0
      %236 = vmatpush.bf16.msra.mxu0 %v223
      %237 = vmatpush.bf16.msra.mxu0 %v222
      %238 = vmatpush.bf16.msra.mxu0 %v221
      %239 = vmatpush.bf16.msra.mxu0 %v220
      %240 = vmatmul.bf16.gmra.mxu0 %v230
      %v241 = vpop.f32.mrf.mxu0
      %v242 = vadd.f32 %v226, %v241
      %v243 = vpop.f32.mrf.mxu0
      %244 = vdwg.mxu0
      %v245 = vld [vmem:[%s205] sm:$0xff]
      %247 = vset.pattern.permute.xlu0 0
      %248 = vperm.xlu0 %247, %v245
      %v249 = vpop.permute.xlu0 %248
      %v251 = vmul.f32 %v242, %v249
      %vm252 = vcmask 31744
      %253 = vst.msk [vmem:[%s209] sm:$0xff] %vm252, %v251
      %p254 = scmp.lt.s32.totalorder %s15, 1
      %s255 = scalar_select %p254, %s15, 1
      %s256 = smul.addr %s255, 8
      %s257 = scalar_lea.vmem %s4, %s256
      // Predicated region
      $region37: #{variational_dequantizer_forward.24} parent=35 // pred_check
        %p258 = pneg %p127
      $region38: #{variational_dequantizer_forward.24} parent=35 // pred_check_branch
        %260 = sbr.rel (%p258) target = $region40
      $region39: #{variational_dequantizer_forward.24} parent=35 // pred_region
        _
      $region40: #{variational_dequantizer_forward.24} parent=35 // pred_fallthru
        _
    $region36: #{variational_dequantizer_forward.24} parent=5 // pred_fallthru
      _
    %p261 = scmp.le.s32.totalorder 2, %s10
    // Predicated region
    $region41: #{variational_dequantizer_forward.24} parent=5 // pred_check
      %p262 = pneg %p261
    $region42: #{variational_dequantizer_forward.24} parent=5 // pred_check_branch
      %264 = sbr.rel (%p262) target = $region44
    $region43: #{variational_dequantizer_forward.24} parent=5 // pred_region
      %s265 = ssub.s32 %s10, 2
      // Predicated region
      $region45: #{variational_dequantizer_forward.24} parent=43 // pred_check
        %p266 = pneg %p133
      $region46: #{variational_dequantizer_forward.24} parent=43 // pred_check_branch
        %268 = sbr.rel (%p266) target = $region48
      $region47: #{variational_dequantizer_forward.24} parent=43 // pred_region
        %p269 = scmp.lt.s32.totalorder %s16, 1
        %s270 = scalar_select %p269, %s16, 1
        %s271 = smul.addr %s270, 8
        %s272 = scalar_lea.vmem %s4, %s271
      $region48: #{variational_dequantizer_forward.24} parent=43 // pred_fallthru
        _
    $region44: #{variational_dequantizer_forward.24} parent=5 // pred_fallthru
      _
  $region6: #{variational_dequantizer_forward.24} parent=0 // loop_footer
    %s14 = sadd.s32 1, %s10
  $region7: #{variational_dequantizer_forward.24} parent=0 // loop_footer_branch
    %9 = sbr.rel target = $region3
  $region8: #{variational_dequantizer_forward.24} parent=0 // loop_exit
    _

// kernel: variational_dequantizer_forward.21
$region0: #{variational_dequantizer_forward.21}
  #allocation0 [shape = 'u32[]', space=smem, size = 0x4, offset = 0x4, fixed_abs, tag = 'smem constant byte address 0x4 - core index']
  #allocation1 [shape = 'u32[72,128]{1,0:T(1,128)}', space=vmem, size = 0x9000, scoped, tag = 'internal scratch']
  %s0 = inlined_call_operand.vmem [shape: bf16[2,8,64], index: 0, kind: input, shape index: {}, may-alias: {0,1}]
  %s1 = inlined_call_operand.vmem [shape: bf16[2,8,64], index: 1, kind: input, shape index: {}, may-alias: {0,1}]
  %s2 = inlined_call_operand.vmem [shape: f32[2,8,8,3], index: 2, kind: input, shape index: {}]
  %s3 = inlined_call_operand.vmem [shape: f32[64,64], index: 3, kind: input, shape index: {}]
  %s4 = inlined_call_operand.hbm [shape: f32[64,64], index: 4, kind: input, shape index: {}]
  %s5 = inlined_call_operand.vmem [shape: f32[1,64], index: 5, kind: input, shape index: {}]
  %s6 = inlined_call_operand.vmem [shape: f32[1,64], index: 6, kind: input, shape index: {}]
  %s7 = inlined_call_operand.vmem [shape: f32[1,64], index: 7, kind: input, shape index: {}]
  %s8 = inlined_call_operand.hbm [shape: f32[64,64], index: 8, kind: input, shape index: {}]
  %s9 = inlined_call_operand.vmem [shape: f32[1,64], index: 9, kind: input, shape index: {}]
  %s10 = inlined_call_operand.vmem [shape: f32[64,2], index: 10, kind: input, shape index: {}]
  %s11 = inlined_call_operand.vmem [shape: f32[1,2], index: 11, kind: input, shape index: {}]
  %s12 = inlined_call_operand.vmem [shape: bf16[2,8,64], index: 12, kind: output, shape index: {0}]
  %s13 = inlined_call_operand.vmem [shape: f32[2,8,8,2], index: 13, kind: output, shape index: {1}]
  %14 = xla_tuple %s12, %s13
  %s15 = sld [smem:[#allocation0]]
  $region97: #{variational_dequantizer_forward.21} parent=0
    _
  %s17 = ssub.s32 1, %s15
  %s18 = scalar_select 0, %s17, %s15
  $region1: #{variational_dequantizer_forward.21} parent=0
    #allocation2 [shape = 'u8[32768]{0}', space=vmem, size = 0x8000, scoped, tag = 'input window, operand 4, single buffered']
    #allocation3 [shape = 's32[2]{0}', space=sflag, size = 0x8, scoped, tag = 'scoped memory for variational_dequantizer_forward.21']
    #allocation4 [shape = 'u8[32768]{0}', space=vmem, size = 0x8000, scoped, tag = 'input window, operand 8, single buffered']
    #allocation5 [shape = 's32[1]{0}', space=sflag, size = 0x4, scoped, tag = 'scoped memory for variational_dequantizer_forward.21']
    %19 = vsyncpa [#allocation3], 0
    %20 = vsyncpa [#allocation5], 0
    loop: start=0, step=1, limit=4
    $region2: #{variational_dequantizer_forward.21} parent=1 // loop_pre_header
      _
    $region3: #{variational_dequantizer_forward.21} parent=1 // loop_header
      %s22 = sphi 0, %s26
      %p23 = scmp.ge.s32.totalorder %s22, 4
      %s29 = sphi 0, %s41
      %s30 = sphi 0, %s37
      %s31 = sphi 0, %s29
      %s32 = sphi 0, %s30
      %s33 = sphi 0, %s31
      %s34 = sphi 0, %s32
      %s46 = sphi 0, %s48
      %s49 = sphi 0, %s46
      %s50 = sphi 0, %s49
      %s66 = sphi 0, %s50
      %s72 = sphi 0, %s74
      %s75 = sphi 0, %s72
      %s76 = sphi 0, %s75
      %s92 = sphi 0, %s76
      %s100 = sphi 0, %s102
      %s103 = sphi 0, %s100
      %s104 = sphi 0, %s103
      %s120 = sphi 0, %s104
      %s124 = sphi 0, %s124
      %s126 = sphi 0, %s124
      %s127 = sphi 0, %s126
      %s141 = sphi 0, %s127
      %s145 = sphi 0, %s145
      %s147 = sphi 0, %s145
      %s148 = sphi 0, %s147
      %s162 = sphi 0, %s148
      %s166 = sphi 0, %s166
      %s168 = sphi 0, %s166
      %s169 = sphi 0, %s168
      %s183 = sphi 0, %s169
      %s187 = sphi 0, %s187
      %s189 = sphi 0, %s187
      %s190 = sphi 0, %s189
      %s204 = sphi 0, %s190
      %s208 = sphi 0, %s208
      %s210 = sphi 0, %s208
      %s211 = sphi 0, %s210
      %s225 = sphi 0, %s211
      %s229 = sphi 0, %s229
      %s231 = sphi 0, %s229
      %s232 = sphi 0, %s231
      %s246 = sphi 0, %s232
      %s250 = sphi 0, %s250
      %s252 = sphi 0, %s250
      %s253 = sphi 0, %s252
      %s267 = sphi 0, %s253
      %s271 = sphi 0, %s271
      %s273 = sphi 0, %s271
      %s274 = sphi 0, %s273
      %s288 = sphi 0, %s274
      %s292 = sphi 0, %s292
      %s294 = sphi 0, %s292
      %s295 = sphi 0, %s294
      %s309 = sphi 0, %s295
      %s317 = sphi 0, %s319
      %s320 = sphi 0, %s317
      %s321 = sphi 0, %s320
      %s337 = sphi 0, %s321
      %s345 = sphi 0, %s347
      %s348 = sphi 0, %s345
      %s349 = sphi 0, %s348
      %s365 = sphi 0, %s349
    $region4: #{variational_dequantizer_forward.21} parent=1 // loop_header_branch
      %25 = sbr.rel (%p23) target = $region8
    $region5: #{variational_dequantizer_forward.21} parent=1 // loop_body
      %s27 = ssub.s32 %s22, 1
      %s28 = ssub.s32 %s22, 2
      %s35 = sadd.s32 1, %s30
      %p36 = scmp.ge.s32.totalorder %s35, 1
      %s37 = scalar_select %p36, 0, %s35
      %s38 = sadd.s32 1, %s29
      %s39 = scalar_select %p36, %s38, %s29
      %p40 = scmp.ge.s32.totalorder %s39, 2
      %s41 = scalar_select %p40, 0, %s39
      %s42 = ssub.s32 %s29, %s41
      %s43 = ssub.s32 %s30, %s37
      %s44 = sor.u32 %s42, %s43
      %p45 = scmp.eq.s32.totalorder %s44, 0
      %s47 = sadd.s32 %s46, 1
      %s48 = scalar_select %p45, %s46, %s47
      %p51 = pneg %p45
      %p52 = scmp.eq.s32.totalorder %s22, 1
      %p53 = por %p51, %p52
      %p54 = scmp.ne.s32.totalorder %s46, %s49
      %p55 = scmp.eq.s32.totalorder %s22, 0
      %p56 = por %p54, %p55
      %p57 = scmp.ne.s32.totalorder %s46, %s49
      %p58 = scmp.eq.s32.totalorder %s27, 1
      %p59 = por %p57, %p58
      %p60 = scmp.ne.s32.totalorder %s49, %s50
      %p61 = scmp.eq.s32.totalorder %s27, 0
      %p62 = por %p60, %p61
      %p63 = scmp.ne.s32.totalorder %s49, %s50
      %p64 = scmp.eq.s32.totalorder %s28, 1
      %p65 = por %p63, %p64
      %p67 = scmp.ne.s32.totalorder %s50, %s66
      %p68 = scmp.eq.s32.totalorder %s28, 0
      %p69 = por %p67, %p68
      %s70 = ssub.s32 %s29, %s41
      %p71 = scmp.eq.s32.totalorder %s70, 0
      %s73 = sadd.s32 %s72, 1
      %s74 = scalar_select %p71, %s72, %s73
      %p77 = pneg %p71
      %p78 = scmp.eq.s32.totalorder %s22, 1
      %p79 = por %p77, %p78
      %p80 = scmp.ne.s32.totalorder %s72, %s75
      %p81 = scmp.eq.s32.totalorder %s22, 0
      %p82 = por %p80, %p81
      %p83 = scmp.ne.s32.totalorder %s72, %s75
      %p84 = scmp.eq.s32.totalorder %s27, 1
      %p85 = por %p83, %p84
      %p86 = scmp.ne.s32.totalorder %s75, %s76
      %p87 = scmp.eq.s32.totalorder %s27, 0
      %p88 = por %p86, %p87
      %p89 = scmp.ne.s32.totalorder %s75, %s76
      %p90 = scmp.eq.s32.totalorder %s28, 1
      %p91 = por %p89, %p90
      %p93 = scmp.ne.s32.totalorder %s76, %s92
      %p94 = scmp.eq.s32.totalorder %s28, 0
      %p95 = por %p93, %p94
      %s96 = ssub.s32 %s29, %s41
      %s97 = ssub.s32 %s30, %s37
      %s98 = sor.u32 %s96, %s97
      %p99 = scmp.eq.s32.totalorder %s98, 0
      %s101 = sadd.s32 %s100, 1
      %s102 = scalar_select %p99, %s100, %s101
      %p105 = pneg %p99
      %p106 = scmp.eq.s32.totalorder %s22, 1
      %p107 = por %p105, %p106
      %p108 = scmp.ne.s32.totalorder %s100, %s103
      %p109 = scmp.eq.s32.totalorder %s22, 0
      %p110 = por %p108, %p109
      %p111 = scmp.ne.s32.totalorder %s100, %s103
      %p112 = scmp.eq.s32.totalorder %s27, 1
      %p113 = por %p111, %p112
      %p114 = scmp.ne.s32.totalorder %s103, %s104
      %p115 = scmp.eq.s32.totalorder %s27, 0
      %p116 = por %p114, %p115
      %p117 = scmp.ne.s32.totalorder %s103, %s104
      %p118 = scmp.eq.s32.totalorder %s28, 1
      %p119 = por %p117, %p118
      %p121 = scmp.ne.s32.totalorder %s104, %s120
      %p122 = scmp.eq.s32.totalorder %s28, 0
      %p123 = por %p121, %p122
      %s125 = sadd.s32 %s124, 1
      %p128 = scmp.eq.s32.totalorder %s22, 1
      %p129 = scmp.ne.s32.totalorder %s124, %s126
      %p130 = scmp.eq.s32.totalorder %s22, 0
      %p131 = por %p129, %p130
      %p132 = scmp.ne.s32.totalorder %s124, %s126
      %p133 = scmp.eq.s32.totalorder %s27, 1
      %p134 = por %p132, %p133
      %p135 = scmp.ne.s32.totalorder %s126, %s127
      %p136 = scmp.eq.s32.totalorder %s27, 0
      %p137 = por %p135, %p136
      %p138 = scmp.ne.s32.totalorder %s126, %s127
      %p139 = scmp.eq.s32.totalorder %s28, 1
      %p140 = por %p138, %p139
      %p142 = scmp.ne.s32.totalorder %s127, %s141
      %p143 = scmp.eq.s32.totalorder %s28, 0
      %p144 = por %p142, %p143
      %s146 = sadd.s32 %s145, 1
      %p149 = scmp.eq.s32.totalorder %s22, 1
      %p150 = scmp.ne.s32.totalorder %s145, %s147
      %p151 = scmp.eq.s32.totalorder %s22, 0
      %p152 = por %p150, %p151
      %p153 = scmp.ne.s32.totalorder %s145, %s147
      %p154 = scmp.eq.s32.totalorder %s27, 1
      %p155 = por %p153, %p154
      %p156 = scmp.ne.s32.totalorder %s147, %s148
      %p157 = scmp.eq.s32.totalorder %s27, 0
      %p158 = por %p156, %p157
      %p159 = scmp.ne.s32.totalorder %s147, %s148
      %p160 = scmp.eq.s32.totalorder %s28, 1
      %p161 = por %p159, %p160
      %p163 = scmp.ne.s32.totalorder %s148, %s162
      %p164 = scmp.eq.s32.totalorder %s28, 0
      %p165 = por %p163, %p164
      %s167 = sadd.s32 %s166, 1
      %p170 = scmp.eq.s32.totalorder %s22, 1
      %p171 = scmp.ne.s32.totalorder %s166, %s168
      %p172 = scmp.eq.s32.totalorder %s22, 0
      %p173 = por %p171, %p172
      %p174 = scmp.ne.s32.totalorder %s166, %s168
      %p175 = scmp.eq.s32.totalorder %s27, 1
      %p176 = por %p174, %p175
      %p177 = scmp.ne.s32.totalorder %s168, %s169
      %p178 = scmp.eq.s32.totalorder %s27, 0
      %p179 = por %p177, %p178
      %p180 = scmp.ne.s32.totalorder %s168, %s169
      %p181 = scmp.eq.s32.totalorder %s28, 1
      %p182 = por %p180, %p181
      %p184 = scmp.ne.s32.totalorder %s169, %s183
      %p185 = scmp.eq.s32.totalorder %s28, 0
      %p186 = por %p184, %p185
      %s188 = sadd.s32 %s187, 1
      %p191 = scmp.eq.s32.totalorder %s22, 1
      %p192 = scmp.ne.s32.totalorder %s187, %s189
      %p193 = scmp.eq.s32.totalorder %s22, 0
      %p194 = por %p192, %p193
      %p195 = scmp.ne.s32.totalorder %s187, %s189
      %p196 = scmp.eq.s32.totalorder %s27, 1
      %p197 = por %p195, %p196
      %p198 = scmp.ne.s32.totalorder %s189, %s190
      %p199 = scmp.eq.s32.totalorder %s27, 0
      %p200 = por %p198, %p199
      %p201 = scmp.ne.s32.totalorder %s189, %s190
      %p202 = scmp.eq.s32.totalorder %s28, 1
      %p203 = por %p201, %p202
      %p205 = scmp.ne.s32.totalorder %s190, %s204
      %p206 = scmp.eq.s32.totalorder %s28, 0
      %p207 = por %p205, %p206
      %s209 = sadd.s32 %s208, 1
      %p212 = scmp.eq.s32.totalorder %s22, 1
      %p213 = scmp.ne.s32.totalorder %s208, %s210
      %p214 = scmp.eq.s32.totalorder %s22, 0
      %p215 = por %p213, %p214
      %p216 = scmp.ne.s32.totalorder %s208, %s210
      %p217 = scmp.eq.s32.totalorder %s27, 1
      %p218 = por %p216, %p217
      %p219 = scmp.ne.s32.totalorder %s210, %s211
      %p220 = scmp.eq.s32.totalorder %s27, 0
      %p221 = por %p219, %p220
      %p222 = scmp.ne.s32.totalorder %s210, %s211
      %p223 = scmp.eq.s32.totalorder %s28, 1
      %p224 = por %p222, %p223
      %p226 = scmp.ne.s32.totalorder %s211, %s225
      %p227 = scmp.eq.s32.totalorder %s28, 0
      %p228 = por %p226, %p227
      %s230 = sadd.s32 %s229, 1
      %p233 = scmp.eq.s32.totalorder %s22, 1
      %p234 = scmp.ne.s32.totalorder %s229, %s231
      %p235 = scmp.eq.s32.totalorder %s22, 0
      %p236 = por %p234, %p235
      %p237 = scmp.ne.s32.totalorder %s229, %s231
      %p238 = scmp.eq.s32.totalorder %s27, 1
      %p239 = por %p237, %p238
      %p240 = scmp.ne.s32.totalorder %s231, %s232
      %p241 = scmp.eq.s32.totalorder %s27, 0
      %p242 = por %p240, %p241
      %p243 = scmp.ne.s32.totalorder %s231, %s232
      %p244 = scmp.eq.s32.totalorder %s28, 1
      %p245 = por %p243, %p244
      %p247 = scmp.ne.s32.totalorder %s232, %s246
      %p248 = scmp.eq.s32.totalorder %s28, 0
      %p249 = por %p247, %p248
      %s251 = sadd.s32 %s250, 1
      %p254 = scmp.eq.s32.totalorder %s22, 1
      %p255 = scmp.ne.s32.totalorder %s250, %s252
      %p256 = scmp.eq.s32.totalorder %s22, 0
      %p257 = por %p255, %p256
      %p258 = scmp.ne.s32.totalorder %s250, %s252
      %p259 = scmp.eq.s32.totalorder %s27, 1
      %p260 = por %p258, %p259
      %p261 = scmp.ne.s32.totalorder %s252, %s253
      %p262 = scmp.eq.s32.totalorder %s27, 0
      %p263 = por %p261, %p262
      %p264 = scmp.ne.s32.totalorder %s252, %s253
      %p265 = scmp.eq.s32.totalorder %s28, 1
      %p266 = por %p264, %p265
      %p268 = scmp.ne.s32.totalorder %s253, %s267
      %p269 = scmp.eq.s32.totalorder %s28, 0
      %p270 = por %p268, %p269
      %s272 = sadd.s32 %s271, 1
      %p275 = scmp.eq.s32.totalorder %s22, 1
      %p276 = scmp.ne.s32.totalorder %s271, %s273
      %p277 = scmp.eq.s32.totalorder %s22, 0
      %p278 = por %p276, %p277
      %p279 = scmp.ne.s32.totalorder %s271, %s273
      %p280 = scmp.eq.s32.totalorder %s27, 1
      %p281 = por %p279, %p280
      %p282 = scmp.ne.s32.totalorder %s273, %s274
      %p283 = scmp.eq.s32.totalorder %s27, 0
      %p284 = por %p282, %p283
      %p285 = scmp.ne.s32.totalorder %s273, %s274
      %p286 = scmp.eq.s32.totalorder %s28, 1
      %p287 = por %p285, %p286
      %p289 = scmp.ne.s32.totalorder %s274, %s288
      %p290 = scmp.eq.s32.totalorder %s28, 0
      %p291 = por %p289, %p290
      %s293 = sadd.s32 %s292, 1
      %p296 = scmp.eq.s32.totalorder %s22, 1
      %p297 = scmp.ne.s32.totalorder %s292, %s294
      %p298 = scmp.eq.s32.totalorder %s22, 0
      %p299 = por %p297, %p298
      %p300 = scmp.ne.s32.totalorder %s292, %s294
      %p301 = scmp.eq.s32.totalorder %s27, 1
      %p302 = por %p300, %p301
      %p303 = scmp.ne.s32.totalorder %s294, %s295
      %p304 = scmp.eq.s32.totalorder %s27, 0
      %p305 = por %p303, %p304
      %p306 = scmp.ne.s32.totalorder %s294, %s295
      %p307 = scmp.eq.s32.totalorder %s28, 1
      %p308 = por %p306, %p307
      %p310 = scmp.ne.s32.totalorder %s295, %s309
      %p311 = scmp.eq.s32.totalorder %s28, 0
      %p312 = por %p310, %p311
      %s313 = ssub.s32 %s29, %s41
      %s314 = ssub.s32 %s30, %s37
      %s315 = sor.u32 %s313, %s314
      %p316 = scmp.eq.s32.totalorder %s315, 0
      %s318 = sadd.s32 %s317, 1
      %s319 = scalar_select %p316, %s317, %s318
      %p322 = pneg %p316
      %p323 = scmp.eq.s32.totalorder %s22, 1
      %p324 = por %p322, %p323
      %p325 = scmp.ne.s32.totalorder %s317, %s320
      %p326 = scmp.eq.s32.totalorder %s22, 0
      %p327 = por %p325, %p326
      %p328 = scmp.ne.s32.totalorder %s317, %s320
      %p329 = scmp.eq.s32.totalorder %s27, 1
      %p330 = por %p328, %p329
      %p331 = scmp.ne.s32.totalorder %s320, %s321
      %p332 = scmp.eq.s32.totalorder %s27, 0
      %p333 = por %p331, %p332
      %p334 = scmp.ne.s32.totalorder %s320, %s321
      %p335 = scmp.eq.s32.totalorder %s28, 1
      %p336 = por %p334, %p335
      %p338 = scmp.ne.s32.totalorder %s321, %s337
      %p339 = scmp.eq.s32.totalorder %s28, 0
      %p340 = por %p338, %p339
      %s341 = ssub.s32 %s29, %s41
      %s342 = ssub.s32 %s30, %s37
      %s343 = sor.u32 %s341, %s342
      %p344 = scmp.eq.s32.totalorder %s343, 0
      %s346 = sadd.s32 %s345, 1
      %s347 = scalar_select %p344, %s345, %s346
      %p350 = pneg %p344
      %p351 = scmp.eq.s32.totalorder %s22, 1
      %p352 = por %p350, %p351
      %p353 = scmp.ne.s32.totalorder %s345, %s348
      %p354 = scmp.eq.s32.totalorder %s22, 0
      %p355 = por %p353, %p354
      %p356 = scmp.ne.s32.totalorder %s345, %s348
      %p357 = scmp.eq.s32.totalorder %s27, 1
      %p358 = por %p356, %p357
      %p359 = scmp.ne.s32.totalorder %s348, %s349
      %p360 = scmp.eq.s32.totalorder %s27, 0
      %p361 = por %p359, %p360
      %p362 = scmp.ne.s32.totalorder %s348, %s349
      %p363 = scmp.eq.s32.totalorder %s28, 1
      %p364 = por %p362, %p363
      %p366 = scmp.ne.s32.totalorder %s349, %s365
      %p367 = scmp.eq.s32.totalorder %s28, 0
      %p368 = por %p366, %p367
      %p369 = scmp.le.s32.totalorder 1, %s22
      %p370 = scmp.lt.s32.totalorder %s22, 3
      %p371 = pnand %p369, %p370
      %p372 = pneg %p371
      // Predicated region
      $region9: #{variational_dequantizer_forward.21} parent=5 // pred_check
        _
      $region10: #{variational_dequantizer_forward.21} parent=5 // pred_check_branch
        %374 = sbr.rel (%p371) target = $region12
      $region11: #{variational_dequantizer_forward.21} parent=5 // pred_region
        %s375 = ssub.s32 %s22, 1
        // Predicated region
        $region13: #{variational_dequantizer_forward.21} parent=11 // pred_check
          %p376 = pneg %p137
        $region14: #{variational_dequantizer_forward.21} parent=11 // pred_check_branch
          %378 = sbr.rel (%p376) target = $region16
        $region15: #{variational_dequantizer_forward.21} parent=11 // pred_region
          _
        $region16: #{variational_dequantizer_forward.21} parent=11 // pred_fallthru
          _
        // Predicated region
        $region17: #{variational_dequantizer_forward.21} parent=11 // pred_check
          %p379 = pneg %p158
        $region18: #{variational_dequantizer_forward.21} parent=11 // pred_check_branch
          %381 = sbr.rel (%p379) target = $region20
        $region19: #{variational_dequantizer_forward.21} parent=11 // pred_region
          %383 = vsyncadd [#allocation3], 0
          %s384 = sshll.u32 %s4, 4
          %s385 = int_to_ptr.hbm [resolvable:$true] %s384
          %s386 = sshll.u32 [#allocation2], 4
          %s387 = int_to_ptr.vmem [resolvable:$true] %s386
          %392 = dma.hbm_to_vmem [thread:$0]  %s385, 1024, %s387, [#allocation3], 128, 128, 8
        $region20: #{variational_dequantizer_forward.21} parent=11 // pred_fallthru
          _
        // Predicated region
        $region21: #{variational_dequantizer_forward.21} parent=11 // pred_check
          %p393 = pneg %p179
        $region22: #{variational_dequantizer_forward.21} parent=11 // pred_check_branch
          %395 = sbr.rel (%p393) target = $region24
        $region23: #{variational_dequantizer_forward.21} parent=11 // pred_region
          _
        $region24: #{variational_dequantizer_forward.21} parent=11 // pred_fallthru
          _
        // Predicated region
        $region25: #{variational_dequantizer_forward.21} parent=11 // pred_check
          %p396 = pneg %p200
        $region26: #{variational_dequantizer_forward.21} parent=11 // pred_check_branch
          %398 = sbr.rel (%p396) target = $region28
        $region27: #{variational_dequantizer_forward.21} parent=11 // pred_region
          _
        $region28: #{variational_dequantizer_forward.21} parent=11 // pred_fallthru
          _
        // Predicated region
        $region29: #{variational_dequantizer_forward.21} parent=11 // pred_check
          %p399 = pneg %p221
        $region30: #{variational_dequantizer_forward.21} parent=11 // pred_check_branch
          %401 = sbr.rel (%p399) target = $region32
        $region31: #{variational_dequantizer_forward.21} parent=11 // pred_region
          _
        $region32: #{variational_dequantizer_forward.21} parent=11 // pred_fallthru
          _
        // Predicated region
        $region33: #{variational_dequantizer_forward.21} parent=11 // pred_check
          %p402 = pneg %p242
        $region34: #{variational_dequantizer_forward.21} parent=11 // pred_check_branch
          %404 = sbr.rel (%p402) target = $region36
        $region35: #{variational_dequantizer_forward.21} parent=11 // pred_region
          %406 = vsyncadd [#allocation5], 0
          %s407 = sshll.u32 %s8, 4
          %s408 = int_to_ptr.hbm [resolvable:$true] %s407
          %s409 = sshll.u32 [#allocation4], 4
          %s410 = int_to_ptr.vmem [resolvable:$true] %s409
          %415 = dma.hbm_to_vmem [thread:$0]  %s408, 1024, %s410, [#allocation5], 128, 128, 8
        $region36: #{variational_dequantizer_forward.21} parent=11 // pred_fallthru
          _
        // Predicated region
        $region37: #{variational_dequantizer_forward.21} parent=11 // pred_check
          %p416 = pneg %p263
        $region38: #{variational_dequantizer_forward.21} parent=11 // pred_check_branch
          %418 = sbr.rel (%p416) target = $region40
        $region39: #{variational_dequantizer_forward.21} parent=11 // pred_region
          _
        $region40: #{variational_dequantizer_forward.21} parent=11 // pred_fallthru
          _
        // Predicated region
        $region41: #{variational_dequantizer_forward.21} parent=11 // pred_check
          %p419 = pneg %p284
        $region42: #{variational_dequantizer_forward.21} parent=11 // pred_check_branch
          %421 = sbr.rel (%p419) target = $region44
        $region43: #{variational_dequantizer_forward.21} parent=11 // pred_region
          _
        $region44: #{variational_dequantizer_forward.21} parent=11 // pred_fallthru
          _
        // Predicated region
        $region45: #{variational_dequantizer_forward.21} parent=11 // pred_check
          %p422 = pneg %p305
        $region46: #{variational_dequantizer_forward.21} parent=11 // pred_check_branch
          %424 = sbr.rel (%p422) target = $region48
        $region47: #{variational_dequantizer_forward.21} parent=11 // pred_region
          _
        $region48: #{variational_dequantizer_forward.21} parent=11 // pred_fallthru
          _
      $region12: #{variational_dequantizer_forward.21} parent=5 // pred_fallthru
        _
      %p425 = scmp.lt.s32.totalorder %s22, 2
      // Predicated region
      $region49: #{variational_dequantizer_forward.21} parent=5 // pred_check
        %p426 = pneg %p425
      $region50: #{variational_dequantizer_forward.21} parent=5 // pred_check_branch
        %428 = sbr.rel (%p426) target = $region52
      $region51: #{variational_dequantizer_forward.21} parent=5 // pred_region
        // Predicated region
        $region53: #{variational_dequantizer_forward.21} parent=51 // pred_check
          %p429 = pneg %p56
        $region54: #{variational_dequantizer_forward.21} parent=51 // pred_check_branch
          %431 = sbr.rel (%p429) target = $region56
        $region55: #{variational_dequantizer_forward.21} parent=51 // pred_region
          %p432 = scmp.lt.s32.totalorder %s29, 1
          %s433 = scalar_select %p432, %s29, 1
          %p434 = scmp.lt.s32.totalorder %s30, 0
          %s435 = scalar_select %p434, %s30, 0
          %s436 = sadd.s32 %s435, %s433
          %s437 = smul.addr %s436, 4
          %s438 = scalar_lea.vmem %s0, %s437
        $region56: #{variational_dequantizer_forward.21} parent=51 // pred_fallthru
          _
        // Predicated region
        $region57: #{variational_dequantizer_forward.21} parent=51 // pred_check
          %p439 = pneg %p82
        $region58: #{variational_dequantizer_forward.21} parent=51 // pred_check_branch
          %441 = sbr.rel (%p439) target = $region60
        $region59: #{variational_dequantizer_forward.21} parent=51 // pred_region
          %p442 = scmp.lt.s32.totalorder %s29, 1
          %s443 = scalar_select %p442, %s29, 1
          %s444 = smul.addr %s443, 4
          %s445 = scalar_lea.vmem %s1, %s444
        $region60: #{variational_dequantizer_forward.21} parent=51 // pred_fallthru
          _
        // Predicated region
        $region61: #{variational_dequantizer_forward.21} parent=51 // pred_check
          %p446 = pneg %p110
        $region62: #{variational_dequantizer_forward.21} parent=51 // pred_check_branch
          %448 = sbr.rel (%p446) target = $region64
        $region63: #{variational_dequantizer_forward.21} parent=51 // pred_region
          %s449 = smul.u32 8, %s30
          %p450 = scmp.lt.s32.totalorder %s29, 1
          %s451 = scalar_select %p450, %s29, 1
          %p452 = scmp.lt.s32.totalorder %s449, 7
          %s453 = scalar_select %p452, %s449, 7
          %s454 = smul.addr %s451, 8
          %s455 = sadd.s32 %s453, %s454
          %s456 = smul.addr %s455, 8
          %s457 = scalar_lea.vmem %s2, %s456
          %s458 = smul.u32 8, %s30
        $region64: #{variational_dequantizer_forward.21} parent=51 // pred_fallthru
          _
      $region52: #{variational_dequantizer_forward.21} parent=5 // pred_fallthru
        _
      %p459 = scmp.le.s32.totalorder 1, %s22
      %p460 = scmp.lt.s32.totalorder %s22, 3
      %p461 = pnand %p459, %p460
      %p462 = pneg %p461
      // Predicated region
      $region65: #{variational_dequantizer_forward.21} parent=5 // pred_check
        _
      $region66: #{variational_dequantizer_forward.21} parent=5 // pred_check_branch
        %464 = sbr.rel (%p461) target = $region68
      $region67: #{variational_dequantizer_forward.21} parent=5 // pred_region
        %s465 = ssub.s32 %s22, 1
        // Predicated region
        $region69: #{variational_dequantizer_forward.21} parent=67 // pred_check
          %p466 = pneg %p158
        $region70: #{variational_dequantizer_forward.21} parent=67 // pred_check_branch
          %468 = sbr.rel (%p466) target = $region72
        $region71: #{variational_dequantizer_forward.21} parent=67 // pred_region
          %470 = dma.done [#allocation3], 1024
        $region72: #{variational_dequantizer_forward.21} parent=67 // pred_fallthru
          _
        // Predicated region
        $region73: #{variational_dequantizer_forward.21} parent=67 // pred_check
          %p471 = pneg %p242
        $region74: #{variational_dequantizer_forward.21} parent=67 // pred_check_branch
          %473 = sbr.rel (%p471) target = $region76
        $region75: #{variational_dequantizer_forward.21} parent=67 // pred_region
          %475 = dma.done [#allocation5], 1024
        $region76: #{variational_dequantizer_forward.21} parent=67 // pred_fallthru
          _
        %p476 = scmp.lt.s32.totalorder %s31, 1
        %s477 = scalar_select %p476, %s31, 1
        %p478 = scmp.lt.s32.totalorder %s32, 0
        %s479 = scalar_select %p478, %s32, 0
        %s480 = sadd.s32 %s479, %s477
        %s481 = smul.addr %s480, 4
        %s482 = scalar_lea.vmem %s0, %s481
        %p483 = pneg %p62
        %p484 = pneg %p59
        %p485 = scmp.lt.s32.totalorder %s31, 1
        %s486 = scalar_select %p485, %s31, 1
        %s487 = smul.addr %s486, 4
        %s488 = scalar_lea.vmem %s1, %s487
        %p489 = pneg %p88
        %p490 = pneg %p85
        %s491 = smul.u32 8, %s32
        %p492 = scmp.lt.s32.totalorder %s31, 1
        %s493 = scalar_select %p492, %s31, 1
        %p494 = scmp.lt.s32.totalorder %s491, 7
        %s495 = scalar_select %p494, %s491, 7
        %s496 = smul.addr %s493, 8
        %s497 = sadd.s32 %s495, %s496
        %s498 = smul.addr %s497, 8
        %s499 = scalar_lea.vmem %s2, %s498
        %p500 = pneg %p116
        %p501 = pneg %p113
        %p502 = pneg %p137
        %p503 = pneg %p134
        %p504 = pneg %p158
        %p505 = pneg %p155
        %p506 = pneg %p179
        %p507 = pneg %p176
        %p508 = pneg %p200
        %p509 = pneg %p197
        %p510 = pneg %p221
        %p511 = pneg %p218
        %p512 = pneg %p242
        %p513 = pneg %p239
        %p514 = pneg %p263
        %p515 = pneg %p260
        %p516 = pneg %p284
        %p517 = pneg %p281
        %p518 = pneg %p305
        %p519 = pneg %p302
        %p520 = pneg %p333
        %p521 = pneg %p330
        %p522 = scmp.lt.s32.totalorder %s31, 1
        %s523 = scalar_select %p522, %s31, 1
        %p524 = scmp.lt.s32.totalorder %s32, 0
        %s525 = scalar_select %p524, %s32, 0
        %s526 = sadd.s32 %s525, %s523
        %s527 = smul.addr %s526, 4
        %s528 = scalar_lea.vmem %s12, %s527
        %p529 = pneg %p361
        %p530 = pneg %p358
        %s531 = smul.u32 8, %s32
        %p532 = scmp.lt.s32.totalorder %s31, 1
        %s533 = scalar_select %p532, %s31, 1
        %p534 = scmp.lt.s32.totalorder %s531, 7
        %s535 = scalar_select %p534, %s531, 7
        %s536 = smul.addr %s533, 8
        %s537 = sadd.s32 %s535, %s536
        %s538 = smul.addr %s537, 8
        %s539 = scalar_lea.vmem %s13, %s538
        %p540 = scmp.lt.s32.totalorder %s31, 1
        %s541 = scalar_select %p540, %s31, 1
        %p542 = scmp.lt.s32.totalorder %s32, 0
        %s543 = scalar_select %p542, %s32, 0
        %s544 = sadd.s32 %s543, %s541
        %s545 = smul.addr %s544, 4
        %s546 = scalar_lea.vmem %s0, %s545
        %p547 = scmp.lt.s32.totalorder %s31, 1
        %s548 = scalar_select %p547, %s31, 1
        %s549 = smul.addr %s548, 4
        %s550 = scalar_lea.vmem %s1, %s549
        %s551 = smul.u32 8, %s32
        %p552 = scmp.lt.s32.totalorder %s31, 1
        %s553 = scalar_select %p552, %s31, 1
        %p554 = scmp.lt.s32.totalorder %s551, 7
        %s555 = scalar_select %p554, %s551, 7
        %s556 = smul.addr %s553, 8
        %s557 = sadd.s32 %s555, %s556
        %s558 = smul.addr %s557, 8
        %s559 = scalar_lea.vmem %s2, %s558
        %s560 = smul.u32 8, %s32
        %p561 = scmp.lt.s32.totalorder %s31, 1
        %s562 = scalar_select %p561, %s31, 1
        %p563 = scmp.lt.s32.totalorder %s32, 0
        %s564 = scalar_select %p563, %s32, 0
        %s565 = sadd.s32 %s564, %s562
        %s566 = smul.addr %s565, 4
        %s567 = scalar_lea.vmem %s12, %s566
        %s568 = smul.u32 8, %s32
        %p569 = scmp.lt.s32.totalorder %s31, 1
        %s570 = scalar_select %p569, %s31, 1
        %p571 = scmp.lt.s32.totalorder %s568, 7
        %s572 = scalar_select %p571, %s568, 7
        %s573 = smul.addr %s570, 8
        %s574 = sadd.s32 %s572, %s573
        %s575 = smul.addr %s574, 8
        %s576 = scalar_lea.vmem %s13, %s575
        %s577 = smul.u32 8, %s32
        %v579 = vld [vmem:[%s546] sm:$0xf]
        %v580 = vld [vmem:[%s550] sm:$0xf]
        %v581 = vld [vmem:[%s3] sm:$0xff]
        %v582 = vld [vmem:[%s3 + $0x8] sm:$0xff]
        %v583 = vld [vmem:[%s3 + $0x10] sm:$0xff]
        %v584 = vld [vmem:[%s3 + $0x18] sm:$0xff]
        %v585 = vld [vmem:[%s3 + $0x20] sm:$0xff]
        %v586 = vld [vmem:[%s3 + $0x28] sm:$0xff]
        %v587 = vld [vmem:[%s3 + $0x30] sm:$0xff]
        %v588 = vld [vmem:[%s3 + $0x38] sm:$0xff]
        %v589 = vpack.c.bf16 %v582, %v581
        %v590 = vpack.c.bf16 %v584, %v583
        %v591 = vpack.c.bf16 %v586, %v585
        %v592 = vpack.c.bf16 %v588, %v587
        %v593 = vld [vmem:[%s5] sm:$0x1]
        %v595 = vperm.slane %v593, 0
        %vm597 = vcmask 523264
        %v599 = vsel %vm597, %v579, 0
        %601 = vmatpush.bf16.msra.mxu0 0
        %602 = vmatpush.bf16.msra.mxu0 0
        %603 = vmatpush.bf16.msra.mxu0 0
        %604 = vmatpush.bf16.msra.mxu0 0
        %605 = vmatpush.bf16.msra.mxu0 %v592
        %606 = vmatpush.bf16.msra.mxu0 %v591
        %607 = vmatpush.bf16.msra.mxu0 %v590
        %608 = vmatpush.bf16.msra.mxu0 %v589
        %609 = vmatmul.bf16.gmra.mxu0 %v599
        %v610 = vpop.f32.mrf.mxu0
        %v611 = vadd.f32 %v595, %v610
        %v612 = vpop.f32.mrf.mxu0
        %613 = vdwg.mxu0
        %v614 = vld [vmem:[#allocation2] sm:$0xff]
        %v615 = vld [vmem:[#allocation2 + $0x8] sm:$0xff]
        %v616 = vld [vmem:[#allocation2 + $0x10] sm:$0xff]
        %v617 = vld [vmem:[#allocation2 + $0x18] sm:$0xff]
        %v618 = vld [vmem:[#allocation2 + $0x20] sm:$0xff]
        %v619 = vld [vmem:[#allocation2 + $0x28] sm:$0xff]
        %v620 = vld [vmem:[#allocation2 + $0x30] sm:$0xff]
        %v621 = vld [vmem:[#allocation2 + $0x38] sm:$0xff]
        %v622 = vpack.c.bf16 %v615, %v614
        %v623 = vpack.c.bf16 %v617, %v616
        %v624 = vpack.c.bf16 %v619, %v618
        %v625 = vpack.c.bf16 %v621, %v620
        %v627 = vsel %vm597, %v580, 0
        %629 = vmatpush.bf16.msra.mxu0 0
        %630 = vmatpush.bf16.msra.mxu0 0
        %631 = vmatpush.bf16.msra.mxu0 0
        %632 = vmatpush.bf16.msra.mxu0 0
        %633 = vmatpush.bf16.msra.mxu0 %v625
        %634 = vmatpush.bf16.msra.mxu0 %v624
        %635 = vmatpush.bf16.msra.mxu0 %v623
        %636 = vmatpush.bf16.msra.mxu0 %v622
        %637 = vmatmul.bf16.gmra.mxu0 %v627
        %v638 = vpop.f32.mrf.mxu0
        %v639 = vadd.f32 0.0, %v638
        %v640 = vpop.f32.mrf.mxu0
        %641 = vdwg.mxu0
        %v642 = vld [vmem:[%s559] sm:$0xff]
        %v643 = vld [vmem:[%s559 + $0x8] sm:$0xff]
        %v644 = vld [vmem:[%s559 + $0x10] sm:$0xff]
        %v645 = vld [vmem:[%s559 + $0x18] sm:$0xff]
        %v646 = vld [vmem:[%s559 + $0x20] sm:$0xff]
        %v647 = vld [vmem:[%s559 + $0x28] sm:$0xff]
        %v648 = vld [vmem:[%s559 + $0x30] sm:$0xff]
        %v649 = vld [vmem:[%s559 + $0x38] sm:$0xff]
        %v651 = vrot.slane %v611, 1
        %v652 = vrot.slane %v611, 2
        %v653 = vrot.slane %v611, 3
        %v654 = vrot.slane %v611, 4
        %v655 = vrot.slane %v611, 5
        %v656 = vrot.slane %v611, 6
        %v657 = vrot.slane %v611, 7
        %v658 = vperm.slane %v611, 0
        %v659 = vperm.slane %v651, 0
        %v660 = vperm.slane %v652, 0
        %v661 = vperm.slane %v653, 0
        %v662 = vperm.slane %v654, 0
        %v663 = vperm.slane %v655, 0
        %v664 = vperm.slane %v656, 0
        %v665 = vperm.slane %v657, 0
        %v674 = vadd.f32 %v658, %v639
        %v675 = vadd.f32 %v659, %v639
        %v676 = vadd.f32 %v660, %v639
        %v677 = vadd.f32 %v661, %v639
        %v678 = vadd.f32 %v662, %v639
        %v679 = vadd.f32 %v663, %v639
        %v680 = vadd.f32 %v664, %v639
        %v681 = vadd.f32 %v665, %v639
        %v682 = vld [vmem:[%s6] sm:$0x1]
        %684 = vset.pattern.permute.xlu0 0
        %685 = vperm.xlu0 %684, %v642
        %v686 = vpop.permute.xlu0 %685
        %689 = vset.pattern.permute.xlu0 0
        %690 = vperm.xlu0 %689, %v643
        %v691 = vpop.permute.xlu0 %690
        %694 = vset.pattern.permute.xlu0 0
        %695 = vperm.xlu0 %694, %v644
        %v696 = vpop.permute.xlu0 %695
        %699 = vset.pattern.permute.xlu0 0
        %700 = vperm.xlu0 %699, %v645
        %v701 = vpop.permute.xlu0 %700
        %704 = vset.pattern.permute.xlu0 0
        %705 = vperm.xlu0 %704, %v646
        %v706 = vpop.permute.xlu0 %705
        %709 = vset.pattern.permute.xlu0 0
        %710 = vperm.xlu0 %709, %v647
        %v711 = vpop.permute.xlu0 %710
        %714 = vset.pattern.permute.xlu0 0
        %715 = vperm.xlu0 %714, %v648
        %v716 = vpop.permute.xlu0 %715
        %719 = vset.pattern.permute.xlu0 0
        %720 = vperm.xlu0 %719, %v649
        %v721 = vpop.permute.xlu0 %720
        %v724 = vperm.slane %v682, 0
        %v726 = vmul.f32 %v686, %v724
        %v727 = vmul.f32 %v691, %v724
        %v728 = vmul.f32 %v696, %v724
        %v729 = vmul.f32 %v701, %v724
        %v730 = vmul.f32 %v706, %v724
        %v731 = vmul.f32 %v711, %v724
        %v732 = vmul.f32 %v716, %v724
        %v733 = vmul.f32 %v721, %v724
        %v734 = vadd.f32 %v674, %v726
        %v735 = vadd.f32 %v675, %v727
        %v736 = vadd.f32 %v676, %v728
        %v737 = vadd.f32 %v677, %v729
        %v738 = vadd.f32 %v678, %v730
        %v739 = vadd.f32 %v679, %v731
        %v740 = vadd.f32 %v680, %v732
        %v741 = vadd.f32 %v681, %v733
        %v742 = vld [vmem:[%s7] sm:$0x1]
        %743 = vset.pattern.permute.xlu0 1
        %744 = vperm.xlu0 %743, %v642
        %v745 = vpop.permute.xlu0 %744
        %747 = vset.pattern.permute.xlu0 1
        %748 = vperm.xlu0 %747, %v643
        %v749 = vpop.permute.xlu0 %748
        %751 = vset.pattern.permute.xlu0 1
        %752 = vperm.xlu0 %751, %v644
        %v753 = vpop.permute.xlu0 %752
        %755 = vset.pattern.permute.xlu0 1
        %756 = vperm.xlu0 %755, %v645
        %v757 = vpop.permute.xlu0 %756
        %759 = vset.pattern.permute.xlu0 1
        %760 = vperm.xlu0 %759, %v646
        %v761 = vpop.permute.xlu0 %760
        %763 = vset.pattern.permute.xlu0 1
        %764 = vperm.xlu0 %763, %v647
        %v765 = vpop.permute.xlu0 %764
        %767 = vset.pattern.permute.xlu0 1
        %768 = vperm.xlu0 %767, %v648
        %v769 = vpop.permute.xlu0 %768
        %771 = vset.pattern.permute.xlu0 1
        %772 = vperm.xlu0 %771, %v649
        %v773 = vpop.permute.xlu0 %772
        %v776 = vperm.slane %v742, 0
        %v778 = vmul.f32 %v745, %v776
        %v779 = vmul.f32 %v749, %v776
        %v780 = vmul.f32 %v753, %v776
        %v781 = vmul.f32 %v757, %v776
        %v782 = vmul.f32 %v761, %v776
        %v783 = vmul.f32 %v765, %v776
        %v784 = vmul.f32 %v769, %v776
        %v785 = vmul.f32 %v773, %v776
        %v786 = vadd.f32 %v734, %v778
        %v787 = vadd.f32 %v735, %v779
        %v788 = vadd.f32 %v736, %v780
        %v789 = vadd.f32 %v737, %v781
        %v790 = vadd.f32 %v738, %v782
        %v791 = vadd.f32 %v739, %v783
        %v792 = vadd.f32 %v740, %v784
        %v793 = vadd.f32 %v741, %v785
        %v794 = vsub.f32 0.0, %v786
        %v795 = vsub.f32 0.0, %v787
        %v796 = vsub.f32 0.0, %v788
        %v797 = vsub.f32 0.0, %v789
        %v798 = vsub.f32 0.0, %v790
        %v799 = vsub.f32 0.0, %v791
        %v800 = vsub.f32 0.0, %v792
        %v801 = vsub.f32 0.0, %v793
        %v802 = vmul.f32 %v794, 1.442695
        %v803 = vpow.pop %v802
        %v804 = vmul.f32 %v795, 1.442695
        %v805 = vpow.pop %v804
        %v806 = vmul.f32 %v796, 1.442695
        %v807 = vpow.pop %v806
        %v808 = vmul.f32 %v797, 1.442695
        %v809 = vpow.pop %v808
        %v810 = vmul.f32 %v798, 1.442695
        %v811 = vpow.pop %v810
        %v812 = vmul.f32 %v799, 1.442695
        %v813 = vpow.pop %v812
        %v814 = vmul.f32 %v800, 1.442695
        %v815 = vpow.pop %v814
        %v816 = vmul.f32 %v801, 1.442695
        %v817 = vpow.pop %v816
        %v818 = vadd.f32 %v803, 1.0
        %v819 = vadd.f32 %v805, 1.0
        %v820 = vadd.f32 %v807, 1.0
        %v821 = vadd.f32 %v809, 1.0
        %v822 = vadd.f32 %v811, 1.0
        %v823 = vadd.f32 %v813, 1.0
        %v824 = vadd.f32 %v815, 1.0
        %v825 = vadd.f32 %v817, 1.0
        %v826 = vrcp.pop %v818
        %v827 = vrcp.pop %v819
        %v828 = vrcp.pop %v820
        %v829 = vrcp.pop %v821
        %v830 = vrcp.pop %v822
        %v831 = vrcp.pop %v823
        %v832 = vrcp.pop %v824
        %v833 = vrcp.pop %v825
        %v834 = vmul.f32 %v786, %v826
        %v835 = vmul.f32 %v787, %v827
        %v836 = vmul.f32 %v788, %v828
        %v837 = vmul.f32 %v789, %v829
        %v838 = vmul.f32 %v790, %v830
        %v839 = vmul.f32 %v791, %v831
        %v840 = vmul.f32 %v792, %v832
        %v841 = vmul.f32 %v793, %v833
        %v842 = vpack.c.bf16 %v835, %v834
        %v843 = vpack.c.bf16 %v837, %v836
        %v844 = vpack.c.bf16 %v839, %v838
        %v845 = vpack.c.bf16 %v841, %v840
        %v846 = vld [vmem:[#allocation4] sm:$0xff]
        %v847 = vld [vmem:[#allocation4 + $0x8] sm:$0xff]
        %v848 = vld [vmem:[#allocation4 + $0x10] sm:$0xff]
        %v849 = vld [vmem:[#allocation4 + $0x18] sm:$0xff]
        %v850 = vld [vmem:[#allocation4 + $0x20] sm:$0xff]
        %v851 = vld [vmem:[#allocation4 + $0x28] sm:$0xff]
        %v852 = vld [vmem:[#allocation4 + $0x30] sm:$0xff]
        %v853 = vld [vmem:[#allocation4 + $0x38] sm:$0xff]
        %v854 = vpack.c.bf16 %v847, %v846
        %v855 = vpack.c.bf16 %v849, %v848
        %v856 = vpack.c.bf16 %v851, %v850
        %v857 = vpack.c.bf16 %v853, %v852
        %v858 = vld [vmem:[%s9] sm:$0x1]
        %v860 = vperm.slane %v858, 0
        %v863 = vsel %vm597, %v842, 0
        %v866 = vsel %vm597, %v843, 0
        %v869 = vsel %vm597, %v844, 0
        %v872 = vsel %vm597, %v845, 0
        %874 = vmatpush.bf16.msra.mxu0 0
        %875 = vmatpush.bf16.msra.mxu0 0
        %876 = vmatpush.bf16.msra.mxu0 0
        %877 = vmatpush.bf16.msra.mxu0 0
        %878 = vmatpush.bf16.msra.mxu0 %v857
        %879 = vmatpush.bf16.msra.mxu0 %v856
        %880 = vmatpush.bf16.msra.mxu0 %v855
        %881 = vmatpush.bf16.msra.mxu0 %v854
        %882 = vmatmul.bf16.gmra.mxu0 %v863
        %v883 = vpop.f32.mrf.mxu0
        %v884 = vadd.f32 %v860, %v883
        %v885 = vpop.f32.mrf.mxu0
        %v886 = vadd.f32 %v860, %v885
        %887 = vmatmul.bf16.gmra.mxu0 %v866
        %v888 = vpop.f32.mrf.mxu0
        %v889 = vadd.f32 %v860, %v888
        %v890 = vpop.f32.mrf.mxu0
        %v891 = vadd.f32 %v860, %v890
        %892 = vmatmul.bf16.gmra.mxu0 %v869
        %v893 = vpop.f32.mrf.mxu0
        %v894 = vadd.f32 %v860, %v893
        %v895 = vpop.f32.mrf.mxu0
        %v896 = vadd.f32 %v860, %v895
        %897 = vmatmul.bf16.gmra.mxu0 %v872
        %v898 = vpop.f32.mrf.mxu0
        %v899 = vadd.f32 %v860, %v898
        %v900 = vpop.f32.mrf.mxu0
        %v901 = vadd.f32 %v860, %v900
        %902 = vdwg.mxu0
        %v903 = vsub.f32 0.0, %v884
        %v904 = vsub.f32 0.0, %v886
        %v905 = vsub.f32 0.0, %v889
        %v906 = vsub.f32 0.0, %v891
        %v907 = vsub.f32 0.0, %v894
        %v908 = vsub.f32 0.0, %v896
        %v909 = vsub.f32 0.0, %v899
        %v910 = vsub.f32 0.0, %v901
        %v911 = vmul.f32 %v903, 1.442695
        %v912 = vpow.pop %v911
        %v913 = vmul.f32 %v904, 1.442695
        %v914 = vpow.pop %v913
        %v915 = vmul.f32 %v905, 1.442695
        %v916 = vpow.pop %v915
        %v917 = vmul.f32 %v906, 1.442695
        %v918 = vpow.pop %v917
        %v919 = vmul.f32 %v907, 1.442695
        %v920 = vpow.pop %v919
        %v921 = vmul.f32 %v908, 1.442695
        %v922 = vpow.pop %v921
        %v923 = vmul.f32 %v909, 1.442695
        %v924 = vpow.pop %v923
        %v925 = vmul.f32 %v910, 1.442695
        %v926 = vpow.pop %v925
        %v927 = vadd.f32 %v912, 1.0
        %v928 = vadd.f32 %v914, 1.0
        %v929 = vadd.f32 %v916, 1.0
        %v930 = vadd.f32 %v918, 1.0
        %v931 = vadd.f32 %v920, 1.0
        %v932 = vadd.f32 %v922, 1.0
        %v933 = vadd.f32 %v924, 1.0
        %v934 = vadd.f32 %v926, 1.0
        %v935 = vrcp.pop %v927
        %v936 = vrcp.pop %v928
        %v937 = vrcp.pop %v929
        %v938 = vrcp.pop %v930
        %v939 = vrcp.pop %v931
        %v940 = vrcp.pop %v932
        %v941 = vrcp.pop %v933
        %v942 = vrcp.pop %v934
        %v943 = vmul.f32 %v884, %v935
        %v944 = vmul.f32 %v886, %v936
        %v945 = vmul.f32 %v889, %v937
        %v946 = vmul.f32 %v891, %v938
        %v947 = vmul.f32 %v894, %v939
        %v948 = vmul.f32 %v896, %v940
        %v949 = vmul.f32 %v899, %v941
        %v950 = vmul.f32 %v901, %v942
        %951 = vset.pattern.permute.xlu0 2
        %952 = vperm.xlu0 %951, %v642
        %v953 = vpop.permute.xlu0 %952
        %955 = vset.pattern.permute.xlu0 2
        %956 = vperm.xlu0 %955, %v643
        %v957 = vpop.permute.xlu0 %956
        %959 = vset.pattern.permute.xlu0 2
        %960 = vperm.xlu0 %959, %v644
        %v961 = vpop.permute.xlu0 %960
        %963 = vset.pattern.permute.xlu0 2
        %964 = vperm.xlu0 %963, %v645
        %v965 = vpop.permute.xlu0 %964
        %967 = vset.pattern.permute.xlu0 2
        %968 = vperm.xlu0 %967, %v646
        %v969 = vpop.permute.xlu0 %968
        %971 = vset.pattern.permute.xlu0 2
        %972 = vperm.xlu0 %971, %v647
        %v973 = vpop.permute.xlu0 %972
        %975 = vset.pattern.permute.xlu0 2
        %976 = vperm.xlu0 %975, %v648
        %v977 = vpop.permute.xlu0 %976
        %979 = vset.pattern.permute.xlu0 2
        %980 = vperm.xlu0 %979, %v649
        %v981 = vpop.permute.xlu0 %980
        %v983 = vmul.f32 %v943, %v953
        %v984 = vmul.f32 %v944, %v957
        %v985 = vmul.f32 %v945, %v961
        %v986 = vmul.f32 %v946, %v965
        %v987 = vmul.f32 %v947, %v969
        %v988 = vmul.f32 %v948, %v973
        %v989 = vmul.f32 %v949, %v977
        %v990 = vmul.f32 %v950, %v981
        %v991 = vsel %vm597, %v983, 0.0
        %v992 = vrot.slane %v991, 4
        %v993 = vadd.f32 %v991, %v992
        %v994 = vrot.slane %v993, 2
        %v995 = vadd.f32 %v993, %v994
        %v996 = vrot.slane %v995, 1
        %v997 = vadd.f32 %v995, %v996
        %v998 = vsel %vm597, %v984, 0.0
        %v999 = vrot.slane %v998, 4
        %v1000 = vadd.f32 %v998, %v999
        %v1001 = vrot.slane %v1000, 2
        %v1002 = vadd.f32 %v1000, %v1001
        %v1003 = vrot.slane %v1002, 1
        %v1004 = vadd.f32 %v1002, %v1003
        %v1005 = vsel %vm597, %v985, 0.0
        %v1006 = vrot.slane %v1005, 4
        %v1007 = vadd.f32 %v1005, %v1006
        %v1008 = vrot.slane %v1007, 2
        %v1009 = vadd.f32 %v1007, %v1008
        %v1010 = vrot.slane %v1009, 1
        %v1011 = vadd.f32 %v1009, %v1010
        %v1012 = vsel %vm597, %v986, 0.0
        %v1013 = vrot.slane %v1012, 4
        %v1014 = vadd.f32 %v1012, %v1013
        %v1015 = vrot.slane %v1014, 2
        %v1016 = vadd.f32 %v1014, %v1015
        %v1017 = vrot.slane %v1016, 1
        %v1018 = vadd.f32 %v1016, %v1017
        %v1019 = vsel %vm597, %v987, 0.0
        %v1020 = vrot.slane %v1019, 4
        %v1021 = vadd.f32 %v1019, %v1020
        %v1022 = vrot.slane %v1021, 2
        %v1023 = vadd.f32 %v1021, %v1022
        %v1024 = vrot.slane %v1023, 1
        %v1025 = vadd.f32 %v1023, %v1024
        %v1026 = vsel %vm597, %v988, 0.0
        %v1027 = vrot.slane %v1026, 4
        %v1028 = vadd.f32 %v1026, %v1027
        %v1029 = vrot.slane %v1028, 2
        %v1030 = vadd.f32 %v1028, %v1029
        %v1031 = vrot.slane %v1030, 1
        %v1032 = vadd.f32 %v1030, %v1031
        %v1033 = vsel %vm597, %v989, 0.0
        %v1034 = vrot.slane %v1033, 4
        %v1035 = vadd.f32 %v1033, %v1034
        %v1036 = vrot.slane %v1035, 2
        %v1037 = vadd.f32 %v1035, %v1036
        %v1038 = vrot.slane %v1037, 1
        %v1039 = vadd.f32 %v1037, %v1038
        %v1040 = vsel %vm597, %v990, 0.0
        %v1041 = vrot.slane %v1040, 4
        %v1042 = vadd.f32 %v1040, %v1041
        %v1043 = vrot.slane %v1042, 2
        %v1044 = vadd.f32 %v1042, %v1043
        %v1045 = vrot.slane %v1044, 1
        %v1046 = vadd.f32 %v1044, %v1045
        %v1047 = vpack.c.bf16 %v997, %v997
        %v1048 = vpack.c.bf16 %v1004, %v1004
        %v1049 = vpack.c.bf16 %v1011, %v1011
        %v1050 = vpack.c.bf16 %v1018, %v1018
        %v1051 = vpack.c.bf16 %v1025, %v1025
        %v1052 = vpack.c.bf16 %v1032, %v1032
        %v1053 = vpack.c.bf16 %v1039, %v1039
        %v1054 = vpack.c.bf16 %v1046, %v1046
        %v1063 = vunpack.c.l.b16 %v1047
        %v1064 = vunpack.c.l.b16 %v1048
        %v1065 = vunpack.c.l.b16 %v1049
        %v1066 = vunpack.c.l.b16 %v1050
        %v1067 = vunpack.c.l.b16 %v1051
        %v1068 = vunpack.c.l.b16 %v1052
        %v1069 = vunpack.c.l.b16 %v1053
        %v1070 = vunpack.c.l.b16 %v1054
        %vm1071 = vcmask 1041409
        %v1072 = vsel %vm1071, %v1064, %v1063
        %vm1073 = vcmask 1042434
        %v1074 = vsel %vm1073, %v1065, %v1072
        %vm1075 = vcmask 1043459
        %v1076 = vsel %vm1075, %v1066, %v1074
        %vm1077 = vcmask 1044484
        %v1078 = vsel %vm1077, %v1067, %v1076
        %vm1079 = vcmask 1045509
        %v1080 = vsel %vm1079, %v1068, %v1078
        %vm1081 = vcmask 1046534
        %v1082 = vsel %vm1081, %v1069, %v1080
        %vm1083 = vcmask 1047559
        %v1084 = vsel %vm1083, %v1070, %v1082
        %v1085 = vpack.c.b16 %v1084, %v1084
        %vm1087 = vcmask 519168
        %1088 = vst.msk [vmem:[%s567] sm:$0xf] %vm1087, %v1085
        %v1089 = vpack.c.bf16 %v984, %v983
        %v1090 = vpack.c.bf16 %v986, %v985
        %v1091 = vpack.c.bf16 %v988, %v987
        %v1092 = vpack.c.bf16 %v990, %v989
        %v1093 = vld [vmem:[%s10] sm:$0xff]
        %v1094 = vld [vmem:[%s10 + $0x8] sm:$0xff]
        %v1095 = vld [vmem:[%s10 + $0x10] sm:$0xff]
        %v1096 = vld [vmem:[%s10 + $0x18] sm:$0xff]
        %v1097 = vld [vmem:[%s10 + $0x20] sm:$0xff]
        %v1098 = vld [vmem:[%s10 + $0x28] sm:$0xff]
        %v1099 = vld [vmem:[%s10 + $0x30] sm:$0xff]
        %v1100 = vld [vmem:[%s10 + $0x38] sm:$0xff]
        %v1101 = vpack.c.bf16 %v1094, %v1093
        %v1102 = vpack.c.bf16 %v1096, %v1095
        %v1103 = vpack.c.bf16 %v1098, %v1097
        %v1104 = vpack.c.bf16 %v1100, %v1099
        %v1105 = vld [vmem:[%s11] sm:$0x1]
        %v1107 = vperm.slane %v1105, 0
        %v1110 = vsel %vm597, %v1089, 0
        %v1113 = vsel %vm597, %v1090, 0
        %v1116 = vsel %vm597, %v1091, 0
        %v1119 = vsel %vm597, %v1092, 0
        %1121 = vmatpush.bf16.msra.mxu0 0
        %1122 = vmatpush.bf16.msra.mxu0 0
        %1123 = vmatpush.bf16.msra.mxu0 0
        %1124 = vmatpush.bf16.msra.mxu0 0
        %1125 = vmatpush.bf16.msra.mxu0 %v1104
        %1126 = vmatpush.bf16.msra.mxu0 %v1103
        %1127 = vmatpush.bf16.msra.mxu0 %v1102
        %1128 = vmatpush.bf16.msra.mxu0 %v1101
        %1129 = vmatmul.bf16.gmra.mxu0 %v1110
        %v1130 = vpop.f32.mrf.mxu0
        %v1131 = vadd.f32 %v1107, %v1130
        %v1132 = vpop.f32.mrf.mxu0
        %v1133 = vadd.f32 %v1107, %v1132
        %1134 = vmatmul.bf16.gmra.mxu0 %v1113
        %v1135 = vpop.f32.mrf.mxu0
        %v1136 = vadd.f32 %v1107, %v1135
        %v1137 = vpop.f32.mrf.mxu0
        %v1138 = vadd.f32 %v1107, %v1137
        %1139 = vmatmul.bf16.gmra.mxu0 %v1116
        %v1140 = vpop.f32.mrf.mxu0
        %v1141 = vadd.f32 %v1107, %v1140
        %v1142 = vpop.f32.mrf.mxu0
        %v1143 = vadd.f32 %v1107, %v1142
        %1144 = vmatmul.bf16.gmra.mxu0 %v1119
        %v1145 = vpop.f32.mrf.mxu0
        %v1146 = vadd.f32 %v1107, %v1145
        %v1147 = vpop.f32.mrf.mxu0
        %v1148 = vadd.f32 %v1107, %v1147
        %1149 = vdwg.mxu0
        %v1150 = vmul.f32 %v1131, %v953
        %v1151 = vmul.f32 %v1133, %v957
        %v1152 = vmul.f32 %v1136, %v961
        %v1153 = vmul.f32 %v1138, %v965
        %v1154 = vmul.f32 %v1141, %v969
        %v1155 = vmul.f32 %v1143, %v973
        %v1156 = vmul.f32 %v1146, %v977
        %v1157 = vmul.f32 %v1148, %v981
        %vm1158 = vcmask 15360
        %1159 = vst.msk [vmem:[%s576] sm:$0xff] %vm1158, %v1150
        %1160 = vst.msk [vmem:[%s576 + $0x8] sm:$0xff] %vm1158, %v1151
        %1161 = vst.msk [vmem:[%s576 + $0x10] sm:$0xff] %vm1158, %v1152
        %1162 = vst.msk [vmem:[%s576 + $0x18] sm:$0xff] %vm1158, %v1153
        %1163 = vst.msk [vmem:[%s576 + $0x20] sm:$0xff] %vm1158, %v1154
        %1164 = vst.msk [vmem:[%s576 + $0x28] sm:$0xff] %vm1158, %v1155
        %1165 = vst.msk [vmem:[%s576 + $0x30] sm:$0xff] %vm1158, %v1156
        %1166 = vst.msk [vmem:[%s576 + $0x38] sm:$0xff] %vm1158, %v1157
        %p1167 = scmp.lt.s32.totalorder %s31, 1
        %s1168 = scalar_select %p1167, %s31, 1
        %p1169 = scmp.lt.s32.totalorder %s32, 0
        %s1170 = scalar_select %p1169, %s32, 0
        %s1171 = sadd.s32 %s1170, %s1168
        %s1172 = smul.addr %s1171, 4
        %s1173 = scalar_lea.vmem %s12, %s1172
        %s1174 = smul.u32 8, %s32
        %p1175 = scmp.lt.s32.totalorder %s31, 1
        %s1176 = scalar_select %p1175, %s31, 1
        %p1177 = scmp.lt.s32.totalorder %s1174, 7
        %s1178 = scalar_select %p1177, %s1174, 7
        %s1179 = smul.addr %s1176, 8
        %s1180 = sadd.s32 %s1178, %s1179
        %s1181 = smul.addr %s1180, 8
        %s1182 = scalar_lea.vmem %s13, %s1181
        // Predicated region
        $region77: #{variational_dequantizer_forward.21} parent=67 // pred_check
          %p1183 = pneg %p330
        $region78: #{variational_dequantizer_forward.21} parent=67 // pred_check_branch
          %1185 = sbr.rel (%p1183) target = $region80
        $region79: #{variational_dequantizer_forward.21} parent=67 // pred_region
          _
        $region80: #{variational_dequantizer_forward.21} parent=67 // pred_fallthru
          _
        // Predicated region
        $region81: #{variational_dequantizer_forward.21} parent=67 // pred_check
          %p1186 = pneg %p358
        $region82: #{variational_dequantizer_forward.21} parent=67 // pred_check_branch
          %1188 = sbr.rel (%p1186) target = $region84
        $region83: #{variational_dequantizer_forward.21} parent=67 // pred_region
          %s1189 = smul.u32 8, %s32
        $region84: #{variational_dequantizer_forward.21} parent=67 // pred_fallthru
          _
      $region68: #{variational_dequantizer_forward.21} parent=5 // pred_fallthru
        _
      %p1190 = scmp.le.s32.totalorder 2, %s22
      // Predicated region
      $region85: #{variational_dequantizer_forward.21} parent=5 // pred_check
        %p1191 = pneg %p1190
      $region86: #{variational_dequantizer_forward.21} parent=5 // pred_check_branch
        %1193 = sbr.rel (%p1191) target = $region88
      $region87: #{variational_dequantizer_forward.21} parent=5 // pred_region
        %s1194 = ssub.s32 %s22, 2
        // Predicated region
        $region89: #{variational_dequantizer_forward.21} parent=87 // pred_check
          %p1195 = pneg %p336
        $region90: #{variational_dequantizer_forward.21} parent=87 // pred_check_branch
          %1197 = sbr.rel (%p1195) target = $region92
        $region91: #{variational_dequantizer_forward.21} parent=87 // pred_region
          %p1198 = scmp.lt.s32.totalorder %s33, 1
          %s1199 = scalar_select %p1198, %s33, 1
          %p1200 = scmp.lt.s32.totalorder %s34, 0
          %s1201 = scalar_select %p1200, %s34, 0
          %s1202 = sadd.s32 %s1201, %s1199
          %s1203 = smul.addr %s1202, 4
          %s1204 = scalar_lea.vmem %s12, %s1203
        $region92: #{variational_dequantizer_forward.21} parent=87 // pred_fallthru
          _
        // Predicated region
        $region93: #{variational_dequantizer_forward.21} parent=87 // pred_check
          %p1205 = pneg %p364
        $region94: #{variational_dequantizer_forward.21} parent=87 // pred_check_branch
          %1207 = sbr.rel (%p1205) target = $region96
        $region95: #{variational_dequantizer_forward.21} parent=87 // pred_region
          %s1208 = smul.u32 8, %s34
          %p1209 = scmp.lt.s32.totalorder %s33, 1
          %s1210 = scalar_select %p1209, %s33, 1
          %p1211 = scmp.lt.s32.totalorder %s1208, 7
          %s1212 = scalar_select %p1211, %s1208, 7
          %s1213 = smul.addr %s1210, 8
          %s1214 = sadd.s32 %s1212, %s1213
          %s1215 = smul.addr %s1214, 8
          %s1216 = scalar_lea.vmem %s13, %s1215
        $region96: #{variational_dequantizer_forward.21} parent=87 // pred_fallthru
          _
      $region88: #{variational_dequantizer_forward.21} parent=5 // pred_fallthru
        _
    $region6: #{variational_dequantizer_forward.21} parent=1 // loop_footer
      %s26 = sadd.s32 1, %s22
    $region7: #{variational_dequantizer_forward.21} parent=1 // loop_footer_branch
      %21 = sbr.rel target = $region3
    $region8: #{variational_dequantizer_forward.21} parent=1 // loop_exit
      _
    %1217 = vsyncpa [#allocation3], 1
    %s1218 = scalar_lea.sflag [#allocation3], 1
    %1219 = vsyncpa %s1218, 1
    %1220 = vsyncpa [#allocation5], 1

// kernel: mul.45
$region0: #{mul.45}
  #allocation2 [shape = 's32[1]{0}', space=sflag, size = 0x4, scoped, tag = 'scoped memory for mul.45']
  %s0 = inlined_call_operand.vmem [shape: f32[128,1], index: 0, kind: input, shape index: {}]
  %s1 = inlined_call_operand.vmem [shape: f32[128,1], index: 1, kind: input, shape index: {}]
  %s2 = inlined_call_operand.hbm [shape: f32[128,1], index: 2, kind: output, shape index: {}]
  $region1: #{mul.45} parent=0
    #allocation0 [shape = 'u8[512]{0}', space=vmem, size = 0x400, scoped, tag = 'operand span for operand 2']
    #allocation1 [shape = 's32[1]{0}', space=sflag, size = 0x4, scoped, tag = 'scoped memory for mul.45']
    %3 = vsyncpa [#allocation1], 0
    %v4 = vld [vmem:[%s0] sm:$0x1]
    %v5 = vld [vmem:[%s1] sm:$0x1]
    %6 = xla_tuple %v4, %v5
    %7 = xla_tuple %6
    %v8 = vmul.f32 %v4, %v5
    %9 = xla_tuple %v8
    %10 = vst [vmem:[#allocation0] sm:$0x1] %v8
    %12 = vsyncadd [#allocation1], 0
    %s14 = sshll.u32 [#allocation0], 4
    %s15 = int_to_ptr.vmem [resolvable:$true] %s14
    %s16 = sshll.u32 %s2, 4
    %s17 = int_to_ptr.hbm [resolvable:$true] %s16
    %19 = dma.vmem_to_hbm [thread:$0]  %s15, 16, %s17, [#allocation1]
    %21 = dma.done [#allocation1], 16
    %22 = vsyncpa [#allocation1], 1

// kernel: variational_dequantizer_forward.25
$region0: #{variational_dequantizer_forward.25}
  #allocation0 [shape = 'u32[]', space=smem, size = 0x4, offset = 0x4, fixed_abs, tag = 'smem constant byte address 0x4 - core index']
  #allocation1 [shape = 'u32[72,128]{1,0:T(1,128)}', space=vmem, size = 0x9000, scoped, tag = 'internal scratch']
  %s0 = inlined_call_operand.vmem [shape: f32[2,16], index: 0, kind: input, shape index: {}]
  %s1 = inlined_call_operand.vmem [shape: f32[2,16], index: 1, kind: input, shape index: {}]
  %s2 = inlined_call_operand.vmem [shape: f32[2,16], index: 2, kind: input, shape index: {}]
  %s3 = inlined_call_operand.vmem [shape: f32[2,16], index: 3, kind: input, shape index: {}]
  %s4 = inlined_call_operand.vmem [shape: f32[2,16], index: 4, kind: input, shape index: {}]
  %s5 = inlined_call_operand.vmem [shape: f32[2,16], index: 5, kind: output, shape index: {0}]
  %s6 = inlined_call_operand.vmem [shape: f32[2,1], index: 6, kind: output, shape index: {1}]
  %7 = xla_tuple %s5, %s6
  %s8 = sld [smem:[#allocation0]]
  $region38: #{variational_dequantizer_forward.25} parent=0
    _
  %s10 = ssub.s32 1, %s8
  %s11 = scalar_select 0, %s10, %s8
  // Predicated region
  $region2: #{variational_dequantizer_forward.25} parent=0 // pred_check
    _
  $region3: #{variational_dequantizer_forward.25} parent=0 // pred_check_branch
    %13 = sbr.rel (0) target = $region5
  $region4: #{variational_dequantizer_forward.25} parent=0 // pred_region
    _
  $region5: #{variational_dequantizer_forward.25} parent=0 // pred_fallthru
    _
  // Predicated region
  $region6: #{variational_dequantizer_forward.25} parent=0 // pred_check
    _
  $region7: #{variational_dequantizer_forward.25} parent=0 // pred_check_branch
    %15 = sbr.rel (0) target = $region9
  $region8: #{variational_dequantizer_forward.25} parent=0 // pred_region
    _
  $region9: #{variational_dequantizer_forward.25} parent=0 // pred_fallthru
    _
  // Predicated region
  $region10: #{variational_dequantizer_forward.25} parent=0 // pred_check
    _
  $region11: #{variational_dequantizer_forward.25} parent=0 // pred_check_branch
    %17 = sbr.rel (0) target = $region13
  $region12: #{variational_dequantizer_forward.25} parent=0 // pred_region
    _
  $region13: #{variational_dequantizer_forward.25} parent=0 // pred_fallthru
    _
  // Predicated region
  $region14: #{variational_dequantizer_forward.25} parent=0 // pred_check
    _
  $region15: #{variational_dequantizer_forward.25} parent=0 // pred_check_branch
    %19 = sbr.rel (0) target = $region17
  $region16: #{variational_dequantizer_forward.25} parent=0 // pred_region
    _
  $region17: #{variational_dequantizer_forward.25} parent=0 // pred_fallthru
    _
  // Predicated region
  $region18: #{variational_dequantizer_forward.25} parent=0 // pred_check
    _
  $region19: #{variational_dequantizer_forward.25} parent=0 // pred_check_branch
    %21 = sbr.rel (0) target = $region21
  $region20: #{variational_dequantizer_forward.25} parent=0 // pred_region
    _
  $region21: #{variational_dequantizer_forward.25} parent=0 // pred_fallthru
    _
  %v22 = vld [vmem:[%s3] sm:$0x3]
  %v23 = vld [vmem:[%s2] sm:$0x3]
  %v24 = vmul.f32 %v23, %v22
  %v25 = vld [vmem:[%s1] sm:$0x3]
  %v26 = vmul.f32 %v25, %v22
  %v27 = vld [vmem:[%s0] sm:$0x3]
  %v28 = vmul.f32 %v26, 1.442695
  %v29 = vpow.pop %v28
  %v30 = vmul.f32 %v24, %v29
  %v31 = vadd.f32 %v27, %v30
  %v32 = vand.u32 2147483647, %v31
  %v33 = vsub.f32 0.0, %v32
  %v34 = vmul.f32 %v33, 1.442695
  %v35 = vpow.pop %v34
  %v36 = vadd.f32 %v35, 1.0
  %v37 = vrcp.pop %v36
  %v38 = vmul.f32 %v36, %v37
  %v39 = vsub.f32 1.0, %v38
  %v40 = vmul.f32 %v37, %v39
  %v41 = vadd.f32 %v37, %v40
  %vm42 = vweird.f32 %v36
  %vm43 = vweird.f32 %v37
  %vm44 = vmor %vm42, %vm43
  %v45 = vsel %vm44, %v37, %v41
  %v46 = vand.u32 2147483647, %v36
  %vm47 = vcmp.eq.f32.partialorder %v46, 8.507059e+37
  %v48 = vand.u32 %v36, 2147483648
  %v49 = vor.u32 1.1754944e-38, %v48
  %v50 = vsel %vm47, %v49, %v45
  %v51 = vmul.f32 1.0, %v50
  %vm52 = vcmp.ge.f32.partialorder %v31, 0.0
  %v53 = vmul.f32 %v35, %v51
  %v54 = vsel %vm52, %v51, %v53
  %v55 = vmul.f32 %v24, -0.5
  %v56 = vmul.f32 %v55, %v24
  %v57 = vsub.f32 %v56, 0.9189385
  %v58 = vmul.f32 %v57, %v22
  %vm59 = vcmask 123904
  %v60 = vsel %vm59, %v58, 0.0
  %61 = vadd.xlane.f32.xlu0 %v60
  %v62 = vpop.xlane.xlu0 %61
  %v63 = vsel %vm59, %v26, 0.0
  %64 = vadd.xlane.f32.xlu0 %v63
  %v65 = vpop.xlane.xlu0 %64
  %v66 = vadd.f32 %v35, 1.0
  %v67 = vlog2.pop %v66
  %v68 = vmul.f32 %v67, 0.6931472
  %v69 = vmul.f32 -0.5, %v35
  %v70 = vadd.f32 %v69, 1.0
  %v71 = vmul.f32 %v70, %v35
  %v72 = vand.u32 2147483647, %v35
  %vm73 = vcmp.lt.f32.partialorder %v72, 0.0004427343
  %v74 = vsel %vm73, %v71, %v68
  %v75 = vmul.f32 %v74, 2.0
  %v76 = vadd.f32 %v32, %v75
  %v77 = vsub.f32 0.0, %v76
  %v78 = vmul.f32 %v22, %v77
  %v79 = vsel %vm59, %v78, 0.0
  %80 = vadd.xlane.f32.xlu0 %v79
  %v81 = vpop.xlane.xlu0 %80
  %v82 = vld [vmem:[%s4] sm:$0x3]
  %v83 = vadd.f32 %v82, %v54
  %v84 = vmul.f32 %v83, %v22
  %85 = vst.msk [vmem:[%s5] sm:$0x3] %vm59, %v84
  %v86 = vsub.f32 %v62, %v65
  %v87 = vsub.f32 %v86, %v81
  %vm88 = vcmask 1024
  %89 = vst.msk [vmem:[%s6] sm:$0x3] %vm88, %v87
  // Predicated region
  $region22: #{variational_dequantizer_forward.25} parent=0 // pred_check
    _
  $region23: #{variational_dequantizer_forward.25} parent=0 // pred_check_branch
    %91 = sbr.rel (0) target = $region25
  $region24: #{variational_dequantizer_forward.25} parent=0 // pred_region
    _
  $region25: #{variational_dequantizer_forward.25} parent=0 // pred_fallthru
    _
  // Predicated region
  $region26: #{variational_dequantizer_forward.25} parent=0 // pred_check
    _
  $region27: #{variational_dequantizer_forward.25} parent=0 // pred_check_branch
    %93 = sbr.rel (0) target = $region29
  $region28: #{variational_dequantizer_forward.25} parent=0 // pred_region
    _
  $region29: #{variational_dequantizer_forward.25} parent=0 // pred_fallthru
    _
  // Predicated region
  $region30: #{variational_dequantizer_forward.25} parent=0 // pred_check
    _
  $region31: #{variational_dequantizer_forward.25} parent=0 // pred_check_branch
    %95 = sbr.rel (0) target = $region33
  $region32: #{variational_dequantizer_forward.25} parent=0 // pred_region
    _
  $region33: #{variational_dequantizer_forward.25} parent=0 // pred_fallthru
    _
  // Predicated region
  $region34: #{variational_dequantizer_forward.25} parent=0 // pred_check
    _
  $region35: #{variational_dequantizer_forward.25} parent=0 // pred_check_branch
    %97 = sbr.rel (0) target = $region37
  $region36: #{variational_dequantizer_forward.25} parent=0 // pred_region
    _
  $region37: #{variational_dequantizer_forward.25} parent=0 // pred_fallthru
    _

// kernel: variational_dequantizer_forward.22
$region0: #{variational_dequantizer_forward.22}
  #allocation0 [shape = 'u32[]', space=smem, size = 0x4, offset = 0x4, fixed_abs, tag = 'smem constant byte address 0x4 - core index']
  #allocation1 [shape = 'u32[72,128]{1,0:T(1,128)}', space=vmem, size = 0x9000, scoped, tag = 'internal scratch']
  %s0 = inlined_call_operand.vmem [shape: f32[2,64], index: 0, kind: input, shape index: {}]
  %s1 = inlined_call_operand.vmem [shape: f32[2,64], index: 1, kind: input, shape index: {}]
  %s2 = inlined_call_operand.vmem [shape: f32[2,64], index: 2, kind: input, shape index: {}]
  %s3 = inlined_call_operand.vmem [shape: f32[2,64], index: 3, kind: input, shape index: {}]
  %s4 = inlined_call_operand.vmem [shape: f32[2,64], index: 4, kind: input, shape index: {}]
  %s5 = inlined_call_operand.vmem [shape: f32[2,64], index: 5, kind: output, shape index: {0}]
  %s6 = inlined_call_operand.vmem [shape: f32[2,1], index: 6, kind: output, shape index: {1}]
  %7 = xla_tuple %s5, %s6
  %s8 = sld [smem:[#allocation0]]
  $region38: #{variational_dequantizer_forward.22} parent=0
    _
  %s10 = ssub.s32 1, %s8
  %s11 = scalar_select 0, %s10, %s8
  // Predicated region
  $region2: #{variational_dequantizer_forward.22} parent=0 // pred_check
    _
  $region3: #{variational_dequantizer_forward.22} parent=0 // pred_check_branch
    %13 = sbr.rel (0) target = $region5
  $region4: #{variational_dequantizer_forward.22} parent=0 // pred_region
    _
  $region5: #{variational_dequantizer_forward.22} parent=0 // pred_fallthru
    _
  // Predicated region
  $region6: #{variational_dequantizer_forward.22} parent=0 // pred_check
    _
  $region7: #{variational_dequantizer_forward.22} parent=0 // pred_check_branch
    %15 = sbr.rel (0) target = $region9
  $region8: #{variational_dequantizer_forward.22} parent=0 // pred_region
    _
  $region9: #{variational_dequantizer_forward.22} parent=0 // pred_fallthru
    _
  // Predicated region
  $region10: #{variational_dequantizer_forward.22} parent=0 // pred_check
    _
  $region11: #{variational_dequantizer_forward.22} parent=0 // pred_check_branch
    %17 = sbr.rel (0) target = $region13
  $region12: #{variational_dequantizer_forward.22} parent=0 // pred_region
    _
  $region13: #{variational_dequantizer_forward.22} parent=0 // pred_fallthru
    _
  // Predicated region
  $region14: #{variational_dequantizer_forward.22} parent=0 // pred_check
    _
  $region15: #{variational_dequantizer_forward.22} parent=0 // pred_check_branch
    %19 = sbr.rel (0) target = $region17
  $region16: #{variational_dequantizer_forward.22} parent=0 // pred_region
    _
  $region17: #{variational_dequantizer_forward.22} parent=0 // pred_fallthru
    _
  // Predicated region
  $region18: #{variational_dequantizer_forward.22} parent=0 // pred_check
    _
  $region19: #{variational_dequantizer_forward.22} parent=0 // pred_check_branch
    %21 = sbr.rel (0) target = $region21
  $region20: #{variational_dequantizer_forward.22} parent=0 // pred_region
    _
  $region21: #{variational_dequantizer_forward.22} parent=0 // pred_fallthru
    _
  %v22 = vld [vmem:[%s3] sm:$0x3]
  %v23 = vld [vmem:[%s2] sm:$0x3]
  %v24 = vmul.f32 %v23, %v22
  %v25 = vld [vmem:[%s1] sm:$0x3]
  %v26 = vmul.f32 %v25, %v22
  %v27 = vld [vmem:[%s0] sm:$0x3]
  %v28 = vmul.f32 %v26, 1.442695
  %v29 = vpow.pop %v28
  %v30 = vmul.f32 %v24, %v29
  %v31 = vadd.f32 %v27, %v30
  %v32 = vand.u32 2147483647, %v31
  %v33 = vsub.f32 0.0, %v32
  %v34 = vmul.f32 %v33, 1.442695
  %v35 = vpow.pop %v34
  %v36 = vadd.f32 %v35, 1.0
  %v37 = vrcp.pop %v36
  %v38 = vmul.f32 %v36, %v37
  %v39 = vsub.f32 1.0, %v38
  %v40 = vmul.f32 %v37, %v39
  %v41 = vadd.f32 %v37, %v40
  %vm42 = vweird.f32 %v36
  %vm43 = vweird.f32 %v37
  %vm44 = vmor %vm42, %vm43
  %v45 = vsel %vm44, %v37, %v41
  %v46 = vand.u32 2147483647, %v36
  %vm47 = vcmp.eq.f32.partialorder %v46, 8.507059e+37
  %v48 = vand.u32 %v36, 2147483648
  %v49 = vor.u32 1.1754944e-38, %v48
  %v50 = vsel %vm47, %v49, %v45
  %v51 = vmul.f32 1.0, %v50
  %vm52 = vcmp.ge.f32.partialorder %v31, 0.0
  %v53 = vmul.f32 %v35, %v51
  %v54 = vsel %vm52, %v51, %v53
  %v55 = vmul.f32 %v24, -0.5
  %v56 = vmul.f32 %v55, %v24
  %v57 = vsub.f32 %v56, 0.9189385
  %v58 = vmul.f32 %v57, %v22
  %vm59 = vcmask 517120
  %v60 = vsel %vm59, %v58, 0.0
  %61 = vadd.xlane.f32.xlu0 %v60
  %v62 = vpop.xlane.xlu0 %61
  %v63 = vsel %vm59, %v26, 0.0
  %64 = vadd.xlane.f32.xlu0 %v63
  %v65 = vpop.xlane.xlu0 %64
  %v66 = vadd.f32 %v35, 1.0
  %v67 = vlog2.pop %v66
  %v68 = vmul.f32 %v67, 0.6931472
  %v69 = vmul.f32 -0.5, %v35
  %v70 = vadd.f32 %v69, 1.0
  %v71 = vmul.f32 %v70, %v35
  %v72 = vand.u32 2147483647, %v35
  %vm73 = vcmp.lt.f32.partialorder %v72, 0.0004427343
  %v74 = vsel %vm73, %v71, %v68
  %v75 = vmul.f32 %v74, 2.0
  %v76 = vadd.f32 %v32, %v75
  %v77 = vsub.f32 0.0, %v76
  %v78 = vmul.f32 %v22, %v77
  %v79 = vsel %vm59, %v78, 0.0
  %80 = vadd.xlane.f32.xlu0 %v79
  %v81 = vpop.xlane.xlu0 %80
  %v82 = vld [vmem:[%s4] sm:$0x3]
  %v83 = vadd.f32 %v82, %v54
  %v84 = vmul.f32 %v83, %v22
  %85 = vst.msk [vmem:[%s5] sm:$0x3] %vm59, %v84
  %v86 = vsub.f32 %v62, %v65
  %v87 = vsub.f32 %v86, %v81
  %vm88 = vcmask 1024
  %89 = vst.msk [vmem:[%s6] sm:$0x3] %vm88, %v87
  // Predicated region
  $region22: #{variational_dequantizer_forward.22} parent=0 // pred_check
    _
  $region23: #{variational_dequantizer_forward.22} parent=0 // pred_check_branch
    %91 = sbr.rel (0) target = $region25
  $region24: #{variational_dequantizer_forward.22} parent=0 // pred_region
    _
  $region25: #{variational_dequantizer_forward.22} parent=0 // pred_fallthru
    _
  // Predicated region
  $region26: #{variational_dequantizer_forward.22} parent=0 // pred_check
    _
  $region27: #{variational_dequantizer_forward.22} parent=0 // pred_check_branch
    %93 = sbr.rel (0) target = $region29
  $region28: #{variational_dequantizer_forward.22} parent=0 // pred_region
    _
  $region29: #{variational_dequantizer_forward.22} parent=0 // pred_fallthru
    _
  // Predicated region
  $region30: #{variational_dequantizer_forward.22} parent=0 // pred_check
    _
  $region31: #{variational_dequantizer_forward.22} parent=0 // pred_check_branch
    %95 = sbr.rel (0) target = $region33
  $region32: #{variational_dequantizer_forward.22} parent=0 // pred_region
    _
  $region33: #{variational_dequantizer_forward.22} parent=0 // pred_fallthru
    _
  // Predicated region
  $region34: #{variational_dequantizer_forward.22} parent=0 // pred_check
    _
  $region35: #{variational_dequantizer_forward.22} parent=0 // pred_check_branch
    %97 = sbr.rel (0) target = $region37
  $region36: #{variational_dequantizer_forward.22} parent=0 // pred_region
    _
  $region37: #{variational_dequantizer_forward.22} parent=0 // pred_fallthru
    _

</llo_original>
